<compile_context>
chip_gen: v7x
topology: tpu7x:2x2x1
jax: 0.10.0
libtpu: 0.0.40
codegen_flags: <defaults>
</compile_context>

<pallas_src>
import functools

import numpy as np
import jax
import jax.numpy as jnp
from jax.experimental import pallas as pl
from jax.experimental.pallas import tpu as pltpu


_FEAT_PAD = 8  # tiny feature dims (x: 3 cols, edge_attr: 2 cols) padded to one sublane tile

_COMPILER_PARAMS = pltpu.CompilerParams(dimension_semantics=("arbitrary",))


# ----------------------------- slab packing ----------------------------------

def _pack_slab(items):
    """Row-stack 2-D f32 arrays into one (R, W) slab; every item starts on an
    8-row boundary.  Returns (slab, {name: (row0, rows, cols)})."""
    width = max(int(np.asarray(a).shape[1]) for _, a in items)
    blocks, offsets, row = [], {}, 0
    for name, a in items:
        a = np.asarray(a, np.float32)
        r, c = a.shape
        rp = ((r + 7) // 8) * 8
        blk = np.zeros((rp, width), np.float32)
        blk[:r, :c] = a
        offsets[name] = (row, r, c)
        blocks.append(blk)
        row += rp
    return np.concatenate(blocks, axis=0), offsets


# --------------------------- fused Pallas kernel -----------------------------

def _fused_dss_kernel(slab_ref, out_ref, *, offsets, N, L, k, gamma, out_dim):
    f32 = jnp.float32
    dot = functools.partial(jnp.dot, preferred_element_type=f32)
    relu = lambda v: jnp.maximum(v, 0.0)
    slab_w = out_dim * (k + 1)

    def view(name):
        r0, r, c = offsets[name]
        return slab_ref[pl.ds(r0, r), :][:, 0:c]

    def step_view(name, u, rows):                       # rows-per-step slice
        r0, _, c = offsets[name]
        return slab_ref[pl.ds(r0 + u * rows, rows), :][:, 0:c]

    # ---- data & static structure (VMEM-resident for the whole forward) ----
    x_pad   = view("x")          # (N, 8)
    ea_pad  = view("ea")         # (E_pad, 8)
    loop_col = view("loop_col")  # (N, 1)
    g_dst   = view("g_dst")      # (E_pad, N) one-hot gather of target endpoint
    g_src   = view("g_src")      # (E_pad, N) one-hot gather of source endpoint
    s_to    = view("s_to")       # (N, E_pad) scatter-add at target (Phi_to)
    s_from  = view("s_from")     # (N, E_pad) scatter-add at source (Phi_from)
    y_tiled = view("y_tiled")    # (N, slab_w): y copied into every decoder slot
    f0_row  = view("f0_row")     # (1, slab_w): decoder_list[0](zeros), host const

    # per-step bias rows, loaded once as (k, X) blocks
    phi_b1   = view("phi_b1")
    phi_b2p  = view("phi_b2_psy")
    loop_wc  = view("loop_wc")
    loop_b1  = view("loop_b1")
    loop_b2p = view("loop_b2_psy")
    psy_b1   = view("psy_b1")
    psy_b2a  = view("psy_b2a")
    dec_b1   = view("dec_b1")
    dec_b2p  = view("dec_b2p")

    # step-invariant first-layer terms hoisted into one dot each
    ea_we_all = dot(ea_pad, view("phi_we_cat"))   # (E_pad, k*2L)
    x_psy_all = dot(x_pad, view("psy_wx_cat"))    # (N, k*L)

    inv_count = 1.0 / float(N * out_dim)
    y_sq = jnp.sum(y_tiled * y_tiled, axis=1, keepdims=True)
    y_sq = jnp.sum(y_sq, axis=0, keepdims=True) * (1.0 / float(k + 1))   # = sum(y*y)

    H = jnp.zeros((N, L), f32)
    f_all = jnp.zeros((N, slab_w), f32) + f0_row        # F['0'] broadcast into slot 0
    col_ids = jax.lax.broadcasted_iota(jnp.int32, (1, slab_w), 1)
    loss_row = jnp.zeros((1, slab_w), f32)
    total = jnp.zeros((1, 1), f32)

    for u in range(k):   # k is small & static: fully unrolled
        if u == 0:
            # H['0'] == 0: every H-dependent matmul vanishes -> skip 3 dots
            ph1 = ea_we_all[:, 0:2 * L] + phi_b1[0:1, :]
            lh = loop_col * loop_wc[0:1, :] + loop_b1[0:1, :]
            psy_h = x_psy_all[:, 0:L] + psy_b1[0:1, :]
        else:
            # one dot applies [phi_wd | phi_ws | loop_wh | psy_wh] to H; the
            # one-hot endpoint gathers are folded through: (G @ H) @ W == G @ (H @ W)
            hw = dot(H, step_view("w_hcat", u, L))                       # (N, 6L)
            ph1 = (dot(g_dst, hw[:, 0:2 * L]) + dot(g_src, hw[:, 2 * L:4 * L])
                   + ea_we_all[:, u * 2 * L:(u + 1) * 2 * L] + phi_b1[u:u + 1, :])
            lh = hw[:, 4 * L:5 * L] + loop_col * loop_wc[u:u + 1, :] + loop_b1[u:u + 1, :]
            psy_h = hw[:, 5 * L:6 * L] + x_psy_all[:, u * L:(u + 1) * L] + psy_b1[u:u + 1, :]

        # Phi_to/Phi_from 2nd layer pre-folded through Psy's aggregation weights
        mm = dot(relu(ph1), step_view("phi_w2_psy", u, 2 * L)) + phi_b2p[u:u + 1, :]
        msg = dot(s_to, mm[:, 0:L]) + dot(s_from, mm[:, L:2 * L])        # scatter-add on MXU

        # Loop 2nd layer pre-folded through Psy's loop weights
        loop_psy = dot(relu(lh), step_view("loop_w2_psy", u, L)) + loop_b2p[u:u + 1, :]

        psy_h = psy_h + msg + loop_psy
        # Psy 2nd layer with alpha pre-folded:  H <- H + alpha * Psy(concat)
        H = H + dot(relu(psy_h), step_view("psy_w2a", u, L)) + psy_b2a[u:u + 1, :]

        # decoder_list[u](H[u+1]) written straight into output-slab slot u+1
        z = relu(dot(H, step_view("dec_w1", u, L)) + dec_b1[u:u + 1, :])
        f_contrib = dot(z, step_view("dec_w2p", u, L)) + dec_b2p[u:u + 1, :]
        f_all = f_all + f_contrib

        # MSE(F[u+1], y): f_contrib is exactly zero outside its slot, so
        # sum((f_slot - y)^2) == sum(f^2) - 2*sum(f*y_tiled) + sum(y^2)
        a = jnp.sum(f_contrib * (f_contrib - 2.0 * y_tiled), axis=1, keepdims=True)
        sq = jnp.sum(a, axis=0, keepdims=True) + y_sq
        l = sq * inv_count                                               # (1, 1)
        loss_row = loss_row + l * (col_ids == u).astype(f32)
        total = total + l * (gamma ** (k - u - 1))

    loss_row = loss_row + total * (col_ids == k).astype(f32)

    out_ref[pl.ds(0, N), :] = f_all
    out_ref[pl.ds(N, 1), :] = loss_row


# ----------------------------- parameter init --------------------------------

def _linear(key, fan_in, fan_out):
    k1, k2 = jax.random.split(key)
    lim = 1.0 / np.sqrt(fan_in)
    w = jax.random.uniform(k1, (fan_in, fan_out), jnp.float32, -lim, lim)
    b = jax.random.uniform(k2, (1, fan_out), jnp.float32, -lim, lim)
    return w, b


def init_params(key, latent_dim, k):
    L = latent_dim
    params = []
    for _ in range(k):
        key, *ks = jax.random.split(key, 11)
        params.append({
            "phi_to":   (_linear(ks[0], 2 * L + 2, L), _linear(ks[1], L, L)),
            "phi_from": (_linear(ks[2], 2 * L + 2, L), _linear(ks[3], L, L)),
            "phi_loop": (_linear(ks[4], 2 * L + 1, L), _linear(ks[5], L, L)),
            "psy":      (_linear(ks[6], 4 * L + 3, L), _linear(ks[7], L, L)),
            "decoder":  (_linear(ks[8], L, L),         _linear(ks[9], L, 2)),
        })
    return params


# ------------------------ host-side one-time packing -------------------------

def build_slab(params, x_np, y_np, ea_pad, loop_col, g_dst, g_src, s_to, s_from,
               latent_dim, k, alpha):
    """Algebraically fold & pre-pack all per-step weights plus the static graph
    structure into a single (R, W) f32 slab (numpy, done once)."""
    L = latent_dim
    out_dim = int(np.asarray(params[0]["decoder"][1][0]).shape[1])   # decoder w2: (L, 2)
    slab_w = out_dim * (k + 1)
    N = x_np.shape[0]

    w_hcat, phi_we, phi_b1, phi_w2_psy, phi_b2_psy = [], [], [], [], []
    loop_wc, loop_b1, loop_w2_psy, loop_b2_psy = [], [], [], []
    psy_b1, psy_w2a, psy_b2a, psy_wx = [], [], [], []
    dec_w1, dec_b1, dec_w2p, dec_b2p = [], [], [], []
    f0_row = None

    for u, p in enumerate(params):
        def g(name, _p=p):
            (w1, b1), (w2, b2) = _p[name]
            return (np.asarray(w1, np.float32), np.asarray(b1, np.float32),
                    np.asarray(w2, np.float32), np.asarray(b2, np.float32))

        tw1, tb1, tw2, tb2 = g("phi_to")
        fw1, fb1, fw2, fb2 = g("phi_from")
        lw1, lb1, lw2, lb2 = g("phi_loop")
        pw1, pb1, pw2, pb2 = g("psy")
        dw1, db1, dw2, db2 = g("decoder")

        # Phi_to / Phi_from merged along output columns (0:L -> to, L:2L -> from);
        # x_i of Phi_to is H[dst], x_i of Phi_from is H[src].
        phi_wd = np.concatenate([tw1[0:L], fw1[L:2 * L]], axis=1)      # applied to H[dst]
        phi_ws = np.concatenate([tw1[L:2 * L], fw1[0:L]], axis=1)      # applied to H[src]
        loop_wh = lw1[0:L] + lw1[L:2 * L]                              # cat([H, H, .]): both see H
        psy_wh = pw1[0:L]
        w_hcat.append(np.concatenate([phi_wd, phi_ws, loop_wh, psy_wh], axis=1))  # (L, 6L)

        we = np.zeros((_FEAT_PAD, 2 * L), np.float32)
        we[0:tw1.shape[0] - 2 * L] = np.concatenate([tw1[2 * L:], fw1[2 * L:]], axis=1)
        phi_we.append(we)
        phi_b1.append(np.concatenate([tb1, fb1], axis=1))

        # fold Phi 2nd layer through Psy's agg weights:
        #   S @ (relu(.) @ W2 + b2) @ P == S @ (relu(.) @ (W2 @ P) + b2 @ P)
        p_to, p_from = pw1[L:2 * L], pw1[2 * L:3 * L]
        blk = np.zeros((2 * L, 2 * L), np.float32)
        blk[0:L, 0:L] = tw2 @ p_to
        blk[L:2 * L, L:2 * L] = fw2 @ p_from
        phi_w2_psy.append(blk)
        phi_b2_psy.append(np.concatenate([tb2 @ p_to, fb2 @ p_from], axis=1))

        loop_wc.append(lw1[2 * L:2 * L + 1])
        loop_b1.append(lb1)
        p_loop = pw1[3 * L:4 * L]
        loop_w2_psy.append(lw2 @ p_loop)          # Loop 2nd layer folded through Psy
        loop_b2_psy.append(lb2 @ p_loop)

        psy_b1.append(pb1)
        psy_w2a.append(alpha * pw2)               # alpha folded into Psy's 2nd layer
        psy_b2a.append(alpha * pb2)
        wx = np.zeros((_FEAT_PAD, L), np.float32)
        wx[0:pw1.shape[0] - 4 * L] = pw1[4 * L:]
        psy_wx.append(wx)

        dec_w1.append(dw1)
        dec_b1.append(db1)
        w2p = np.zeros((L, slab_w), np.float32)
        w2p[:, (u + 1) * out_dim:(u + 2) * out_dim] = dw2   # output-slab slot u+1
        dec_w2p.append(w2p)
        b2p = np.zeros((1, slab_w), np.float32)
        b2p[:, (u + 1) * out_dim:(u + 2) * out_dim] = db2
        dec_b2p.append(b2p)

        if u == 0:
            # F['0'] = decoder_list[0](zeros) is a constant row -> precompute
            f0 = np.maximum(db1, 0.0) @ dw2 + db2
            f0_row = np.zeros((1, slab_w), np.float32)
            f0_row[:, 0:out_dim] = f0

    x_pad = np.zeros((N, _FEAT_PAD), np.float32)
    x_pad[:, 0:x_np.shape[1]] = x_np

    items = [
        ("x", x_pad), ("ea", ea_pad), ("loop_col", loop_col),
        ("g_dst", g_dst), ("g_src", g_src), ("s_to", s_to), ("s_from", s_from),
        ("y_tiled", np.tile(np.asarray(y_np, np.float32), (1, k + 1))),
        ("f0_row", f0_row),
        ("w_hcat", np.concatenate(w_hcat, axis=0)),
        ("phi_we_cat", np.concatenate(phi_we, axis=1)),
        ("psy_wx_cat", np.concatenate(psy_wx, axis=1)),
        ("phi_b1", np.concatenate(phi_b1, axis=0)),
        ("phi_w2_psy", np.concatenate(phi_w2_psy, axis=0)),
        ("phi_b2_psy", np.concatenate(phi_b2_psy, axis=0)),
        ("loop_wc", np.concatenate(loop_wc, axis=0)),
        ("loop_b1", np.concatenate(loop_b1, axis=0)),
        ("loop_w2_psy", np.concatenate(loop_w2_psy, axis=0)),
        ("loop_b2_psy", np.concatenate(loop_b2_psy, axis=0)),
        ("psy_b1", np.concatenate(psy_b1, axis=0)),
        ("psy_w2a", np.concatenate(psy_w2a, axis=0)),
        ("psy_b2a", np.concatenate(psy_b2a, axis=0)),
        ("dec_w1", np.concatenate(dec_w1, axis=0)),
        ("dec_b1", np.concatenate(dec_b1, axis=0)),
        ("dec_w2p", np.concatenate(dec_w2p, axis=0)),
        ("dec_b2p", np.concatenate(dec_b2p, axis=0)),
    ]
    slab, offsets = _pack_slab(items)
    return slab, offsets, out_dim


# --------------------------------- forward -----------------------------------

def dss_forward(slab, *, offsets, N, latent_dim, k, gamma, out_dim):
    slab_w = out_dim * (k + 1)
    kernel = functools.partial(_fused_dss_kernel, offsets=offsets, N=N,
                               L=latent_dim, k=k, gamma=gamma, out_dim=out_dim)
    slab_shape = slab.shape
    return pl.pallas_call(
        kernel,
        out_shape=jax.ShapeDtypeStruct((N + 1, slab_w), jnp.float32),
        grid=(1,),
        in_specs=[pl.BlockSpec(slab_shape, lambda i: (0, 0))],
        out_specs=pl.BlockSpec((N + 1, slab_w), lambda i: (0, 0)),
        compiler_params=_COMPILER_PARAMS,
    )(slab)


# ------------------- plain-JAX reference (spec semantics) --------------------

def reference_forward(params, x, y, src, dst, edge_attr, loop_col, s_to, s_from,
                      latent_dim, k, gamma, alpha):
    hp = jax.lax.Precision.HIGHEST
    mm = lambda a, b: jnp.dot(a, b, precision=hp)

    def mlp(p, v):
        (w1, b1), (w2, b2) = p
        h = jnp.maximum(mm(v, w1) + b1, 0.0)
        return mm(h, w2) + b2

    N = x.shape[0]
    H = jnp.zeros((N, latent_dim), jnp.float32)
    F = {"0": mlp(params[0]["decoder"], H)}
    losses = {}
    total = None
    for u in range(k):
        p = params[u]
        h_src = jnp.take(H, src, axis=0)
        h_dst = jnp.take(H, dst, axis=0)
        m_to = mlp(p["phi_to"], jnp.concatenate([h_dst, h_src, edge_attr], axis=1))
        m_from = mlp(p["phi_from"], jnp.concatenate([h_src, h_dst, edge_attr], axis=1))
        agg_to = mm(s_to, m_to)
        agg_from = mm(s_from, m_from)
        loop_out = mlp(p["phi_loop"], jnp.concatenate([H, H, loop_col], axis=1))
        concat = jnp.concatenate([H, agg_to, agg_from, loop_out, x], axis=1)
        H = H + alpha * mlp(p["psy"], concat)
        f_u = mlp(p["decoder"], H)
        F[str(u + 1)] = f_u
        l = jnp.mean((f_u - y) ** 2)
        losses[str(u + 1)] = l
        c = gamma ** (k - u - 1)
        total = l * c if total is None else total + l * c
    return F, total, losses


# ----------------------------------- main -------------------------------------

if __name__ == "__main__":
    latent_dim = 8
    k = 3
    gamma = 0.9
    alpha = 0.5

    N = 8  # num_nodes
    # deterministic small graph (one self-loop: kept for Loop's diagonal,
    # removed for Phi_to / Phi_from, mirroring torch_geometric semantics)
    edge_list = np.array(
        [[0, 1], [1, 2], [2, 3], [3, 4], [4, 5], [5, 6], [6, 7], [7, 0],
         [0, 2], [2, 2], [3, 6], [5, 1]], dtype=np.int32)
    E_total = edge_list.shape[0]

    key = jax.random.PRNGKey(0)
    kx, ky, ke, kp = jax.random.split(key, 4)
    x = jax.random.normal(kx, (N, 3), jnp.float32)                     # batch.x
    y = jax.random.normal(ky, (N, 2), jnp.float32)                     # batch.y
    edge_attr_full = jax.random.normal(ke, (E_total, 2), jnp.float32)  # batch.edge_attr

    # --- host-side static graph preprocessing (numpy, done once) ---
    ea_np = np.asarray(edge_attr_full)
    self_mask = edge_list[:, 0] == edge_list[:, 1]
    keep = ~self_mask                      # remove_self_loops for Phi_to / Phi_from
    kept = edge_list[keep]
    E = int(keep.sum())
    E_PAD = ((E + 7) // 8) * 8             # pad edge count to a sublane-tile multiple

    ea_pad = np.zeros((E_PAD, _FEAT_PAD), np.float32)
    ea_pad[0:E, 0:2] = ea_np[keep]

    # one-hot gather (edge -> endpoint) and scatter-add matrices, zero-padded edges
    G_dst = np.zeros((E_PAD, N), np.float32)
    G_src = np.zeros((E_PAD, N), np.float32)
    S_to = np.zeros((N, E_PAD), np.float32)
    S_from = np.zeros((N, E_PAD), np.float32)
    for e in range(E):
        s_node, d_node = int(kept[e, 0]), int(kept[e, 1])
        G_src[e, s_node] = 1.0
        G_dst[e, d_node] = 1.0
        S_to[d_node, e] = 1.0      # Phi_to aggregates at the target node
        S_from[s_node, e] = 1.0    # Phi_from aggregates at the source node

    # Loop's column: add_self_loops(weight=edge_attr[:,0], fill=1) ->
    # diag[i] = 1 + sum of existing self-loop weights at i ; loop = 1 - diag
    diag = np.ones((N,), np.float32)
    for e in range(E_total):
        if self_mask[e]:
            diag[int(edge_list[e, 0])] += ea_np[e, 0]
    loop_col = (1.0 - diag).reshape(N, 1).astype(np.float32)

    params = init_params(kp, latent_dim, k)
    slab_np, offsets, out_dim = build_slab(
        params, np.asarray(x), np.asarray(y), ea_pad, loop_col,
        G_dst, G_src, S_to, S_from, latent_dim, k, alpha)
    slab = jnp.asarray(slab_np)

    fwd = jax.jit(functools.partial(dss_forward, offsets=offsets, N=N,
                                    latent_dim=latent_dim, k=k, gamma=gamma,
                                    out_dim=out_dim))
    out = fwd(slab)
    jax.block_until_ready(out)

    F = {str(u): out[0:N, u * out_dim:(u + 1) * out_dim] for u in range(k + 1)}
    losses = {str(u + 1): out[N, u] for u in range(k)}
    total_loss = out[N, k]

    # correctness check vs a plain-JAX (Precision.HIGHEST) reference of the
    # PyTorch forward. Kernel dots use default MXU precision (bf16 multiplies),
    # so the loose tolerance is intentional.
    src = jnp.asarray(kept[:, 0], jnp.int32)
    dst = jnp.asarray(kept[:, 1], jnp.int32)
    edge_attr = jnp.asarray(ea_np[keep], jnp.float32)
    F_ref, total_ref, losses_ref = reference_forward(
        params, x, y, src, dst, edge_attr, jnp.asarray(loop_col),
        jnp.asarray(S_to[:, 0:E]), jnp.asarray(S_from[:, 0:E]),
        latent_dim, k, gamma, alpha)

    max_diff = 0.0
    for u in range(k + 1):
        max_diff = max(max_diff, float(jnp.max(jnp.abs(F[str(u)] - F_ref[str(u)]))))
    for u in range(1, k + 1):
        max_diff = max(max_diff, float(jnp.abs(losses[str(u)] - losses_ref[str(u)])))
    max_diff = max(max_diff, float(jnp.abs(total_loss - total_ref)))
    assert max_diff < 5e-2, f"fused kernel mismatch vs reference (max |diff| = {max_diff})"

    print("KERNEL_OK")
</pallas_src>

<mosaic_0001>
module attributes {stable_mosaic.version = 11 : i64} {
  func.func @_fused_dss_kernel(%arg0: i32, %arg1: memref<352x48xf32, #tpu.memory_space<vmem>>, %arg2: memref<9x8xf32, #tpu.memory_space<vmem>>) attributes {dimension_semantics = [#tpu.dimension_semantics<arbitrary>], iteration_bounds = array<i64: 1>, scalar_prefetch = 0 : i64, scratch_operands = 0 : i64, tpu.core_type = #tpu.core_type<tc>, window_params = [{pipeline_mode = #tpu.pipeline_mode<synchronous>, transform_indices = @transform_0, window_bounds = array<i64: 352, 48>}, {pipeline_mode = #tpu.pipeline_mode<synchronous>, transform_indices = @transform_1, window_bounds = array<i64: 9, 8>}]} {
    %c0 = arith.constant 0 : index
    %c0_0 = arith.constant 0 : index
    %0 = vector.load %arg1[%c0, %c0_0] : memref<352x48xf32, #tpu.memory_space<vmem>>, vector<8x48xf32>
    %1 = vector.extract_strided_slice %0 {offsets = [0, 0], sizes = [8, 8], strides = [1, 1]} : vector<8x48xf32> to vector<8x8xf32>
    %c8 = arith.constant 8 : index
    %c0_1 = arith.constant 0 : index
    %2 = vector.load %arg1[%c8, %c0_1] : memref<352x48xf32, #tpu.memory_space<vmem>>, vector<16x48xf32>
    %3 = vector.extract_strided_slice %2 {offsets = [0, 0], sizes = [16, 8], strides = [1, 1]} : vector<16x48xf32> to vector<16x8xf32>
    %c24 = arith.constant 24 : index
    %c0_2 = arith.constant 0 : index
    %4 = vector.load %arg1[%c24, %c0_2] : memref<352x48xf32, #tpu.memory_space<vmem>>, vector<8x48xf32>
    %5 = vector.extract_strided_slice %4 {offsets = [0, 0], sizes = [8, 1], strides = [1, 1]} : vector<8x48xf32> to vector<8x1xf32>
    %c32 = arith.constant 32 : index
    %c0_3 = arith.constant 0 : index
    %6 = vector.load %arg1[%c32, %c0_3] : memref<352x48xf32, #tpu.memory_space<vmem>>, vector<16x48xf32>
    %7 = vector.extract_strided_slice %6 {offsets = [0, 0], sizes = [16, 8], strides = [1, 1]} : vector<16x48xf32> to vector<16x8xf32>
    %c48 = arith.constant 48 : index
    %c0_4 = arith.constant 0 : index
    %8 = vector.load %arg1[%c48, %c0_4] : memref<352x48xf32, #tpu.memory_space<vmem>>, vector<16x48xf32>
    %9 = vector.extract_strided_slice %8 {offsets = [0, 0], sizes = [16, 8], strides = [1, 1]} : vector<16x48xf32> to vector<16x8xf32>
    %c64 = arith.constant 64 : index
    %c0_5 = arith.constant 0 : index
    %10 = vector.load %arg1[%c64, %c0_5] : memref<352x48xf32, #tpu.memory_space<vmem>>, vector<8x48xf32>
    %11 = vector.extract_strided_slice %10 {offsets = [0, 0], sizes = [8, 16], strides = [1, 1]} : vector<8x48xf32> to vector<8x16xf32>
    %c72 = arith.constant 72 : index
    %c0_6 = arith.constant 0 : index
    %12 = vector.load %arg1[%c72, %c0_6] : memref<352x48xf32, #tpu.memory_space<vmem>>, vector<8x48xf32>
    %13 = vector.extract_strided_slice %12 {offsets = [0, 0], sizes = [8, 16], strides = [1, 1]} : vector<8x48xf32> to vector<8x16xf32>
    %c80 = arith.constant 80 : index
    %c0_7 = arith.constant 0 : index
    %14 = vector.load %arg1[%c80, %c0_7] : memref<352x48xf32, #tpu.memory_space<vmem>>, vector<8x48xf32>
    %15 = vector.extract_strided_slice %14 {offsets = [0, 0], sizes = [8, 8], strides = [1, 1]} : vector<8x48xf32> to vector<8x8xf32>
    %c88 = arith.constant 88 : index
    %c0_8 = arith.constant 0 : index
    %16 = vector.load %arg1[%c88, %c0_8] : memref<352x48xf32, #tpu.memory_space<vmem>>, vector<1x48xf32>
    %17 = vector.extract_strided_slice %16 {offsets = [0, 0], sizes = [1, 8], strides = [1, 1]} : vector<1x48xf32> to vector<1x8xf32>
    %c136 = arith.constant 136 : index
    %c0_9 = arith.constant 0 : index
    %18 = vector.load %arg1[%c136, %c0_9] : memref<352x48xf32, #tpu.memory_space<vmem>>, vector<3x48xf32>
    %19 = vector.extract_strided_slice %18 {offsets = [0, 0], sizes = [3, 16], strides = [1, 1]} : vector<3x48xf32> to vector<3x16xf32>
    %c192 = arith.constant 192 : index
    %c0_10 = arith.constant 0 : index
    %20 = vector.load %arg1[%c192, %c0_10] : memref<352x48xf32, #tpu.memory_space<vmem>>, vector<3x48xf32>
    %21 = vector.extract_strided_slice %20 {offsets = [0, 0], sizes = [3, 16], strides = [1, 1]} : vector<3x48xf32> to vector<3x16xf32>
    %c200 = arith.constant 200 : index
    %c0_11 = arith.constant 0 : index
    %22 = vector.load %arg1[%c200, %c0_11] : memref<352x48xf32, #tpu.memory_space<vmem>>, vector<3x48xf32>
    %23 = vector.extract_strided_slice %22 {offsets = [0, 0], sizes = [3, 8], strides = [1, 1]} : vector<3x48xf32> to vector<3x8xf32>
    %c208 = arith.constant 208 : index
    %c0_12 = arith.constant 0 : index
    %24 = vector.load %arg1[%c208, %c0_12] : memref<352x48xf32, #tpu.memory_space<vmem>>, vector<3x48xf32>
    %25 = vector.extract_strided_slice %24 {offsets = [0, 0], sizes = [3, 8], strides = [1, 1]} : vector<3x48xf32> to vector<3x8xf32>
    %c240 = arith.constant 240 : index
    %c0_13 = arith.constant 0 : index
    %26 = vector.load %arg1[%c240, %c0_13] : memref<352x48xf32, #tpu.memory_space<vmem>>, vector<3x48xf32>
    %27 = vector.extract_strided_slice %26 {offsets = [0, 0], sizes = [3, 8], strides = [1, 1]} : vector<3x48xf32> to vector<3x8xf32>
    %c248 = arith.constant 248 : index
    %c0_14 = arith.constant 0 : index
    %28 = vector.load %arg1[%c248, %c0_14] : memref<352x48xf32, #tpu.memory_space<vmem>>, vector<3x48xf32>
    %29 = vector.extract_strided_slice %28 {offsets = [0, 0], sizes = [3, 8], strides = [1, 1]} : vector<3x48xf32> to vector<3x8xf32>
    %c280 = arith.constant 280 : index
    %c0_15 = arith.constant 0 : index
    %30 = vector.load %arg1[%c280, %c0_15] : memref<352x48xf32, #tpu.memory_space<vmem>>, vector<3x48xf32>
    %31 = vector.extract_strided_slice %30 {offsets = [0, 0], sizes = [3, 8], strides = [1, 1]} : vector<3x48xf32> to vector<3x8xf32>
    %c312 = arith.constant 312 : index
    %c0_16 = arith.constant 0 : index
    %32 = vector.load %arg1[%c312, %c0_16] : memref<352x48xf32, #tpu.memory_space<vmem>>, vector<3x48xf32>
    %33 = vector.extract_strided_slice %32 {offsets = [0, 0], sizes = [3, 8], strides = [1, 1]} : vector<3x48xf32> to vector<3x8xf32>
    %c344 = arith.constant 344 : index
    %c0_17 = arith.constant 0 : index
    %34 = vector.load %arg1[%c344, %c0_17] : memref<352x48xf32, #tpu.memory_space<vmem>>, vector<3x48xf32>
    %35 = vector.extract_strided_slice %34 {offsets = [0, 0], sizes = [3, 8], strides = [1, 1]} : vector<3x48xf32> to vector<3x8xf32>
    %c120 = arith.constant 120 : index
    %c0_18 = arith.constant 0 : index
    %36 = vector.load %arg1[%c120, %c0_18] : memref<352x48xf32, #tpu.memory_space<vmem>>, vector<8x48xf32>
    %cst = arith.constant dense<0.000000e+00> : vector<16x48xf32>
    %37 = tpu.matmul %3, %36, %cst {dimension_numbers = #tpu.dot_dimension_numbers<[1], [0], [0], [1], [0, 0, 1, 1], [], []>} : vector<16x8xf32>, vector<8x48xf32>, vector<16x48xf32> -> vector<16x48xf32>
    %c128 = arith.constant 128 : index
    %c0_19 = arith.constant 0 : index
    %38 = vector.load %arg1[%c128, %c0_19] : memref<352x48xf32, #tpu.memory_space<vmem>>, vector<8x48xf32>
    %39 = vector.extract_strided_slice %38 {offsets = [0, 0], sizes = [8, 24], strides = [1, 1]} : vector<8x48xf32> to vector<8x24xf32>
    %cst_20 = arith.constant dense<0.000000e+00> : vector<8x24xf32>
    %40 = tpu.matmul %1, %39, %cst_20 {dimension_numbers = #tpu.dot_dimension_numbers<[1], [0], [0], [1], [0, 0, 1, 1], [], []>} : vector<8x8xf32>, vector<8x24xf32>, vector<8x24xf32> -> vector<8x24xf32>
    %41 = arith.mulf %15, %15 : vector<8x8xf32>
    %cst_21 = arith.constant dense<0.000000e+00> : vector<8xf32>
    %42 = vector.multi_reduction <add>, %41, %cst_21 [1] : vector<8x8xf32> to vector<8xf32>
    %43 = vector.shape_cast %42 : vector<8xf32> to vector<8x1xf32>
    %cst_22 = arith.constant dense<0.000000e+00> : vector<1xf32>
    %44 = vector.multi_reduction <add>, %43, %cst_22 [0] : vector<8x1xf32> to vector<1xf32>
    %45 = vector.shape_cast %44 : vector<1xf32> to vector<1x1xf32>
    %cst_23 = arith.constant 2.500000e-01 : f32
    %46 = vector.broadcast %cst_23 : f32 to vector<1x1xf32>
    %47 = arith.mulf %45, %46 : vector<1x1xf32>
    %cst_24 = arith.constant 0.000000e+00 : f32
    %48 = vector.broadcast %cst_24 : f32 to vector<8x8xf32>
    %cst_25 = arith.constant 0.000000e+00 : f32
    %49 = vector.broadcast %cst_25 : f32 to vector<8x8xf32>
    %50 = vector.broadcast %17 : vector<1x8xf32> to vector<8x8xf32>
    %51 = arith.addf %49, %50 : vector<8x8xf32>
    %52 = tpu.iota {dimensions = array<i32: 1>} : vector<1x8xi32>
    %cst_26 = arith.constant 0.000000e+00 : f32
    %53 = vector.broadcast %cst_26 : f32 to vector<1x8xf32>
    %cst_27 = arith.constant 0.000000e+00 : f32
    %54 = vector.broadcast %cst_27 : f32 to vector<1x1xf32>
    %55 = vector.extract_strided_slice %37 {offsets = [0, 0], sizes = [16, 16], strides = [1, 1]} : vector<16x48xf32> to vector<16x16xf32>
    %56 = vector.extract_strided_slice %19 {offsets = [0, 0], sizes = [1, 16], strides = [1, 1]} : vector<3x16xf32> to vector<1x16xf32>
    %57 = vector.broadcast %56 : vector<1x16xf32> to vector<16x16xf32>
    %58 = arith.addf %55, %57 : vector<16x16xf32>
    %59 = vector.extract_strided_slice %23 {offsets = [0, 0], sizes = [1, 8], strides = [1, 1]} : vector<3x8xf32> to vector<1x8xf32>
    %60 = vector.broadcast %5 : vector<8x1xf32> to vector<8x8xf32>
    %61 = vector.broadcast %59 : vector<1x8xf32> to vector<8x8xf32>
    %62 = arith.mulf %60, %61 : vector<8x8xf32>
    %63 = vector.extract_strided_slice %25 {offsets = [0, 0], sizes = [1, 8], strides = [1, 1]} : vector<3x8xf32> to vector<1x8xf32>
    %64 = vector.broadcast %63 : vector<1x8xf32> to vector<8x8xf32>
    %65 = arith.addf %62, %64 : vector<8x8xf32>
    %66 = vector.extract_strided_slice %40 {offsets = [0, 0], sizes = [8, 8], strides = [1, 1]} : vector<8x24xf32> to vector<8x8xf32>
    %67 = vector.extract_strided_slice %29 {offsets = [0, 0], sizes = [1, 8], strides = [1, 1]} : vector<3x8xf32> to vector<1x8xf32>
    %68 = vector.broadcast %67 : vector<1x8xf32> to vector<8x8xf32>
    %69 = arith.addf %66, %68 : vector<8x8xf32>
    %cst_28 = arith.constant 0.000000e+00 : f32
    %70 = vector.broadcast %cst_28 : f32 to vector<16x16xf32>
    %71 = arith.maximumf %58, %70 : vector<16x16xf32>
    %c144 = arith.constant 144 : index
    %c0_29 = arith.constant 0 : index
    %72 = vector.load %arg1[%c144, %c0_29] : memref<352x48xf32, #tpu.memory_space<vmem>>, vector<16x48xf32>
    %73 = vector.extract_strided_slice %72 {offsets = [0, 0], sizes = [16, 16], strides = [1, 1]} : vector<16x48xf32> to vector<16x16xf32>
    %cst_30 = arith.constant dense<0.000000e+00> : vector<16x16xf32>
    %74 = tpu.matmul %71, %73, %cst_30 {dimension_numbers = #tpu.dot_dimension_numbers<[1], [0], [0], [1], [0, 0, 1, 1], [], []>} : vector<16x16xf32>, vector<16x16xf32>, vector<16x16xf32> -> vector<16x16xf32>
    %75 = vector.extract_strided_slice %21 {offsets = [0, 0], sizes = [1, 16], strides = [1, 1]} : vector<3x16xf32> to vector<1x16xf32>
    %76 = vector.broadcast %75 : vector<1x16xf32> to vector<16x16xf32>
    %77 = arith.addf %74, %76 : vector<16x16xf32>
    %78 = vector.extract_strided_slice %77 {offsets = [0, 0], sizes = [16, 8], strides = [1, 1]} : vector<16x16xf32> to vector<16x8xf32>
    %cst_31 = arith.constant dense<0.000000e+00> : vector<8x8xf32>
    %79 = tpu.matmul %11, %78, %cst_31 {dimension_numbers = #tpu.dot_dimension_numbers<[1], [0], [0], [1], [0, 0, 1, 1], [], []>} : vector<8x16xf32>, vector<16x8xf32>, vector<8x8xf32> -> vector<8x8xf32>
    %80 = vector.extract_strided_slice %77 {offsets = [0, 8], sizes = [16, 8], strides = [1, 1]} : vector<16x16xf32> to vector<16x8xf32>
    %cst_32 = arith.constant dense<0.000000e+00> : vector<8x8xf32>
    %81 = tpu.matmul %13, %80, %cst_32 {dimension_numbers = #tpu.dot_dimension_numbers<[1], [0], [0], [1], [0, 0, 1, 1], [], []>} : vector<8x16xf32>, vector<16x8xf32>, vector<8x8xf32> -> vector<8x8xf32>
    %82 = arith.addf %79, %81 : vector<8x8xf32>
    %cst_33 = arith.constant 0.000000e+00 : f32
    %83 = vector.broadcast %cst_33 : f32 to vector<8x8xf32>
    %84 = arith.maximumf %65, %83 : vector<8x8xf32>
    %c216 = arith.constant 216 : index
    %c0_34 = arith.constant 0 : index
    %85 = vector.load %arg1[%c216, %c0_34] : memref<352x48xf32, #tpu.memory_space<vmem>>, vector<8x48xf32>
    %86 = vector.extract_strided_slice %85 {offsets = [0, 0], sizes = [8, 8], strides = [1, 1]} : vector<8x48xf32> to vector<8x8xf32>
    %cst_35 = arith.constant dense<0.000000e+00> : vector<8x8xf32>
    %87 = tpu.matmul %84, %86, %cst_35 {dimension_numbers = #tpu.dot_dimension_numbers<[1], [0], [0], [1], [0, 0, 1, 1], [], []>} : vector<8x8xf32>, vector<8x8xf32>, vector<8x8xf32> -> vector<8x8xf32>
    %88 = vector.extract_strided_slice %27 {offsets = [0, 0], sizes = [1, 8], strides = [1, 1]} : vector<3x8xf32> to vector<1x8xf32>
    %89 = vector.broadcast %88 : vector<1x8xf32> to vector<8x8xf32>
    %90 = arith.addf %87, %89 : vector<8x8xf32>
    %91 = arith.addf %69, %82 : vector<8x8xf32>
    %92 = arith.addf %91, %90 : vector<8x8xf32>
    %cst_36 = arith.constant 0.000000e+00 : f32
    %93 = vector.broadcast %cst_36 : f32 to vector<8x8xf32>
    %94 = arith.maximumf %92, %93 : vector<8x8xf32>
    %c256 = arith.constant 256 : index
    %c0_37 = arith.constant 0 : index
    %95 = vector.load %arg1[%c256, %c0_37] : memref<352x48xf32, #tpu.memory_space<vmem>>, vector<8x48xf32>
    %96 = vector.extract_strided_slice %95 {offsets = [0, 0], sizes = [8, 8], strides = [1, 1]} : vector<8x48xf32> to vector<8x8xf32>
    %cst_38 = arith.constant dense<0.000000e+00> : vector<8x8xf32>
    %97 = tpu.matmul %94, %96, %cst_38 {dimension_numbers = #tpu.dot_dimension_numbers<[1], [0], [0], [1], [0, 0, 1, 1], [], []>} : vector<8x8xf32>, vector<8x8xf32>, vector<8x8xf32> -> vector<8x8xf32>
    %98 = arith.addf %48, %97 : vector<8x8xf32>
    %99 = vector.extract_strided_slice %31 {offsets = [0, 0], sizes = [1, 8], strides = [1, 1]} : vector<3x8xf32> to vector<1x8xf32>
    %100 = vector.broadcast %99 : vector<1x8xf32> to vector<8x8xf32>
    %101 = arith.addf %98, %100 : vector<8x8xf32>
    %c288 = arith.constant 288 : index
    %c0_39 = arith.constant 0 : index
    %102 = vector.load %arg1[%c288, %c0_39] : memref<352x48xf32, #tpu.memory_space<vmem>>, vector<8x48xf32>
    %103 = vector.extract_strided_slice %102 {offsets = [0, 0], sizes = [8, 8], strides = [1, 1]} : vector<8x48xf32> to vector<8x8xf32>
    %cst_40 = arith.constant dense<0.000000e+00> : vector<8x8xf32>
    %104 = tpu.matmul %101, %103, %cst_40 {dimension_numbers = #tpu.dot_dimension_numbers<[1], [0], [0], [1], [0, 0, 1, 1], [], []>} : vector<8x8xf32>, vector<8x8xf32>, vector<8x8xf32> -> vector<8x8xf32>
    %105 = vector.extract_strided_slice %33 {offsets = [0, 0], sizes = [1, 8], strides = [1, 1]} : vector<3x8xf32> to vector<1x8xf32>
    %106 = vector.broadcast %105 : vector<1x8xf32> to vector<8x8xf32>
    %107 = arith.addf %104, %106 : vector<8x8xf32>
    %cst_41 = arith.constant 0.000000e+00 : f32
    %108 = vector.broadcast %cst_41 : f32 to vector<8x8xf32>
    %109 = arith.maximumf %107, %108 : vector<8x8xf32>
    %c320 = arith.constant 320 : index
    %c0_42 = arith.constant 0 : index
    %110 = vector.load %arg1[%c320, %c0_42] : memref<352x48xf32, #tpu.memory_space<vmem>>, vector<8x48xf32>
    %111 = vector.extract_strided_slice %110 {offsets = [0, 0], sizes = [8, 8], strides = [1, 1]} : vector<8x48xf32> to vector<8x8xf32>
    %cst_43 = arith.constant dense<0.000000e+00> : vector<8x8xf32>
    %112 = tpu.matmul %109, %111, %cst_43 {dimension_numbers = #tpu.dot_dimension_numbers<[1], [0], [0], [1], [0, 0, 1, 1], [], []>} : vector<8x8xf32>, vector<8x8xf32>, vector<8x8xf32> -> vector<8x8xf32>
    %113 = vector.extract_strided_slice %35 {offsets = [0, 0], sizes = [1, 8], strides = [1, 1]} : vector<3x8xf32> to vector<1x8xf32>
    %114 = vector.broadcast %113 : vector<1x8xf32> to vector<8x8xf32>
    %115 = arith.addf %112, %114 : vector<8x8xf32>
    %116 = arith.addf %51, %115 : vector<8x8xf32>
    %cst_44 = arith.constant 2.000000e+00 : f32
    %117 = vector.broadcast %cst_44 : f32 to vector<8x8xf32>
    %118 = arith.mulf %117, %15 : vector<8x8xf32>
    %119 = arith.subf %115, %118 : vector<8x8xf32>
    %120 = arith.mulf %115, %119 : vector<8x8xf32>
    %cst_45 = arith.constant dense<0.000000e+00> : vector<8xf32>
    %121 = vector.multi_reduction <add>, %120, %cst_45 [1] : vector<8x8xf32> to vector<8xf32>
    %122 = vector.shape_cast %121 : vector<8xf32> to vector<8x1xf32>
    %cst_46 = arith.constant dense<0.000000e+00> : vector<1xf32>
    %123 = vector.multi_reduction <add>, %122, %cst_46 [0] : vector<8x1xf32> to vector<1xf32>
    %124 = vector.shape_cast %123 : vector<1xf32> to vector<1x1xf32>
    %125 = arith.addf %124, %47 : vector<1x1xf32>
    %cst_47 = arith.constant 6.250000e-02 : f32
    %126 = vector.broadcast %cst_47 : f32 to vector<1x1xf32>
    %127 = arith.mulf %125, %126 : vector<1x1xf32>
    %c0_i32 = arith.constant 0 : i32
    %128 = vector.broadcast %c0_i32 : i32 to vector<1x8xi32>
    %129 = arith.cmpi eq, %52, %128 : vector<1x8xi32>
    %130 = arith.extui %129 : vector<1x8xi1> to vector<1x8xi32>
    %131 = arith.sitofp %130 : vector<1x8xi32> to vector<1x8xf32>
    %132 = vector.broadcast %127 : vector<1x1xf32> to vector<1x8xf32>
    %133 = arith.mulf %132, %131 : vector<1x8xf32>
    %134 = arith.addf %53, %133 : vector<1x8xf32>
    %cst_48 = arith.constant 8.100000e-01 : f32
    %135 = vector.broadcast %cst_48 : f32 to vector<1x1xf32>
    %136 = arith.mulf %127, %135 : vector<1x1xf32>
    %137 = arith.addf %54, %136 : vector<1x1xf32>
    %c104 = arith.constant 104 : index
    %c0_49 = arith.constant 0 : index
    %138 = vector.load %arg1[%c104, %c0_49] : memref<352x48xf32, #tpu.memory_space<vmem>>, vector<8x48xf32>
    %cst_50 = arith.constant dense<0.000000e+00> : vector<8x48xf32>
    %139 = tpu.matmul %101, %138, %cst_50 {dimension_numbers = #tpu.dot_dimension_numbers<[1], [0], [0], [1], [0, 0, 1, 1], [], []>} : vector<8x8xf32>, vector<8x48xf32>, vector<8x48xf32> -> vector<8x48xf32>
    %140 = vector.extract_strided_slice %139 {offsets = [0, 0], sizes = [8, 16], strides = [1, 1]} : vector<8x48xf32> to vector<8x16xf32>
    %cst_51 = arith.constant dense<0.000000e+00> : vector<16x16xf32>
    %141 = tpu.matmul %7, %140, %cst_51 {dimension_numbers = #tpu.dot_dimension_numbers<[1], [0], [0], [1], [0, 0, 1, 1], [], []>} : vector<16x8xf32>, vector<8x16xf32>, vector<16x16xf32> -> vector<16x16xf32>
    %142 = vector.extract_strided_slice %139 {offsets = [0, 16], sizes = [8, 16], strides = [1, 1]} : vector<8x48xf32> to vector<8x16xf32>
    %cst_52 = arith.constant dense<0.000000e+00> : vector<16x16xf32>
    %143 = tpu.matmul %9, %142, %cst_52 {dimension_numbers = #tpu.dot_dimension_numbers<[1], [0], [0], [1], [0, 0, 1, 1], [], []>} : vector<16x8xf32>, vector<8x16xf32>, vector<16x16xf32> -> vector<16x16xf32>
    %144 = arith.addf %141, %143 : vector<16x16xf32>
    %145 = vector.extract_strided_slice %37 {offsets = [0, 16], sizes = [16, 16], strides = [1, 1]} : vector<16x48xf32> to vector<16x16xf32>
    %146 = arith.addf %144, %145 : vector<16x16xf32>
    %147 = vector.extract_strided_slice %19 {offsets = [1, 0], sizes = [1, 16], strides = [1, 1]} : vector<3x16xf32> to vector<1x16xf32>
    %148 = vector.broadcast %147 : vector<1x16xf32> to vector<16x16xf32>
    %149 = arith.addf %146, %148 : vector<16x16xf32>
    %150 = vector.extract_strided_slice %139 {offsets = [0, 32], sizes = [8, 8], strides = [1, 1]} : vector<8x48xf32> to vector<8x8xf32>
    %151 = vector.extract_strided_slice %23 {offsets = [1, 0], sizes = [1, 8], strides = [1, 1]} : vector<3x8xf32> to vector<1x8xf32>
    %152 = vector.broadcast %5 : vector<8x1xf32> to vector<8x8xf32>
    %153 = vector.broadcast %151 : vector<1x8xf32> to vector<8x8xf32>
    %154 = arith.mulf %152, %153 : vector<8x8xf32>
    %155 = arith.addf %150, %154 : vector<8x8xf32>
    %156 = vector.extract_strided_slice %25 {offsets = [1, 0], sizes = [1, 8], strides = [1, 1]} : vector<3x8xf32> to vector<1x8xf32>
    %157 = vector.broadcast %156 : vector<1x8xf32> to vector<8x8xf32>
    %158 = arith.addf %155, %157 : vector<8x8xf32>
    %159 = vector.extract_strided_slice %139 {offsets = [0, 40], sizes = [8, 8], strides = [1, 1]} : vector<8x48xf32> to vector<8x8xf32>
    %160 = vector.extract_strided_slice %40 {offsets = [0, 8], sizes = [8, 8], strides = [1, 1]} : vector<8x24xf32> to vector<8x8xf32>
    %161 = arith.addf %159, %160 : vector<8x8xf32>
    %162 = vector.extract_strided_slice %29 {offsets = [1, 0], sizes = [1, 8], strides = [1, 1]} : vector<3x8xf32> to vector<1x8xf32>
    %163 = vector.broadcast %162 : vector<1x8xf32> to vector<8x8xf32>
    %164 = arith.addf %161, %163 : vector<8x8xf32>
    %cst_53 = arith.constant 0.000000e+00 : f32
    %165 = vector.broadcast %cst_53 : f32 to vector<16x16xf32>
    %166 = arith.maximumf %149, %165 : vector<16x16xf32>
    %c160 = arith.constant 160 : index
    %c0_54 = arith.constant 0 : index
    %167 = vector.load %arg1[%c160, %c0_54] : memref<352x48xf32, #tpu.memory_space<vmem>>, vector<16x48xf32>
    %168 = vector.extract_strided_slice %167 {offsets = [0, 0], sizes = [16, 16], strides = [1, 1]} : vector<16x48xf32> to vector<16x16xf32>
    %cst_55 = arith.constant dense<0.000000e+00> : vector<16x16xf32>
    %169 = tpu.matmul %166, %168, %cst_55 {dimension_numbers = #tpu.dot_dimension_numbers<[1], [0], [0], [1], [0, 0, 1, 1], [], []>} : vector<16x16xf32>, vector<16x16xf32>, vector<16x16xf32> -> vector<16x16xf32>
    %170 = vector.extract_strided_slice %21 {offsets = [1, 0], sizes = [1, 16], strides = [1, 1]} : vector<3x16xf32> to vector<1x16xf32>
    %171 = vector.broadcast %170 : vector<1x16xf32> to vector<16x16xf32>
    %172 = arith.addf %169, %171 : vector<16x16xf32>
    %173 = vector.extract_strided_slice %172 {offsets = [0, 0], sizes = [16, 8], strides = [1, 1]} : vector<16x16xf32> to vector<16x8xf32>
    %cst_56 = arith.constant dense<0.000000e+00> : vector<8x8xf32>
    %174 = tpu.matmul %11, %173, %cst_56 {dimension_numbers = #tpu.dot_dimension_numbers<[1], [0], [0], [1], [0, 0, 1, 1], [], []>} : vector<8x16xf32>, vector<16x8xf32>, vector<8x8xf32> -> vector<8x8xf32>
    %175 = vector.extract_strided_slice %172 {offsets = [0, 8], sizes = [16, 8], strides = [1, 1]} : vector<16x16xf32> to vector<16x8xf32>
    %cst_57 = arith.constant dense<0.000000e+00> : vector<8x8xf32>
    %176 = tpu.matmul %13, %175, %cst_57 {dimension_numbers = #tpu.dot_dimension_numbers<[1], [0], [0], [1], [0, 0, 1, 1], [], []>} : vector<8x16xf32>, vector<16x8xf32>, vector<8x8xf32> -> vector<8x8xf32>
    %177 = arith.addf %174, %176 : vector<8x8xf32>
    %cst_58 = arith.constant 0.000000e+00 : f32
    %178 = vector.broadcast %cst_58 : f32 to vector<8x8xf32>
    %179 = arith.maximumf %158, %178 : vector<8x8xf32>
    %c224 = arith.constant 224 : index
    %c0_59 = arith.constant 0 : index
    %180 = vector.load %arg1[%c224, %c0_59] : memref<352x48xf32, #tpu.memory_space<vmem>>, vector<8x48xf32>
    %181 = vector.extract_strided_slice %180 {offsets = [0, 0], sizes = [8, 8], strides = [1, 1]} : vector<8x48xf32> to vector<8x8xf32>
    %cst_60 = arith.constant dense<0.000000e+00> : vector<8x8xf32>
    %182 = tpu.matmul %179, %181, %cst_60 {dimension_numbers = #tpu.dot_dimension_numbers<[1], [0], [0], [1], [0, 0, 1, 1], [], []>} : vector<8x8xf32>, vector<8x8xf32>, vector<8x8xf32> -> vector<8x8xf32>
    %183 = vector.extract_strided_slice %27 {offsets = [1, 0], sizes = [1, 8], strides = [1, 1]} : vector<3x8xf32> to vector<1x8xf32>
    %184 = vector.broadcast %183 : vector<1x8xf32> to vector<8x8xf32>
    %185 = arith.addf %182, %184 : vector<8x8xf32>
    %186 = arith.addf %164, %177 : vector<8x8xf32>
    %187 = arith.addf %186, %185 : vector<8x8xf32>
    %cst_61 = arith.constant 0.000000e+00 : f32
    %188 = vector.broadcast %cst_61 : f32 to vector<8x8xf32>
    %189 = arith.maximumf %187, %188 : vector<8x8xf32>
    %c264 = arith.constant 264 : index
    %c0_62 = arith.constant 0 : index
    %190 = vector.load %arg1[%c264, %c0_62] : memref<352x48xf32, #tpu.memory_space<vmem>>, vector<8x48xf32>
    %191 = vector.extract_strided_slice %190 {offsets = [0, 0], sizes = [8, 8], strides = [1, 1]} : vector<8x48xf32> to vector<8x8xf32>
    %cst_63 = arith.constant dense<0.000000e+00> : vector<8x8xf32>
    %192 = tpu.matmul %189, %191, %cst_63 {dimension_numbers = #tpu.dot_dimension_numbers<[1], [0], [0], [1], [0, 0, 1, 1], [], []>} : vector<8x8xf32>, vector<8x8xf32>, vector<8x8xf32> -> vector<8x8xf32>
    %193 = arith.addf %101, %192 : vector<8x8xf32>
    %194 = vector.extract_strided_slice %31 {offsets = [1, 0], sizes = [1, 8], strides = [1, 1]} : vector<3x8xf32> to vector<1x8xf32>
    %195 = vector.broadcast %194 : vector<1x8xf32> to vector<8x8xf32>
    %196 = arith.addf %193, %195 : vector<8x8xf32>
    %c296 = arith.constant 296 : index
    %c0_64 = arith.constant 0 : index
    %197 = vector.load %arg1[%c296, %c0_64] : memref<352x48xf32, #tpu.memory_space<vmem>>, vector<8x48xf32>
    %198 = vector.extract_strided_slice %197 {offsets = [0, 0], sizes = [8, 8], strides = [1, 1]} : vector<8x48xf32> to vector<8x8xf32>
    %cst_65 = arith.constant dense<0.000000e+00> : vector<8x8xf32>
    %199 = tpu.matmul %196, %198, %cst_65 {dimension_numbers = #tpu.dot_dimension_numbers<[1], [0], [0], [1], [0, 0, 1, 1], [], []>} : vector<8x8xf32>, vector<8x8xf32>, vector<8x8xf32> -> vector<8x8xf32>
    %200 = vector.extract_strided_slice %33 {offsets = [1, 0], sizes = [1, 8], strides = [1, 1]} : vector<3x8xf32> to vector<1x8xf32>
    %201 = vector.broadcast %200 : vector<1x8xf32> to vector<8x8xf32>
    %202 = arith.addf %199, %201 : vector<8x8xf32>
    %cst_66 = arith.constant 0.000000e+00 : f32
    %203 = vector.broadcast %cst_66 : f32 to vector<8x8xf32>
    %204 = arith.maximumf %202, %203 : vector<8x8xf32>
    %c328 = arith.constant 328 : index
    %c0_67 = arith.constant 0 : index
    %205 = vector.load %arg1[%c328, %c0_67] : memref<352x48xf32, #tpu.memory_space<vmem>>, vector<8x48xf32>
    %206 = vector.extract_strided_slice %205 {offsets = [0, 0], sizes = [8, 8], strides = [1, 1]} : vector<8x48xf32> to vector<8x8xf32>
    %cst_68 = arith.constant dense<0.000000e+00> : vector<8x8xf32>
    %207 = tpu.matmul %204, %206, %cst_68 {dimension_numbers = #tpu.dot_dimension_numbers<[1], [0], [0], [1], [0, 0, 1, 1], [], []>} : vector<8x8xf32>, vector<8x8xf32>, vector<8x8xf32> -> vector<8x8xf32>
    %208 = vector.extract_strided_slice %35 {offsets = [1, 0], sizes = [1, 8], strides = [1, 1]} : vector<3x8xf32> to vector<1x8xf32>
    %209 = vector.broadcast %208 : vector<1x8xf32> to vector<8x8xf32>
    %210 = arith.addf %207, %209 : vector<8x8xf32>
    %211 = arith.addf %116, %210 : vector<8x8xf32>
    %cst_69 = arith.constant 2.000000e+00 : f32
    %212 = vector.broadcast %cst_69 : f32 to vector<8x8xf32>
    %213 = arith.mulf %212, %15 : vector<8x8xf32>
    %214 = arith.subf %210, %213 : vector<8x8xf32>
    %215 = arith.mulf %210, %214 : vector<8x8xf32>
    %cst_70 = arith.constant dense<0.000000e+00> : vector<8xf32>
    %216 = vector.multi_reduction <add>, %215, %cst_70 [1] : vector<8x8xf32> to vector<8xf32>
    %217 = vector.shape_cast %216 : vector<8xf32> to vector<8x1xf32>
    %cst_71 = arith.constant dense<0.000000e+00> : vector<1xf32>
    %218 = vector.multi_reduction <add>, %217, %cst_71 [0] : vector<8x1xf32> to vector<1xf32>
    %219 = vector.shape_cast %218 : vector<1xf32> to vector<1x1xf32>
    %220 = arith.addf %219, %47 : vector<1x1xf32>
    %cst_72 = arith.constant 6.250000e-02 : f32
    %221 = vector.broadcast %cst_72 : f32 to vector<1x1xf32>
    %222 = arith.mulf %220, %221 : vector<1x1xf32>
    %c1_i32 = arith.constant 1 : i32
    %223 = vector.broadcast %c1_i32 : i32 to vector<1x8xi32>
    %224 = arith.cmpi eq, %52, %223 : vector<1x8xi32>
    %225 = arith.extui %224 : vector<1x8xi1> to vector<1x8xi32>
    %226 = arith.sitofp %225 : vector<1x8xi32> to vector<1x8xf32>
    %227 = vector.broadcast %222 : vector<1x1xf32> to vector<1x8xf32>
    %228 = arith.mulf %227, %226 : vector<1x8xf32>
    %229 = arith.addf %134, %228 : vector<1x8xf32>
    %cst_73 = arith.constant 0.899999976 : f32
    %230 = vector.broadcast %cst_73 : f32 to vector<1x1xf32>
    %231 = arith.mulf %222, %230 : vector<1x1xf32>
    %232 = arith.addf %137, %231 : vector<1x1xf32>
    %c112 = arith.constant 112 : index
    %c0_74 = arith.constant 0 : index
    %233 = vector.load %arg1[%c112, %c0_74] : memref<352x48xf32, #tpu.memory_space<vmem>>, vector<8x48xf32>
    %cst_75 = arith.constant dense<0.000000e+00> : vector<8x48xf32>
    %234 = tpu.matmul %196, %233, %cst_75 {dimension_numbers = #tpu.dot_dimension_numbers<[1], [0], [0], [1], [0, 0, 1, 1], [], []>} : vector<8x8xf32>, vector<8x48xf32>, vector<8x48xf32> -> vector<8x48xf32>
    %235 = vector.extract_strided_slice %234 {offsets = [0, 0], sizes = [8, 16], strides = [1, 1]} : vector<8x48xf32> to vector<8x16xf32>
    %cst_76 = arith.constant dense<0.000000e+00> : vector<16x16xf32>
    %236 = tpu.matmul %7, %235, %cst_76 {dimension_numbers = #tpu.dot_dimension_numbers<[1], [0], [0], [1], [0, 0, 1, 1], [], []>} : vector<16x8xf32>, vector<8x16xf32>, vector<16x16xf32> -> vector<16x16xf32>
    %237 = vector.extract_strided_slice %234 {offsets = [0, 16], sizes = [8, 16], strides = [1, 1]} : vector<8x48xf32> to vector<8x16xf32>
    %cst_77 = arith.constant dense<0.000000e+00> : vector<16x16xf32>
    %238 = tpu.matmul %9, %237, %cst_77 {dimension_numbers = #tpu.dot_dimension_numbers<[1], [0], [0], [1], [0, 0, 1, 1], [], []>} : vector<16x8xf32>, vector<8x16xf32>, vector<16x16xf32> -> vector<16x16xf32>
    %239 = arith.addf %236, %238 : vector<16x16xf32>
    %240 = vector.extract_strided_slice %37 {offsets = [0, 32], sizes = [16, 16], strides = [1, 1]} : vector<16x48xf32> to vector<16x16xf32>
    %241 = arith.addf %239, %240 : vector<16x16xf32>
    %242 = vector.extract_strided_slice %19 {offsets = [2, 0], sizes = [1, 16], strides = [1, 1]} : vector<3x16xf32> to vector<1x16xf32>
    %243 = vector.broadcast %242 : vector<1x16xf32> to vector<16x16xf32>
    %244 = arith.addf %241, %243 : vector<16x16xf32>
    %245 = vector.extract_strided_slice %234 {offsets = [0, 32], sizes = [8, 8], strides = [1, 1]} : vector<8x48xf32> to vector<8x8xf32>
    %246 = vector.extract_strided_slice %23 {offsets = [2, 0], sizes = [1, 8], strides = [1, 1]} : vector<3x8xf32> to vector<1x8xf32>
    %247 = vector.broadcast %5 : vector<8x1xf32> to vector<8x8xf32>
    %248 = vector.broadcast %246 : vector<1x8xf32> to vector<8x8xf32>
    %249 = arith.mulf %247, %248 : vector<8x8xf32>
    %250 = arith.addf %245, %249 : vector<8x8xf32>
    %251 = vector.extract_strided_slice %25 {offsets = [2, 0], sizes = [1, 8], strides = [1, 1]} : vector<3x8xf32> to vector<1x8xf32>
    %252 = vector.broadcast %251 : vector<1x8xf32> to vector<8x8xf32>
    %253 = arith.addf %250, %252 : vector<8x8xf32>
    %254 = vector.extract_strided_slice %234 {offsets = [0, 40], sizes = [8, 8], strides = [1, 1]} : vector<8x48xf32> to vector<8x8xf32>
    %255 = vector.extract_strided_slice %40 {offsets = [0, 16], sizes = [8, 8], strides = [1, 1]} : vector<8x24xf32> to vector<8x8xf32>
    %256 = arith.addf %254, %255 : vector<8x8xf32>
    %257 = vector.extract_strided_slice %29 {offsets = [2, 0], sizes = [1, 8], strides = [1, 1]} : vector<3x8xf32> to vector<1x8xf32>
    %258 = vector.broadcast %257 : vector<1x8xf32> to vector<8x8xf32>
    %259 = arith.addf %256, %258 : vector<8x8xf32>
    %cst_78 = arith.constant 0.000000e+00 : f32
    %260 = vector.broadcast %cst_78 : f32 to vector<16x16xf32>
    %261 = arith.maximumf %244, %260 : vector<16x16xf32>
    %c176 = arith.constant 176 : index
    %c0_79 = arith.constant 0 : index
    %262 = vector.load %arg1[%c176, %c0_79] : memref<352x48xf32, #tpu.memory_space<vmem>>, vector<16x48xf32>
    %263 = vector.extract_strided_slice %262 {offsets = [0, 0], sizes = [16, 16], strides = [1, 1]} : vector<16x48xf32> to vector<16x16xf32>
    %cst_80 = arith.constant dense<0.000000e+00> : vector<16x16xf32>
    %264 = tpu.matmul %261, %263, %cst_80 {dimension_numbers = #tpu.dot_dimension_numbers<[1], [0], [0], [1], [0, 0, 1, 1], [], []>} : vector<16x16xf32>, vector<16x16xf32>, vector<16x16xf32> -> vector<16x16xf32>
    %265 = vector.extract_strided_slice %21 {offsets = [2, 0], sizes = [1, 16], strides = [1, 1]} : vector<3x16xf32> to vector<1x16xf32>
    %266 = vector.broadcast %265 : vector<1x16xf32> to vector<16x16xf32>
    %267 = arith.addf %264, %266 : vector<16x16xf32>
    %268 = vector.extract_strided_slice %267 {offsets = [0, 0], sizes = [16, 8], strides = [1, 1]} : vector<16x16xf32> to vector<16x8xf32>
    %cst_81 = arith.constant dense<0.000000e+00> : vector<8x8xf32>
    %269 = tpu.matmul %11, %268, %cst_81 {dimension_numbers = #tpu.dot_dimension_numbers<[1], [0], [0], [1], [0, 0, 1, 1], [], []>} : vector<8x16xf32>, vector<16x8xf32>, vector<8x8xf32> -> vector<8x8xf32>
    %270 = vector.extract_strided_slice %267 {offsets = [0, 8], sizes = [16, 8], strides = [1, 1]} : vector<16x16xf32> to vector<16x8xf32>
    %cst_82 = arith.constant dense<0.000000e+00> : vector<8x8xf32>
    %271 = tpu.matmul %13, %270, %cst_82 {dimension_numbers = #tpu.dot_dimension_numbers<[1], [0], [0], [1], [0, 0, 1, 1], [], []>} : vector<8x16xf32>, vector<16x8xf32>, vector<8x8xf32> -> vector<8x8xf32>
    %272 = arith.addf %269, %271 : vector<8x8xf32>
    %cst_83 = arith.constant 0.000000e+00 : f32
    %273 = vector.broadcast %cst_83 : f32 to vector<8x8xf32>
    %274 = arith.maximumf %253, %273 : vector<8x8xf32>
    %c232 = arith.constant 232 : index
    %c0_84 = arith.constant 0 : index
    %275 = vector.load %arg1[%c232, %c0_84] : memref<352x48xf32, #tpu.memory_space<vmem>>, vector<8x48xf32>
    %276 = vector.extract_strided_slice %275 {offsets = [0, 0], sizes = [8, 8], strides = [1, 1]} : vector<8x48xf32> to vector<8x8xf32>
    %cst_85 = arith.constant dense<0.000000e+00> : vector<8x8xf32>
    %277 = tpu.matmul %274, %276, %cst_85 {dimension_numbers = #tpu.dot_dimension_numbers<[1], [0], [0], [1], [0, 0, 1, 1], [], []>} : vector<8x8xf32>, vector<8x8xf32>, vector<8x8xf32> -> vector<8x8xf32>
    %278 = vector.extract_strided_slice %27 {offsets = [2, 0], sizes = [1, 8], strides = [1, 1]} : vector<3x8xf32> to vector<1x8xf32>
    %279 = vector.broadcast %278 : vector<1x8xf32> to vector<8x8xf32>
    %280 = arith.addf %277, %279 : vector<8x8xf32>
    %281 = arith.addf %259, %272 : vector<8x8xf32>
    %282 = arith.addf %281, %280 : vector<8x8xf32>
    %cst_86 = arith.constant 0.000000e+00 : f32
    %283 = vector.broadcast %cst_86 : f32 to vector<8x8xf32>
    %284 = arith.maximumf %282, %283 : vector<8x8xf32>
    %c272 = arith.constant 272 : index
    %c0_87 = arith.constant 0 : index
    %285 = vector.load %arg1[%c272, %c0_87] : memref<352x48xf32, #tpu.memory_space<vmem>>, vector<8x48xf32>
    %286 = vector.extract_strided_slice %285 {offsets = [0, 0], sizes = [8, 8], strides = [1, 1]} : vector<8x48xf32> to vector<8x8xf32>
    %cst_88 = arith.constant dense<0.000000e+00> : vector<8x8xf32>
    %287 = tpu.matmul %284, %286, %cst_88 {dimension_numbers = #tpu.dot_dimension_numbers<[1], [0], [0], [1], [0, 0, 1, 1], [], []>} : vector<8x8xf32>, vector<8x8xf32>, vector<8x8xf32> -> vector<8x8xf32>
    %288 = arith.addf %196, %287 : vector<8x8xf32>
    %289 = vector.extract_strided_slice %31 {offsets = [2, 0], sizes = [1, 8], strides = [1, 1]} : vector<3x8xf32> to vector<1x8xf32>
    %290 = vector.broadcast %289 : vector<1x8xf32> to vector<8x8xf32>
    %291 = arith.addf %288, %290 : vector<8x8xf32>
    %c304 = arith.constant 304 : index
    %c0_89 = arith.constant 0 : index
    %292 = vector.load %arg1[%c304, %c0_89] : memref<352x48xf32, #tpu.memory_space<vmem>>, vector<8x48xf32>
    %293 = vector.extract_strided_slice %292 {offsets = [0, 0], sizes = [8, 8], strides = [1, 1]} : vector<8x48xf32> to vector<8x8xf32>
    %cst_90 = arith.constant dense<0.000000e+00> : vector<8x8xf32>
    %294 = tpu.matmul %291, %293, %cst_90 {dimension_numbers = #tpu.dot_dimension_numbers<[1], [0], [0], [1], [0, 0, 1, 1], [], []>} : vector<8x8xf32>, vector<8x8xf32>, vector<8x8xf32> -> vector<8x8xf32>
    %295 = vector.extract_strided_slice %33 {offsets = [2, 0], sizes = [1, 8], strides = [1, 1]} : vector<3x8xf32> to vector<1x8xf32>
    %296 = vector.broadcast %295 : vector<1x8xf32> to vector<8x8xf32>
    %297 = arith.addf %294, %296 : vector<8x8xf32>
    %cst_91 = arith.constant 0.000000e+00 : f32
    %298 = vector.broadcast %cst_91 : f32 to vector<8x8xf32>
    %299 = arith.maximumf %297, %298 : vector<8x8xf32>
    %c336 = arith.constant 336 : index
    %c0_92 = arith.constant 0 : index
    %300 = vector.load %arg1[%c336, %c0_92] : memref<352x48xf32, #tpu.memory_space<vmem>>, vector<8x48xf32>
    %301 = vector.extract_strided_slice %300 {offsets = [0, 0], sizes = [8, 8], strides = [1, 1]} : vector<8x48xf32> to vector<8x8xf32>
    %cst_93 = arith.constant dense<0.000000e+00> : vector<8x8xf32>
    %302 = tpu.matmul %299, %301, %cst_93 {dimension_numbers = #tpu.dot_dimension_numbers<[1], [0], [0], [1], [0, 0, 1, 1], [], []>} : vector<8x8xf32>, vector<8x8xf32>, vector<8x8xf32> -> vector<8x8xf32>
    %303 = vector.extract_strided_slice %35 {offsets = [2, 0], sizes = [1, 8], strides = [1, 1]} : vector<3x8xf32> to vector<1x8xf32>
    %304 = vector.broadcast %303 : vector<1x8xf32> to vector<8x8xf32>
    %305 = arith.addf %302, %304 : vector<8x8xf32>
    %306 = arith.addf %211, %305 : vector<8x8xf32>
    %cst_94 = arith.constant 2.000000e+00 : f32
    %307 = vector.broadcast %cst_94 : f32 to vector<8x8xf32>
    %308 = arith.mulf %307, %15 : vector<8x8xf32>
    %309 = arith.subf %305, %308 : vector<8x8xf32>
    %310 = arith.mulf %305, %309 : vector<8x8xf32>
    %cst_95 = arith.constant dense<0.000000e+00> : vector<8xf32>
    %311 = vector.multi_reduction <add>, %310, %cst_95 [1] : vector<8x8xf32> to vector<8xf32>
    %312 = vector.shape_cast %311 : vector<8xf32> to vector<8x1xf32>
    %cst_96 = arith.constant dense<0.000000e+00> : vector<1xf32>
    %313 = vector.multi_reduction <add>, %312, %cst_96 [0] : vector<8x1xf32> to vector<1xf32>
    %314 = vector.shape_cast %313 : vector<1xf32> to vector<1x1xf32>
    %315 = arith.addf %314, %47 : vector<1x1xf32>
    %cst_97 = arith.constant 6.250000e-02 : f32
    %316 = vector.broadcast %cst_97 : f32 to vector<1x1xf32>
    %317 = arith.mulf %315, %316 : vector<1x1xf32>
    %c2_i32 = arith.constant 2 : i32
    %318 = vector.broadcast %c2_i32 : i32 to vector<1x8xi32>
    %319 = arith.cmpi eq, %52, %318 : vector<1x8xi32>
    %320 = arith.extui %319 : vector<1x8xi1> to vector<1x8xi32>
    %321 = arith.sitofp %320 : vector<1x8xi32> to vector<1x8xf32>
    %322 = vector.broadcast %317 : vector<1x1xf32> to vector<1x8xf32>
    %323 = arith.mulf %322, %321 : vector<1x8xf32>
    %324 = arith.addf %229, %323 : vector<1x8xf32>
    %cst_98 = arith.constant 1.000000e+00 : f32
    %325 = vector.broadcast %cst_98 : f32 to vector<1x1xf32>
    %326 = arith.mulf %317, %325 : vector<1x1xf32>
    %327 = arith.addf %232, %326 : vector<1x1xf32>
    %c3_i32 = arith.constant 3 : i32
    %328 = vector.broadcast %c3_i32 : i32 to vector<1x8xi32>
    %329 = arith.cmpi eq, %52, %328 : vector<1x8xi32>
    %330 = arith.extui %329 : vector<1x8xi1> to vector<1x8xi32>
    %331 = arith.sitofp %330 : vector<1x8xi32> to vector<1x8xf32>
    %332 = vector.broadcast %327 : vector<1x1xf32> to vector<1x8xf32>
    %333 = arith.mulf %332, %331 : vector<1x8xf32>
    %334 = arith.addf %324, %333 : vector<1x8xf32>
    %c0_99 = arith.constant 0 : index
    %c0_100 = arith.constant 0 : index
    %335 = vector.load %arg2[%c0_99, %c0_100] : memref<9x8xf32, #tpu.memory_space<vmem>>, vector<8x8xf32>
    tpu.vector_store %arg2[%c0_99, %c0_100], %306 {strides = array<i32>} : memref<9x8xf32, #tpu.memory_space<vmem>>, vector<8x8xf32>,
    %c8_101 = arith.constant 8 : index
    %c0_102 = arith.constant 0 : index
    %336 = vector.load %arg2[%c8_101, %c0_102] : memref<9x8xf32, #tpu.memory_space<vmem>>, vector<1x8xf32>
    tpu.vector_store %arg2[%c8_101, %c0_102], %334 {strides = array<i32>} : memref<9x8xf32, #tpu.memory_space<vmem>>, vector<1x8xf32>,
    return
  }
  func.func @transform_0(%arg0: i32) -> (i32, i32) {
    %c0_i32 = arith.constant 0 : i32
    %c0_i32_0 = arith.constant 0 : i32
    %c0_i32_1 = arith.constant 0 : i32
    return %c0_i32, %c0_i32_0 : i32, i32
  }
  func.func @transform_1(%arg0: i32) -> (i32, i32) {
    %c0_i32 = arith.constant 0 : i32
    %c0_i32_0 = arith.constant 0 : i32
    %c0_i32_1 = arith.constant 0 : i32
    return %c0_i32, %c0_i32_0 : i32, i32
  }
}

</mosaic_0001>

<llo_original>
// kernel: dss_forward.1
$region0: #{dss_forward.1}
  #allocation0 [shape = 'u32[]', space=smem, size = 0x4, offset = 0x4, fixed_abs, tag = 'smem constant byte address 0x4 - core index']
  #allocation1 [shape = 'u32[144,128]{1,0:T(1,128)}', space=vmem, size = 0x12000, scoped, tag = 'internal scratch']
  %s0 = inlined_call_operand.vmem [shape: f32[352,48], index: 0, kind: input, shape index: {}]
  %s1 = inlined_call_operand.vmem [shape: f32[9,8], index: 1, kind: output, shape index: {}]
  %s2 = sld [smem:[#allocation0]]
  $region14: #{dss_forward.1} parent=0
    _
  %s4 = ssub.s32 1, %s2
  %s5 = scalar_select 0, %s4, %s2
  // Predicated region
  $region2: #{dss_forward.1} parent=0 // pred_check
    _
  $region3: #{dss_forward.1} parent=0 // pred_check_branch
    %7 = sbr.rel (0) target = $region5
  $region4: #{dss_forward.1} parent=0 // pred_region
    _
  $region5: #{dss_forward.1} parent=0 // pred_fallthru
    _
  %v8 = vld [vmem:[%s0] sm:$0xff]
  %v9 = vld [vmem:[%s0 + $0x8] sm:$0xff]
  %v10 = vld [vmem:[%s0 + $0x10] sm:$0xff]
  %v11 = vld [vmem:[%s0 + $0x18] sm:$0xff]
  %v12 = vld [vmem:[%s0 + $0x20] sm:$0xff]
  %v13 = vld [vmem:[%s0 + $0x28] sm:$0xff]
  %v14 = vld [vmem:[%s0 + $0x30] sm:$0xff]
  %v15 = vld [vmem:[%s0 + $0x38] sm:$0xff]
  %v16 = vld [vmem:[%s0 + $0x40] sm:$0xff]
  %v17 = vld [vmem:[%s0 + $0x48] sm:$0xff]
  %v18 = vld [vmem:[%s0 + $0x50] sm:$0xff]
  %v19 = vld [vmem:[%s0 + $0x58] sm:$0x1]
  %v20 = vld [vmem:[%s0 + $0x88] sm:$0x7]
  %v21 = vld [vmem:[%s0 + $0xc0] sm:$0x7]
  %v22 = vld [vmem:[%s0 + $0xc8] sm:$0x7]
  %v23 = vld [vmem:[%s0 + $0xd0] sm:$0x7]
  %v24 = vld [vmem:[%s0 + $0xf0] sm:$0x7]
  %v25 = vld [vmem:[%s0 + $0xf8] sm:$0x7]
  %v26 = vld [vmem:[%s0 + $0x118] sm:$0x7]
  %v27 = vld [vmem:[%s0 + $0x138] sm:$0x7]
  %v28 = vld [vmem:[%s0 + $0x158] sm:$0x7]
  %v29 = vld [vmem:[%s0 + $0x78] sm:$0xff]
  %vm30 = vcmask 64512
  %v32 = vsel %vm30, %v9, 0
  %v35 = vsel %vm30, %v10, 0
  %37 = vmatprep.subr.mxu0 0.0
  %38 = vmatpush1.msra.mxu0 %v29
  %39 = vmatprep.subr.mxu0 0.0
  %40 = vmatpush1.msra.mxu0 0.0
  %41 = vmatprep.subr.mxu0 0.0
  %42 = vmatpush1.msra.mxu0 0.0
  %43 = vmatprep.subr.mxu0 0.0
  %44 = vmatpush1.msra.mxu0 0.0
  %45 = vmatprep.subr.mxu0 0.0
  %46 = vmatpush1.msra.mxu0 0.0
  %47 = vmatprep.subr.mxu0 0.0
  %48 = vmatpush1.msra.mxu0 0.0
  %49 = vmatprep.subr.mxu0 0.0
  %50 = vmatpush1.msra.mxu0 0.0
  %51 = vmatprep.subr.mxu0 0.0
  %52 = vmatpush1.msra.mxu0 0.0
  %53 = vmatprep.subr.mxu0 0.0
  %54 = vmatpush1.msra.mxu0 0.0
  %55 = vmatprep.subr.mxu0 0.0
  %56 = vmatpush1.msra.mxu0 0.0
  %57 = vmatprep.subr.mxu0 0.0
  %58 = vmatpush1.msra.mxu0 0.0
  %59 = vmatprep.subr.mxu0 0.0
  %60 = vmatpush1.msra.mxu0 0.0
  %61 = vmatprep.subr.mxu0 0.0
  %62 = vmatpush1.msra.mxu0 0.0
  %63 = vmatprep.subr.mxu0 0.0
  %64 = vmatpush1.msra.mxu0 0.0
  %65 = vmatprep.subr.mxu0 0.0
  %66 = vmatpush1.msra.mxu0 0.0
  %67 = vmatprep.subr.mxu0 0.0
  %68 = vmatpush1.msra.mxu0 0.0
  %69 = vmatprep.subr.mxu0 0.0
  %70 = vmatpush1.msra.mxu0 0.0
  %71 = vmatprep.subr.mxu0 0.0
  %72 = vmatpush1.msra.mxu0 0.0
  %73 = vmatprep.subr.mxu0 0.0
  %74 = vmatpush1.msra.mxu0 0.0
  %75 = vmatprep.subr.mxu0 0.0
  %76 = vmatpush1.msra.mxu0 0.0
  %77 = vmatprep.subr.mxu0 0.0
  %78 = vmatpush1.msra.mxu0 0.0
  %79 = vmatprep.subr.mxu0 0.0
  %80 = vmatpush1.msra.mxu0 0.0
  %81 = vmatprep.subr.mxu0 0.0
  %82 = vmatpush1.msra.mxu0 0.0
  %83 = vmatprep.subr.mxu0 0.0
  %84 = vmatpush1.msra.mxu0 0.0
  %85 = vmatprep.subr.mxu0 0.0
  %86 = vmatpush1.msra.mxu0 0.0
  %87 = vmatprep.subr.mxu0 0.0
  %88 = vmatpush1.msra.mxu0 0.0
  %89 = vmatprep.subr.mxu0 0.0
  %90 = vmatpush1.msra.mxu0 0.0
  %91 = vmatprep.subr.mxu0 0.0
  %92 = vmatpush1.msra.mxu0 0.0
  %93 = vmatprep.subr.mxu0 0.0
  %94 = vmatpush1.msra.mxu0 0.0
  %95 = vmatprep.subr.mxu0 0.0
  %96 = vmatpush1.msra.mxu0 0.0
  %97 = vmatprep.subr.mxu0 0.0
  %98 = vmatpush1.msra.mxu0 0.0
  %99 = vmatprep.subr.mxu0 0.0
  %100 = vmatpush1.msra.mxu0 0.0
  %101 = vmatprep.mubr.f32.mxu0 0.0
  %102 = vmatmul.mubr.f32.gmra.mrb[0].mxu0 %v32
  %v103 = vpop.f32.mrb[0].mxu0
  %v104 = vadd.f32 0.0, %v103
  %v105 = vpop.f32.mrb[0].mxu0
  %106 = vmatprep.mubr.f32.mxu0 0.0
  %107 = vmatmul.mubr.f32.gmra.mrb[0].mxu0 %v35
  %v108 = vpop.f32.mrb[0].mxu0
  %v109 = vadd.f32 0.0, %v108
  %v110 = vpop.f32.mrb[0].mxu0
  %111 = vdwg.mxu0
  %v112 = vld [vmem:[%s0 + $0x80] sm:$0xff]
  %v114 = vsel %vm30, %v8, 0
  %116 = vmatprep.subr.mxu0 0.0
  %117 = vmatpush1.msra.mxu0 %v112
  %118 = vmatprep.subr.mxu0 0.0
  %119 = vmatpush1.msra.mxu0 0.0
  %120 = vmatprep.subr.mxu0 0.0
  %121 = vmatpush1.msra.mxu0 0.0
  %122 = vmatprep.subr.mxu0 0.0
  %123 = vmatpush1.msra.mxu0 0.0
  %124 = vmatprep.subr.mxu0 0.0
  %125 = vmatpush1.msra.mxu0 0.0
  %126 = vmatprep.subr.mxu0 0.0
  %127 = vmatpush1.msra.mxu0 0.0
  %128 = vmatprep.subr.mxu0 0.0
  %129 = vmatpush1.msra.mxu0 0.0
  %130 = vmatprep.subr.mxu0 0.0
  %131 = vmatpush1.msra.mxu0 0.0
  %132 = vmatprep.subr.mxu0 0.0
  %133 = vmatpush1.msra.mxu0 0.0
  %134 = vmatprep.subr.mxu0 0.0
  %135 = vmatpush1.msra.mxu0 0.0
  %136 = vmatprep.subr.mxu0 0.0
  %137 = vmatpush1.msra.mxu0 0.0
  %138 = vmatprep.subr.mxu0 0.0
  %139 = vmatpush1.msra.mxu0 0.0
  %140 = vmatprep.subr.mxu0 0.0
  %141 = vmatpush1.msra.mxu0 0.0
  %142 = vmatprep.subr.mxu0 0.0
  %143 = vmatpush1.msra.mxu0 0.0
  %144 = vmatprep.subr.mxu0 0.0
  %145 = vmatpush1.msra.mxu0 0.0
  %146 = vmatprep.subr.mxu0 0.0
  %147 = vmatpush1.msra.mxu0 0.0
  %148 = vmatprep.subr.mxu0 0.0
  %149 = vmatpush1.msra.mxu0 0.0
  %150 = vmatprep.subr.mxu0 0.0
  %151 = vmatpush1.msra.mxu0 0.0
  %152 = vmatprep.subr.mxu0 0.0
  %153 = vmatpush1.msra.mxu0 0.0
  %154 = vmatprep.subr.mxu0 0.0
  %155 = vmatpush1.msra.mxu0 0.0
  %156 = vmatprep.subr.mxu0 0.0
  %157 = vmatpush1.msra.mxu0 0.0
  %158 = vmatprep.subr.mxu0 0.0
  %159 = vmatpush1.msra.mxu0 0.0
  %160 = vmatprep.subr.mxu0 0.0
  %161 = vmatpush1.msra.mxu0 0.0
  %162 = vmatprep.subr.mxu0 0.0
  %163 = vmatpush1.msra.mxu0 0.0
  %164 = vmatprep.subr.mxu0 0.0
  %165 = vmatpush1.msra.mxu0 0.0
  %166 = vmatprep.subr.mxu0 0.0
  %167 = vmatpush1.msra.mxu0 0.0
  %168 = vmatprep.subr.mxu0 0.0
  %169 = vmatpush1.msra.mxu0 0.0
  %170 = vmatprep.subr.mxu0 0.0
  %171 = vmatpush1.msra.mxu0 0.0
  %172 = vmatprep.subr.mxu0 0.0
  %173 = vmatpush1.msra.mxu0 0.0
  %174 = vmatprep.subr.mxu0 0.0
  %175 = vmatpush1.msra.mxu0 0.0
  %176 = vmatprep.subr.mxu0 0.0
  %177 = vmatpush1.msra.mxu0 0.0
  %178 = vmatprep.subr.mxu0 0.0
  %179 = vmatpush1.msra.mxu0 0.0
  %180 = vmatprep.mubr.f32.mxu0 0.0
  %181 = vmatmul.mubr.f32.gmra.mrb[0].mxu0 %v114
  %v182 = vpop.f32.mrb[0].mxu0
  %v183 = vadd.f32 0.0, %v182
  %v184 = vpop.f32.mrb[0].mxu0
  %185 = vdwg.mxu0
  %v186 = vmul.f32 %v18, %v18
  %v187 = vsel %vm30, %v186, 0.0
  %188 = vadd.xlane.f32.xlu0 %v187
  %v189 = vpop.xlane.xlu0 %188
  %v190 = vrot.slane %v189, 4
  %v191 = vadd.f32 %v189, %v190
  %v192 = vrot.slane %v191, 2
  %v193 = vadd.f32 %v191, %v192
  %v194 = vrot.slane %v193, 1
  %v195 = vadd.f32 %v193, %v194
  %v196 = vmul.f32 %v195, 0.25
  %v197 = vlaneseq
  %v198 = vshrl.u32 %v197, 7
  %v199 = vsub.s32 0, %v198
  %v200 = vrot.slane %v19, %v199
  %v201 = vadd.f32 %v200, 0.0
  %v202 = vlaneseq
  %v203 = vand.u32 %v202, 127
  %v204 = vlaneseq
  %v205 = vshrl.u32 %v204, 7
  %v206 = vsub.s32 0, %v205
  %v207 = vrot.slane %v20, %v206
  %v208 = vadd.f32 %v104, %v207
  %v209 = vadd.f32 %v109, %v207
  %211 = vset.pattern.permute.xlu0 0
  %212 = vperm.xlu0 %211, %v11
  %v213 = vpop.permute.xlu0 %212
  %v215 = vlaneseq
  %v216 = vshrl.u32 %v215, 7
  %v217 = vsub.s32 0, %v216
  %v218 = vrot.slane %v22, %v217
  %v219 = vmul.f32 %v213, %v218
  %v220 = vlaneseq
  %v221 = vshrl.u32 %v220, 7
  %v222 = vsub.s32 0, %v221
  %v223 = vrot.slane %v23, %v222
  %v224 = vadd.f32 %v219, %v223
  %v225 = vlaneseq
  %v226 = vshrl.u32 %v225, 7
  %v227 = vsub.s32 0, %v226
  %v228 = vrot.slane %v25, %v227
  %v229 = vadd.f32 %v183, %v228
  %v230 = vmax.f32 %v208, 0.0
  %v231 = vmax.f32 %v209, 0.0
  %v232 = vld [vmem:[%s0 + $0x90] sm:$0xff]
  %v233 = vld [vmem:[%s0 + $0x98] sm:$0xff]
  %v234 = vlaneseq
  %v235 = vshrl.u32 %v234, 7
  %v236 = vsub.s32 0, %v235
  %v237 = vrot.slane %v21, %v236
  %vm238 = vcmask 130048
  %v240 = vsel %vm238, %v230, 0
  %v243 = vsel %vm238, %v231, 0
  %245 = vmatprep.subr.mxu0 0.0
  %246 = vmatpush1.msra.mxu0 %v232
  %247 = vmatprep.subr.mxu0 0.0
  %248 = vmatpush1.msra.mxu0 %v233
  %249 = vmatprep.subr.mxu0 0.0
  %250 = vmatpush1.msra.mxu0 0.0
  %251 = vmatprep.subr.mxu0 0.0
  %252 = vmatpush1.msra.mxu0 0.0
  %253 = vmatprep.subr.mxu0 0.0
  %254 = vmatpush1.msra.mxu0 0.0
  %255 = vmatprep.subr.mxu0 0.0
  %256 = vmatpush1.msra.mxu0 0.0
  %257 = vmatprep.subr.mxu0 0.0
  %258 = vmatpush1.msra.mxu0 0.0
  %259 = vmatprep.subr.mxu0 0.0
  %260 = vmatpush1.msra.mxu0 0.0
  %261 = vmatprep.subr.mxu0 0.0
  %262 = vmatpush1.msra.mxu0 0.0
  %263 = vmatprep.subr.mxu0 0.0
  %264 = vmatpush1.msra.mxu0 0.0
  %265 = vmatprep.subr.mxu0 0.0
  %266 = vmatpush1.msra.mxu0 0.0
  %267 = vmatprep.subr.mxu0 0.0
  %268 = vmatpush1.msra.mxu0 0.0
  %269 = vmatprep.subr.mxu0 0.0
  %270 = vmatpush1.msra.mxu0 0.0
  %271 = vmatprep.subr.mxu0 0.0
  %272 = vmatpush1.msra.mxu0 0.0
  %273 = vmatprep.subr.mxu0 0.0
  %274 = vmatpush1.msra.mxu0 0.0
  %275 = vmatprep.subr.mxu0 0.0
  %276 = vmatpush1.msra.mxu0 0.0
  %277 = vmatprep.subr.mxu0 0.0
  %278 = vmatpush1.msra.mxu0 0.0
  %279 = vmatprep.subr.mxu0 0.0
  %280 = vmatpush1.msra.mxu0 0.0
  %281 = vmatprep.subr.mxu0 0.0
  %282 = vmatpush1.msra.mxu0 0.0
  %283 = vmatprep.subr.mxu0 0.0
  %284 = vmatpush1.msra.mxu0 0.0
  %285 = vmatprep.subr.mxu0 0.0
  %286 = vmatpush1.msra.mxu0 0.0
  %287 = vmatprep.subr.mxu0 0.0
  %288 = vmatpush1.msra.mxu0 0.0
  %289 = vmatprep.subr.mxu0 0.0
  %290 = vmatpush1.msra.mxu0 0.0
  %291 = vmatprep.subr.mxu0 0.0
  %292 = vmatpush1.msra.mxu0 0.0
  %293 = vmatprep.subr.mxu0 0.0
  %294 = vmatpush1.msra.mxu0 0.0
  %295 = vmatprep.subr.mxu0 0.0
  %296 = vmatpush1.msra.mxu0 0.0
  %297 = vmatprep.subr.mxu0 0.0
  %298 = vmatpush1.msra.mxu0 0.0
  %299 = vmatprep.subr.mxu0 0.0
  %300 = vmatpush1.msra.mxu0 0.0
  %301 = vmatprep.subr.mxu0 0.0
  %302 = vmatpush1.msra.mxu0 0.0
  %303 = vmatprep.subr.mxu0 0.0
  %304 = vmatpush1.msra.mxu0 0.0
  %305 = vmatprep.subr.mxu0 0.0
  %306 = vmatpush1.msra.mxu0 0.0
  %307 = vmatprep.subr.mxu0 0.0
  %308 = vmatpush1.msra.mxu0 0.0
  %309 = vmatprep.mubr.f32.mxu0 0.0
  %310 = vmatmul.mubr.f32.gmra.mrb[0].mxu0 %v240
  %v311 = vpop.f32.mrb[0].mxu0
  %v312 = vadd.f32 %v237, %v311
  %v313 = vpop.f32.mrb[0].mxu0
  %314 = vmatprep.mubr.f32.mxu0 0.0
  %315 = vmatmul.mubr.f32.gmra.mrb[0].mxu0 %v243
  %v316 = vpop.f32.mrb[0].mxu0
  %v317 = vadd.f32 %v237, %v316
  %v318 = vpop.f32.mrb[0].mxu0
  %319 = vdwg.mxu0
  %322 = vrot.lane.b32.xlu0 %v312, 120
  %v323 = vpop.permute.xlu0 %322
  %324 = vrot.lane.b32.xlu0 %v317, 120
  %v325 = vpop.permute.xlu0 %324
  %v329 = vsel %vm238, %v17, 0
  %331 = vmatprep.subr.mxu0 0.0
  %332 = vmatpush1.msra.mxu0 %v323
  %333 = vmatprep.subr.mxu0 0.0
  %334 = vmatpush1.msra.mxu0 %v325
  %335 = vmatprep.subr.mxu0 0.0
  %336 = vmatpush1.msra.mxu0 0.0
  %337 = vmatprep.subr.mxu0 0.0
  %338 = vmatpush1.msra.mxu0 0.0
  %339 = vmatprep.subr.mxu0 0.0
  %340 = vmatpush1.msra.mxu0 0.0
  %341 = vmatprep.subr.mxu0 0.0
  %342 = vmatpush1.msra.mxu0 0.0
  %343 = vmatprep.subr.mxu0 0.0
  %344 = vmatpush1.msra.mxu0 0.0
  %345 = vmatprep.subr.mxu0 0.0
  %346 = vmatpush1.msra.mxu0 0.0
  %347 = vmatprep.subr.mxu0 0.0
  %348 = vmatpush1.msra.mxu0 0.0
  %349 = vmatprep.subr.mxu0 0.0
  %350 = vmatpush1.msra.mxu0 0.0
  %351 = vmatprep.subr.mxu0 0.0
  %352 = vmatpush1.msra.mxu0 0.0
  %353 = vmatprep.subr.mxu0 0.0
  %354 = vmatpush1.msra.mxu0 0.0
  %355 = vmatprep.subr.mxu0 0.0
  %356 = vmatpush1.msra.mxu0 0.0
  %357 = vmatprep.subr.mxu0 0.0
  %358 = vmatpush1.msra.mxu0 0.0
  %359 = vmatprep.subr.mxu0 0.0
  %360 = vmatpush1.msra.mxu0 0.0
  %361 = vmatprep.subr.mxu0 0.0
  %362 = vmatpush1.msra.mxu0 0.0
  %363 = vmatprep.subr.mxu0 0.0
  %364 = vmatpush1.msra.mxu0 0.0
  %365 = vmatprep.subr.mxu0 0.0
  %366 = vmatpush1.msra.mxu0 0.0
  %367 = vmatprep.subr.mxu0 0.0
  %368 = vmatpush1.msra.mxu0 0.0
  %369 = vmatprep.subr.mxu0 0.0
  %370 = vmatpush1.msra.mxu0 0.0
  %371 = vmatprep.subr.mxu0 0.0
  %372 = vmatpush1.msra.mxu0 0.0
  %373 = vmatprep.subr.mxu0 0.0
  %374 = vmatpush1.msra.mxu0 0.0
  %375 = vmatprep.subr.mxu0 0.0
  %376 = vmatpush1.msra.mxu0 0.0
  %377 = vmatprep.subr.mxu0 0.0
  %378 = vmatpush1.msra.mxu0 0.0
  %379 = vmatprep.subr.mxu0 0.0
  %380 = vmatpush1.msra.mxu0 0.0
  %381 = vmatprep.subr.mxu0 0.0
  %382 = vmatpush1.msra.mxu0 0.0
  %383 = vmatprep.subr.mxu0 0.0
  %384 = vmatpush1.msra.mxu0 0.0
  %385 = vmatprep.subr.mxu0 0.0
  %386 = vmatpush1.msra.mxu0 0.0
  %387 = vmatprep.subr.mxu0 0.0
  %388 = vmatpush1.msra.mxu0 0.0
  %389 = vmatprep.subr.mxu0 0.0
  %390 = vmatpush1.msra.mxu0 0.0
  %391 = vmatprep.subr.mxu0 0.0
  %392 = vmatpush1.msra.mxu0 0.0
  %393 = vmatprep.subr.mxu0 0.0
  %394 = vmatpush1.msra.mxu0 0.0
  %395 = vmatprep.mubr.f32.mxu0 0.0
  %396 = vmatmul.mubr.f32.gmra.mrb[0].mxu0 %v329
  %v397 = vpop.f32.mrb[0].mxu0
  %v398 = vadd.f32 0.0, %v397
  %v399 = vpop.f32.mrb[0].mxu0
  %400 = vdwg.mxu0
  %v402 = vsel %vm238, %v16, 0
  %404 = vmatprep.subr.mxu0 0.0
  %405 = vmatpush1.msra.mxu0 %v312
  %406 = vmatprep.subr.mxu0 0.0
  %407 = vmatpush1.msra.mxu0 %v317
  %408 = vmatprep.subr.mxu0 0.0
  %409 = vmatpush1.msra.mxu0 0.0
  %410 = vmatprep.subr.mxu0 0.0
  %411 = vmatpush1.msra.mxu0 0.0
  %412 = vmatprep.subr.mxu0 0.0
  %413 = vmatpush1.msra.mxu0 0.0
  %414 = vmatprep.subr.mxu0 0.0
  %415 = vmatpush1.msra.mxu0 0.0
  %416 = vmatprep.subr.mxu0 0.0
  %417 = vmatpush1.msra.mxu0 0.0
  %418 = vmatprep.subr.mxu0 0.0
  %419 = vmatpush1.msra.mxu0 0.0
  %420 = vmatprep.subr.mxu0 0.0
  %421 = vmatpush1.msra.mxu0 0.0
  %422 = vmatprep.subr.mxu0 0.0
  %423 = vmatpush1.msra.mxu0 0.0
  %424 = vmatprep.subr.mxu0 0.0
  %425 = vmatpush1.msra.mxu0 0.0
  %426 = vmatprep.subr.mxu0 0.0
  %427 = vmatpush1.msra.mxu0 0.0
  %428 = vmatprep.subr.mxu0 0.0
  %429 = vmatpush1.msra.mxu0 0.0
  %430 = vmatprep.subr.mxu0 0.0
  %431 = vmatpush1.msra.mxu0 0.0
  %432 = vmatprep.subr.mxu0 0.0
  %433 = vmatpush1.msra.mxu0 0.0
  %434 = vmatprep.subr.mxu0 0.0
  %435 = vmatpush1.msra.mxu0 0.0
  %436 = vmatprep.subr.mxu0 0.0
  %437 = vmatpush1.msra.mxu0 0.0
  %438 = vmatprep.subr.mxu0 0.0
  %439 = vmatpush1.msra.mxu0 0.0
  %440 = vmatprep.subr.mxu0 0.0
  %441 = vmatpush1.msra.mxu0 0.0
  %442 = vmatprep.subr.mxu0 0.0
  %443 = vmatpush1.msra.mxu0 0.0
  %444 = vmatprep.subr.mxu0 0.0
  %445 = vmatpush1.msra.mxu0 0.0
  %446 = vmatprep.subr.mxu0 0.0
  %447 = vmatpush1.msra.mxu0 0.0
  %448 = vmatprep.subr.mxu0 0.0
  %449 = vmatpush1.msra.mxu0 0.0
  %450 = vmatprep.subr.mxu0 0.0
  %451 = vmatpush1.msra.mxu0 0.0
  %452 = vmatprep.subr.mxu0 0.0
  %453 = vmatpush1.msra.mxu0 0.0
  %454 = vmatprep.subr.mxu0 0.0
  %455 = vmatpush1.msra.mxu0 0.0
  %456 = vmatprep.subr.mxu0 0.0
  %457 = vmatpush1.msra.mxu0 0.0
  %458 = vmatprep.subr.mxu0 0.0
  %459 = vmatpush1.msra.mxu0 0.0
  %460 = vmatprep.subr.mxu0 0.0
  %461 = vmatpush1.msra.mxu0 0.0
  %462 = vmatprep.subr.mxu0 0.0
  %463 = vmatpush1.msra.mxu0 0.0
  %464 = vmatprep.subr.mxu0 0.0
  %465 = vmatpush1.msra.mxu0 0.0
  %466 = vmatprep.subr.mxu0 0.0
  %467 = vmatpush1.msra.mxu0 0.0
  %468 = vmatprep.mubr.f32.mxu0 0.0
  %469 = vmatmul.mubr.f32.gmra.mrb[0].mxu0 %v402
  %v470 = vpop.f32.mrb[0].mxu0
  %v471 = vadd.f32 %v398, %v470
  %v472 = vpop.f32.mrb[0].mxu0
  %473 = vdwg.mxu0
  %v474 = vmax.f32 %v224, 0.0
  %v475 = vld [vmem:[%s0 + $0xd8] sm:$0xff]
  %v476 = vlaneseq
  %v477 = vshrl.u32 %v476, 7
  %v478 = vsub.s32 0, %v477
  %v479 = vrot.slane %v24, %v478
  %v481 = vsel %vm30, %v474, 0
  %483 = vmatprep.subr.mxu0 0.0
  %484 = vmatpush1.msra.mxu0 %v475
  %485 = vmatprep.subr.mxu0 0.0
  %486 = vmatpush1.msra.mxu0 0.0
  %487 = vmatprep.subr.mxu0 0.0
  %488 = vmatpush1.msra.mxu0 0.0
  %489 = vmatprep.subr.mxu0 0.0
  %490 = vmatpush1.msra.mxu0 0.0
  %491 = vmatprep.subr.mxu0 0.0
  %492 = vmatpush1.msra.mxu0 0.0
  %493 = vmatprep.subr.mxu0 0.0
  %494 = vmatpush1.msra.mxu0 0.0
  %495 = vmatprep.subr.mxu0 0.0
  %496 = vmatpush1.msra.mxu0 0.0
  %497 = vmatprep.subr.mxu0 0.0
  %498 = vmatpush1.msra.mxu0 0.0
  %499 = vmatprep.subr.mxu0 0.0
  %500 = vmatpush1.msra.mxu0 0.0
  %501 = vmatprep.subr.mxu0 0.0
  %502 = vmatpush1.msra.mxu0 0.0
  %503 = vmatprep.subr.mxu0 0.0
  %504 = vmatpush1.msra.mxu0 0.0
  %505 = vmatprep.subr.mxu0 0.0
  %506 = vmatpush1.msra.mxu0 0.0
  %507 = vmatprep.subr.mxu0 0.0
  %508 = vmatpush1.msra.mxu0 0.0
  %509 = vmatprep.subr.mxu0 0.0
  %510 = vmatpush1.msra.mxu0 0.0
  %511 = vmatprep.subr.mxu0 0.0
  %512 = vmatpush1.msra.mxu0 0.0
  %513 = vmatprep.subr.mxu0 0.0
  %514 = vmatpush1.msra.mxu0 0.0
  %515 = vmatprep.subr.mxu0 0.0
  %516 = vmatpush1.msra.mxu0 0.0
  %517 = vmatprep.subr.mxu0 0.0
  %518 = vmatpush1.msra.mxu0 0.0
  %519 = vmatprep.subr.mxu0 0.0
  %520 = vmatpush1.msra.mxu0 0.0
  %521 = vmatprep.subr.mxu0 0.0
  %522 = vmatpush1.msra.mxu0 0.0
  %523 = vmatprep.subr.mxu0 0.0
  %524 = vmatpush1.msra.mxu0 0.0
  %525 = vmatprep.subr.mxu0 0.0
  %526 = vmatpush1.msra.mxu0 0.0
  %527 = vmatprep.subr.mxu0 0.0
  %528 = vmatpush1.msra.mxu0 0.0
  %529 = vmatprep.subr.mxu0 0.0
  %530 = vmatpush1.msra.mxu0 0.0
  %531 = vmatprep.subr.mxu0 0.0
  %532 = vmatpush1.msra.mxu0 0.0
  %533 = vmatprep.subr.mxu0 0.0
  %534 = vmatpush1.msra.mxu0 0.0
  %535 = vmatprep.subr.mxu0 0.0
  %536 = vmatpush1.msra.mxu0 0.0
  %537 = vmatprep.subr.mxu0 0.0
  %538 = vmatpush1.msra.mxu0 0.0
  %539 = vmatprep.subr.mxu0 0.0
  %540 = vmatpush1.msra.mxu0 0.0
  %541 = vmatprep.subr.mxu0 0.0
  %542 = vmatpush1.msra.mxu0 0.0
  %543 = vmatprep.subr.mxu0 0.0
  %544 = vmatpush1.msra.mxu0 0.0
  %545 = vmatprep.subr.mxu0 0.0
  %546 = vmatpush1.msra.mxu0 0.0
  %547 = vmatprep.mubr.f32.mxu0 0.0
  %548 = vmatmul.mubr.f32.gmra.mrb[0].mxu0 %v481
  %v549 = vpop.f32.mrb[0].mxu0
  %v550 = vadd.f32 %v479, %v549
  %v551 = vpop.f32.mrb[0].mxu0
  %552 = vdwg.mxu0
  %v553 = vadd.f32 %v229, %v471
  %v554 = vadd.f32 %v553, %v550
  %v555 = vmax.f32 %v554, 0.0
  %v556 = vld [vmem:[%s0 + $0x100] sm:$0xff]
  %v557 = vlaneseq
  %v558 = vshrl.u32 %v557, 7
  %v559 = vsub.s32 0, %v558
  %v560 = vrot.slane %v26, %v559
  %v562 = vsel %vm30, %v555, 0
  %564 = vmatprep.subr.mxu0 0.0
  %565 = vmatpush1.msra.mxu0 %v556
  %566 = vmatprep.subr.mxu0 0.0
  %567 = vmatpush1.msra.mxu0 0.0
  %568 = vmatprep.subr.mxu0 0.0
  %569 = vmatpush1.msra.mxu0 0.0
  %570 = vmatprep.subr.mxu0 0.0
  %571 = vmatpush1.msra.mxu0 0.0
  %572 = vmatprep.subr.mxu0 0.0
  %573 = vmatpush1.msra.mxu0 0.0
  %574 = vmatprep.subr.mxu0 0.0
  %575 = vmatpush1.msra.mxu0 0.0
  %576 = vmatprep.subr.mxu0 0.0
  %577 = vmatpush1.msra.mxu0 0.0
  %578 = vmatprep.subr.mxu0 0.0
  %579 = vmatpush1.msra.mxu0 0.0
  %580 = vmatprep.subr.mxu0 0.0
  %581 = vmatpush1.msra.mxu0 0.0
  %582 = vmatprep.subr.mxu0 0.0
  %583 = vmatpush1.msra.mxu0 0.0
  %584 = vmatprep.subr.mxu0 0.0
  %585 = vmatpush1.msra.mxu0 0.0
  %586 = vmatprep.subr.mxu0 0.0
  %587 = vmatpush1.msra.mxu0 0.0
  %588 = vmatprep.subr.mxu0 0.0
  %589 = vmatpush1.msra.mxu0 0.0
  %590 = vmatprep.subr.mxu0 0.0
  %591 = vmatpush1.msra.mxu0 0.0
  %592 = vmatprep.subr.mxu0 0.0
  %593 = vmatpush1.msra.mxu0 0.0
  %594 = vmatprep.subr.mxu0 0.0
  %595 = vmatpush1.msra.mxu0 0.0
  %596 = vmatprep.subr.mxu0 0.0
  %597 = vmatpush1.msra.mxu0 0.0
  %598 = vmatprep.subr.mxu0 0.0
  %599 = vmatpush1.msra.mxu0 0.0
  %600 = vmatprep.subr.mxu0 0.0
  %601 = vmatpush1.msra.mxu0 0.0
  %602 = vmatprep.subr.mxu0 0.0
  %603 = vmatpush1.msra.mxu0 0.0
  %604 = vmatprep.subr.mxu0 0.0
  %605 = vmatpush1.msra.mxu0 0.0
  %606 = vmatprep.subr.mxu0 0.0
  %607 = vmatpush1.msra.mxu0 0.0
  %608 = vmatprep.subr.mxu0 0.0
  %609 = vmatpush1.msra.mxu0 0.0
  %610 = vmatprep.subr.mxu0 0.0
  %611 = vmatpush1.msra.mxu0 0.0
  %612 = vmatprep.subr.mxu0 0.0
  %613 = vmatpush1.msra.mxu0 0.0
  %614 = vmatprep.subr.mxu0 0.0
  %615 = vmatpush1.msra.mxu0 0.0
  %616 = vmatprep.subr.mxu0 0.0
  %617 = vmatpush1.msra.mxu0 0.0
  %618 = vmatprep.subr.mxu0 0.0
  %619 = vmatpush1.msra.mxu0 0.0
  %620 = vmatprep.subr.mxu0 0.0
  %621 = vmatpush1.msra.mxu0 0.0
  %622 = vmatprep.subr.mxu0 0.0
  %623 = vmatpush1.msra.mxu0 0.0
  %624 = vmatprep.subr.mxu0 0.0
  %625 = vmatpush1.msra.mxu0 0.0
  %626 = vmatprep.subr.mxu0 0.0
  %627 = vmatpush1.msra.mxu0 0.0
  %628 = vmatprep.mubr.f32.mxu0 0.0
  %629 = vmatmul.mubr.f32.gmra.mrb[0].mxu0 %v562
  %v630 = vpop.f32.mrb[0].mxu0
  %v631 = vadd.f32 %v560, %v630
  %v632 = vpop.f32.mrb[0].mxu0
  %633 = vdwg.mxu0
  %v634 = vld [vmem:[%s0 + $0x120] sm:$0xff]
  %v635 = vlaneseq
  %v636 = vshrl.u32 %v635, 7
  %v637 = vsub.s32 0, %v636
  %v638 = vrot.slane %v27, %v637
  %v640 = vsel %vm30, %v631, 0
  %642 = vmatprep.subr.mxu0 0.0
  %643 = vmatpush1.msra.mxu0 %v634
  %644 = vmatprep.subr.mxu0 0.0
  %645 = vmatpush1.msra.mxu0 0.0
  %646 = vmatprep.subr.mxu0 0.0
  %647 = vmatpush1.msra.mxu0 0.0
  %648 = vmatprep.subr.mxu0 0.0
  %649 = vmatpush1.msra.mxu0 0.0
  %650 = vmatprep.subr.mxu0 0.0
  %651 = vmatpush1.msra.mxu0 0.0
  %652 = vmatprep.subr.mxu0 0.0
  %653 = vmatpush1.msra.mxu0 0.0
  %654 = vmatprep.subr.mxu0 0.0
  %655 = vmatpush1.msra.mxu0 0.0
  %656 = vmatprep.subr.mxu0 0.0
  %657 = vmatpush1.msra.mxu0 0.0
  %658 = vmatprep.subr.mxu0 0.0
  %659 = vmatpush1.msra.mxu0 0.0
  %660 = vmatprep.subr.mxu0 0.0
  %661 = vmatpush1.msra.mxu0 0.0
  %662 = vmatprep.subr.mxu0 0.0
  %663 = vmatpush1.msra.mxu0 0.0
  %664 = vmatprep.subr.mxu0 0.0
  %665 = vmatpush1.msra.mxu0 0.0
  %666 = vmatprep.subr.mxu0 0.0
  %667 = vmatpush1.msra.mxu0 0.0
  %668 = vmatprep.subr.mxu0 0.0
  %669 = vmatpush1.msra.mxu0 0.0
  %670 = vmatprep.subr.mxu0 0.0
  %671 = vmatpush1.msra.mxu0 0.0
  %672 = vmatprep.subr.mxu0 0.0
  %673 = vmatpush1.msra.mxu0 0.0
  %674 = vmatprep.subr.mxu0 0.0
  %675 = vmatpush1.msra.mxu0 0.0
  %676 = vmatprep.subr.mxu0 0.0
  %677 = vmatpush1.msra.mxu0 0.0
  %678 = vmatprep.subr.mxu0 0.0
  %679 = vmatpush1.msra.mxu0 0.0
  %680 = vmatprep.subr.mxu0 0.0
  %681 = vmatpush1.msra.mxu0 0.0
  %682 = vmatprep.subr.mxu0 0.0
  %683 = vmatpush1.msra.mxu0 0.0
  %684 = vmatprep.subr.mxu0 0.0
  %685 = vmatpush1.msra.mxu0 0.0
  %686 = vmatprep.subr.mxu0 0.0
  %687 = vmatpush1.msra.mxu0 0.0
  %688 = vmatprep.subr.mxu0 0.0
  %689 = vmatpush1.msra.mxu0 0.0
  %690 = vmatprep.subr.mxu0 0.0
  %691 = vmatpush1.msra.mxu0 0.0
  %692 = vmatprep.subr.mxu0 0.0
  %693 = vmatpush1.msra.mxu0 0.0
  %694 = vmatprep.subr.mxu0 0.0
  %695 = vmatpush1.msra.mxu0 0.0
  %696 = vmatprep.subr.mxu0 0.0
  %697 = vmatpush1.msra.mxu0 0.0
  %698 = vmatprep.subr.mxu0 0.0
  %699 = vmatpush1.msra.mxu0 0.0
  %700 = vmatprep.subr.mxu0 0.0
  %701 = vmatpush1.msra.mxu0 0.0
  %702 = vmatprep.subr.mxu0 0.0
  %703 = vmatpush1.msra.mxu0 0.0
  %704 = vmatprep.subr.mxu0 0.0
  %705 = vmatpush1.msra.mxu0 0.0
  %706 = vmatprep.mubr.f32.mxu0 0.0
  %707 = vmatmul.mubr.f32.gmra.mrb[0].mxu0 %v640
  %v708 = vpop.f32.mrb[0].mxu0
  %v709 = vadd.f32 %v638, %v708
  %v710 = vpop.f32.mrb[0].mxu0
  %711 = vdwg.mxu0
  %v712 = vmax.f32 %v709, 0.0
  %v713 = vld [vmem:[%s0 + $0x140] sm:$0xff]
  %v714 = vlaneseq
  %v715 = vshrl.u32 %v714, 7
  %v716 = vsub.s32 0, %v715
  %v717 = vrot.slane %v28, %v716
  %v719 = vsel %vm30, %v712, 0
  %721 = vmatprep.subr.mxu0 0.0
  %722 = vmatpush1.msra.mxu0 %v713
  %723 = vmatprep.subr.mxu0 0.0
  %724 = vmatpush1.msra.mxu0 0.0
  %725 = vmatprep.subr.mxu0 0.0
  %726 = vmatpush1.msra.mxu0 0.0
  %727 = vmatprep.subr.mxu0 0.0
  %728 = vmatpush1.msra.mxu0 0.0
  %729 = vmatprep.subr.mxu0 0.0
  %730 = vmatpush1.msra.mxu0 0.0
  %731 = vmatprep.subr.mxu0 0.0
  %732 = vmatpush1.msra.mxu0 0.0
  %733 = vmatprep.subr.mxu0 0.0
  %734 = vmatpush1.msra.mxu0 0.0
  %735 = vmatprep.subr.mxu0 0.0
  %736 = vmatpush1.msra.mxu0 0.0
  %737 = vmatprep.subr.mxu0 0.0
  %738 = vmatpush1.msra.mxu0 0.0
  %739 = vmatprep.subr.mxu0 0.0
  %740 = vmatpush1.msra.mxu0 0.0
  %741 = vmatprep.subr.mxu0 0.0
  %742 = vmatpush1.msra.mxu0 0.0
  %743 = vmatprep.subr.mxu0 0.0
  %744 = vmatpush1.msra.mxu0 0.0
  %745 = vmatprep.subr.mxu0 0.0
  %746 = vmatpush1.msra.mxu0 0.0
  %747 = vmatprep.subr.mxu0 0.0
  %748 = vmatpush1.msra.mxu0 0.0
  %749 = vmatprep.subr.mxu0 0.0
  %750 = vmatpush1.msra.mxu0 0.0
  %751 = vmatprep.subr.mxu0 0.0
  %752 = vmatpush1.msra.mxu0 0.0
  %753 = vmatprep.subr.mxu0 0.0
  %754 = vmatpush1.msra.mxu0 0.0
  %755 = vmatprep.subr.mxu0 0.0
  %756 = vmatpush1.msra.mxu0 0.0
  %757 = vmatprep.subr.mxu0 0.0
  %758 = vmatpush1.msra.mxu0 0.0
  %759 = vmatprep.subr.mxu0 0.0
  %760 = vmatpush1.msra.mxu0 0.0
  %761 = vmatprep.subr.mxu0 0.0
  %762 = vmatpush1.msra.mxu0 0.0
  %763 = vmatprep.subr.mxu0 0.0
  %764 = vmatpush1.msra.mxu0 0.0
  %765 = vmatprep.subr.mxu0 0.0
  %766 = vmatpush1.msra.mxu0 0.0
  %767 = vmatprep.subr.mxu0 0.0
  %768 = vmatpush1.msra.mxu0 0.0
  %769 = vmatprep.subr.mxu0 0.0
  %770 = vmatpush1.msra.mxu0 0.0
  %771 = vmatprep.subr.mxu0 0.0
  %772 = vmatpush1.msra.mxu0 0.0
  %773 = vmatprep.subr.mxu0 0.0
  %774 = vmatpush1.msra.mxu0 0.0
  %775 = vmatprep.subr.mxu0 0.0
  %776 = vmatpush1.msra.mxu0 0.0
  %777 = vmatprep.subr.mxu0 0.0
  %778 = vmatpush1.msra.mxu0 0.0
  %779 = vmatprep.subr.mxu0 0.0
  %780 = vmatpush1.msra.mxu0 0.0
  %781 = vmatprep.subr.mxu0 0.0
  %782 = vmatpush1.msra.mxu0 0.0
  %783 = vmatprep.subr.mxu0 0.0
  %784 = vmatpush1.msra.mxu0 0.0
  %785 = vmatprep.mubr.f32.mxu0 0.0
  %786 = vmatmul.mubr.f32.gmra.mrb[0].mxu0 %v719
  %v787 = vpop.f32.mrb[0].mxu0
  %v788 = vadd.f32 %v717, %v787
  %v789 = vpop.f32.mrb[0].mxu0
  %790 = vdwg.mxu0
  %v791 = vadd.f32 %v201, %v788
  %v792 = vmul.f32 %v18, 2.0
  %v793 = vsub.f32 %v788, %v792
  %v794 = vmul.f32 %v788, %v793
  %v795 = vsel %vm30, %v794, 0.0
  %796 = vadd.xlane.f32.xlu0 %v795
  %v797 = vpop.xlane.xlu0 %796
  %v798 = vrot.slane %v797, 4
  %v799 = vadd.f32 %v797, %v798
  %v800 = vrot.slane %v799, 2
  %v801 = vadd.f32 %v799, %v800
  %v802 = vrot.slane %v801, 1
  %v803 = vadd.f32 %v801, %v802
  %v804 = vadd.f32 %v803, %v196
  %v805 = vmul.f32 %v804, 0.0625
  %vm806 = vcmp.eq.s32.totalorder %v203, 0
  %v807 = vsel %vm806, 1, 0
  %v808 = vcvt.s32.f32 %v807
  %v809 = vmul.f32 %v805, %v808
  %v810 = vadd.f32 %v809, 0.0
  %v811 = vmul.f32 %v805, 0.81
  %v812 = vadd.f32 %v811, 0.0
  %v813 = vld [vmem:[%s0 + $0x68] sm:$0xff]
  %814 = vmatprep.subr.mxu0 0.0
  %815 = vmatpush1.msra.mxu0 %v813
  %816 = vmatprep.subr.mxu0 0.0
  %817 = vmatpush1.msra.mxu0 0.0
  %818 = vmatprep.subr.mxu0 0.0
  %819 = vmatpush1.msra.mxu0 0.0
  %820 = vmatprep.subr.mxu0 0.0
  %821 = vmatpush1.msra.mxu0 0.0
  %822 = vmatprep.subr.mxu0 0.0
  %823 = vmatpush1.msra.mxu0 0.0
  %824 = vmatprep.subr.mxu0 0.0
  %825 = vmatpush1.msra.mxu0 0.0
  %826 = vmatprep.subr.mxu0 0.0
  %827 = vmatpush1.msra.mxu0 0.0
  %828 = vmatprep.subr.mxu0 0.0
  %829 = vmatpush1.msra.mxu0 0.0
  %830 = vmatprep.subr.mxu0 0.0
  %831 = vmatpush1.msra.mxu0 0.0
  %832 = vmatprep.subr.mxu0 0.0
  %833 = vmatpush1.msra.mxu0 0.0
  %834 = vmatprep.subr.mxu0 0.0
  %835 = vmatpush1.msra.mxu0 0.0
  %836 = vmatprep.subr.mxu0 0.0
  %837 = vmatpush1.msra.mxu0 0.0
  %838 = vmatprep.subr.mxu0 0.0
  %839 = vmatpush1.msra.mxu0 0.0
  %840 = vmatprep.subr.mxu0 0.0
  %841 = vmatpush1.msra.mxu0 0.0
  %842 = vmatprep.subr.mxu0 0.0
  %843 = vmatpush1.msra.mxu0 0.0
  %844 = vmatprep.subr.mxu0 0.0
  %845 = vmatpush1.msra.mxu0 0.0
  %846 = vmatprep.subr.mxu0 0.0
  %847 = vmatpush1.msra.mxu0 0.0
  %848 = vmatprep.subr.mxu0 0.0
  %849 = vmatpush1.msra.mxu0 0.0
  %850 = vmatprep.subr.mxu0 0.0
  %851 = vmatpush1.msra.mxu0 0.0
  %852 = vmatprep.subr.mxu0 0.0
  %853 = vmatpush1.msra.mxu0 0.0
  %854 = vmatprep.subr.mxu0 0.0
  %855 = vmatpush1.msra.mxu0 0.0
  %856 = vmatprep.subr.mxu0 0.0
  %857 = vmatpush1.msra.mxu0 0.0
  %858 = vmatprep.subr.mxu0 0.0
  %859 = vmatpush1.msra.mxu0 0.0
  %860 = vmatprep.subr.mxu0 0.0
  %861 = vmatpush1.msra.mxu0 0.0
  %862 = vmatprep.subr.mxu0 0.0
  %863 = vmatpush1.msra.mxu0 0.0
  %864 = vmatprep.subr.mxu0 0.0
  %865 = vmatpush1.msra.mxu0 0.0
  %866 = vmatprep.subr.mxu0 0.0
  %867 = vmatpush1.msra.mxu0 0.0
  %868 = vmatprep.subr.mxu0 0.0
  %869 = vmatpush1.msra.mxu0 0.0
  %870 = vmatprep.subr.mxu0 0.0
  %871 = vmatpush1.msra.mxu0 0.0
  %872 = vmatprep.subr.mxu0 0.0
  %873 = vmatpush1.msra.mxu0 0.0
  %874 = vmatprep.subr.mxu0 0.0
  %875 = vmatpush1.msra.mxu0 0.0
  %876 = vmatprep.subr.mxu0 0.0
  %877 = vmatpush1.msra.mxu0 0.0
  %878 = vmatprep.mubr.f32.mxu0 0.0
  %879 = vmatmul.mubr.f32.gmra.mrb[0].mxu0 %v640
  %v880 = vpop.f32.mrb[0].mxu0
  %v881 = vadd.f32 0.0, %v880
  %v882 = vpop.f32.mrb[0].mxu0
  %883 = vdwg.mxu0
  %885 = vrot.lane.b32.xlu0 %v881, 112
  %v886 = vpop.permute.xlu0 %885
  %v889 = vsel %vm30, %v14, 0
  %v892 = vsel %vm30, %v15, 0
  %894 = vmatprep.subr.mxu0 0.0
  %895 = vmatpush1.msra.mxu0 %v886
  %896 = vmatprep.subr.mxu0 0.0
  %897 = vmatpush1.msra.mxu0 0.0
  %898 = vmatprep.subr.mxu0 0.0
  %899 = vmatpush1.msra.mxu0 0.0
  %900 = vmatprep.subr.mxu0 0.0
  %901 = vmatpush1.msra.mxu0 0.0
  %902 = vmatprep.subr.mxu0 0.0
  %903 = vmatpush1.msra.mxu0 0.0
  %904 = vmatprep.subr.mxu0 0.0
  %905 = vmatpush1.msra.mxu0 0.0
  %906 = vmatprep.subr.mxu0 0.0
  %907 = vmatpush1.msra.mxu0 0.0
  %908 = vmatprep.subr.mxu0 0.0
  %909 = vmatpush1.msra.mxu0 0.0
  %910 = vmatprep.subr.mxu0 0.0
  %911 = vmatpush1.msra.mxu0 0.0
  %912 = vmatprep.subr.mxu0 0.0
  %913 = vmatpush1.msra.mxu0 0.0
  %914 = vmatprep.subr.mxu0 0.0
  %915 = vmatpush1.msra.mxu0 0.0
  %916 = vmatprep.subr.mxu0 0.0
  %917 = vmatpush1.msra.mxu0 0.0
  %918 = vmatprep.subr.mxu0 0.0
  %919 = vmatpush1.msra.mxu0 0.0
  %920 = vmatprep.subr.mxu0 0.0
  %921 = vmatpush1.msra.mxu0 0.0
  %922 = vmatprep.subr.mxu0 0.0
  %923 = vmatpush1.msra.mxu0 0.0
  %924 = vmatprep.subr.mxu0 0.0
  %925 = vmatpush1.msra.mxu0 0.0
  %926 = vmatprep.subr.mxu0 0.0
  %927 = vmatpush1.msra.mxu0 0.0
  %928 = vmatprep.subr.mxu0 0.0
  %929 = vmatpush1.msra.mxu0 0.0
  %930 = vmatprep.subr.mxu0 0.0
  %931 = vmatpush1.msra.mxu0 0.0
  %932 = vmatprep.subr.mxu0 0.0
  %933 = vmatpush1.msra.mxu0 0.0
  %934 = vmatprep.subr.mxu0 0.0
  %935 = vmatpush1.msra.mxu0 0.0
  %936 = vmatprep.subr.mxu0 0.0
  %937 = vmatpush1.msra.mxu0 0.0
  %938 = vmatprep.subr.mxu0 0.0
  %939 = vmatpush1.msra.mxu0 0.0
  %940 = vmatprep.subr.mxu0 0.0
  %941 = vmatpush1.msra.mxu0 0.0
  %942 = vmatprep.subr.mxu0 0.0
  %943 = vmatpush1.msra.mxu0 0.0
  %944 = vmatprep.subr.mxu0 0.0
  %945 = vmatpush1.msra.mxu0 0.0
  %946 = vmatprep.subr.mxu0 0.0
  %947 = vmatpush1.msra.mxu0 0.0
  %948 = vmatprep.subr.mxu0 0.0
  %949 = vmatpush1.msra.mxu0 0.0
  %950 = vmatprep.subr.mxu0 0.0
  %951 = vmatpush1.msra.mxu0 0.0
  %952 = vmatprep.subr.mxu0 0.0
  %953 = vmatpush1.msra.mxu0 0.0
  %954 = vmatprep.subr.mxu0 0.0
  %955 = vmatpush1.msra.mxu0 0.0
  %956 = vmatprep.subr.mxu0 0.0
  %957 = vmatpush1.msra.mxu0 0.0
  %958 = vmatprep.mubr.f32.mxu0 0.0
  %959 = vmatmul.mubr.f32.gmra.mrb[0].mxu0 %v889
  %v960 = vpop.f32.mrb[0].mxu0
  %v961 = vadd.f32 0.0, %v960
  %v962 = vpop.f32.mrb[0].mxu0
  %963 = vmatprep.mubr.f32.mxu0 0.0
  %964 = vmatmul.mubr.f32.gmra.mrb[0].mxu0 %v892
  %v965 = vpop.f32.mrb[0].mxu0
  %v966 = vadd.f32 0.0, %v965
  %v967 = vpop.f32.mrb[0].mxu0
  %968 = vdwg.mxu0
  %v970 = vsel %vm30, %v12, 0
  %v973 = vsel %vm30, %v13, 0
  %975 = vmatprep.subr.mxu0 0.0
  %976 = vmatpush1.msra.mxu0 %v881
  %977 = vmatprep.subr.mxu0 0.0
  %978 = vmatpush1.msra.mxu0 0.0
  %979 = vmatprep.subr.mxu0 0.0
  %980 = vmatpush1.msra.mxu0 0.0
  %981 = vmatprep.subr.mxu0 0.0
  %982 = vmatpush1.msra.mxu0 0.0
  %983 = vmatprep.subr.mxu0 0.0
  %984 = vmatpush1.msra.mxu0 0.0
  %985 = vmatprep.subr.mxu0 0.0
  %986 = vmatpush1.msra.mxu0 0.0
  %987 = vmatprep.subr.mxu0 0.0
  %988 = vmatpush1.msra.mxu0 0.0
  %989 = vmatprep.subr.mxu0 0.0
  %990 = vmatpush1.msra.mxu0 0.0
  %991 = vmatprep.subr.mxu0 0.0
  %992 = vmatpush1.msra.mxu0 0.0
  %993 = vmatprep.subr.mxu0 0.0
  %994 = vmatpush1.msra.mxu0 0.0
  %995 = vmatprep.subr.mxu0 0.0
  %996 = vmatpush1.msra.mxu0 0.0
  %997 = vmatprep.subr.mxu0 0.0
  %998 = vmatpush1.msra.mxu0 0.0
  %999 = vmatprep.subr.mxu0 0.0
  %1000 = vmatpush1.msra.mxu0 0.0
  %1001 = vmatprep.subr.mxu0 0.0
  %1002 = vmatpush1.msra.mxu0 0.0
  %1003 = vmatprep.subr.mxu0 0.0
  %1004 = vmatpush1.msra.mxu0 0.0
  %1005 = vmatprep.subr.mxu0 0.0
  %1006 = vmatpush1.msra.mxu0 0.0
  %1007 = vmatprep.subr.mxu0 0.0
  %1008 = vmatpush1.msra.mxu0 0.0
  %1009 = vmatprep.subr.mxu0 0.0
  %1010 = vmatpush1.msra.mxu0 0.0
  %1011 = vmatprep.subr.mxu0 0.0
  %1012 = vmatpush1.msra.mxu0 0.0
  %1013 = vmatprep.subr.mxu0 0.0
  %1014 = vmatpush1.msra.mxu0 0.0
  %1015 = vmatprep.subr.mxu0 0.0
  %1016 = vmatpush1.msra.mxu0 0.0
  %1017 = vmatprep.subr.mxu0 0.0
  %1018 = vmatpush1.msra.mxu0 0.0
  %1019 = vmatprep.subr.mxu0 0.0
  %1020 = vmatpush1.msra.mxu0 0.0
  %1021 = vmatprep.subr.mxu0 0.0
  %1022 = vmatpush1.msra.mxu0 0.0
  %1023 = vmatprep.subr.mxu0 0.0
  %1024 = vmatpush1.msra.mxu0 0.0
  %1025 = vmatprep.subr.mxu0 0.0
  %1026 = vmatpush1.msra.mxu0 0.0
  %1027 = vmatprep.subr.mxu0 0.0
  %1028 = vmatpush1.msra.mxu0 0.0
  %1029 = vmatprep.subr.mxu0 0.0
  %1030 = vmatpush1.msra.mxu0 0.0
  %1031 = vmatprep.subr.mxu0 0.0
  %1032 = vmatpush1.msra.mxu0 0.0
  %1033 = vmatprep.subr.mxu0 0.0
  %1034 = vmatpush1.msra.mxu0 0.0
  %1035 = vmatprep.subr.mxu0 0.0
  %1036 = vmatpush1.msra.mxu0 0.0
  %1037 = vmatprep.subr.mxu0 0.0
  %1038 = vmatpush1.msra.mxu0 0.0
  %1039 = vmatprep.mubr.f32.mxu0 0.0
  %1040 = vmatmul.mubr.f32.gmra.mrb[0].mxu0 %v970
  %v1041 = vpop.f32.mrb[0].mxu0
  %v1042 = vadd.f32 %v961, %v1041
  %v1043 = vpop.f32.mrb[0].mxu0
  %1044 = vmatprep.mubr.f32.mxu0 0.0
  %1045 = vmatmul.mubr.f32.gmra.mrb[0].mxu0 %v973
  %v1046 = vpop.f32.mrb[0].mxu0
  %v1047 = vadd.f32 %v966, %v1046
  %v1048 = vpop.f32.mrb[0].mxu0
  %1049 = vdwg.mxu0
  %1052 = vrot.lane.b32.xlu0 %v104, 112
  %v1053 = vpop.permute.xlu0 %1052
  %1054 = vrot.lane.b32.xlu0 %v109, 112
  %v1055 = vpop.permute.xlu0 %1054
  %v1058 = vadd.f32 %v1042, %v1053
  %v1059 = vadd.f32 %v1047, %v1055
  %v1060 = vlaneseq
  %v1061 = vshrl.u32 %v1060, 7
  %v1062 = vsub.s32 1, %v1061
  %v1063 = vrot.slane %v20, %v1062
  %v1064 = vadd.f32 %v1058, %v1063
  %v1065 = vadd.f32 %v1059, %v1063
  %v1066 = vlaneseq
  %v1067 = vshrl.u32 %v1066, 7
  %v1068 = vsub.s32 1, %v1067
  %v1069 = vrot.slane %v22, %v1068
  %v1070 = vmul.f32 %v213, %v1069
  %1072 = vrot.lane.b32.xlu0 %v1070, 32
  %v1073 = vpop.permute.xlu0 %1072
  %v1075 = vadd.f32 %v881, %v1073
  %v1076 = vlaneseq
  %v1077 = vshrl.u32 %v1076, 7
  %v1078 = vsub.s32 1, %v1077
  %v1079 = vrot.slane %v23, %v1078
  %1081 = vrot.lane.b32.xlu0 %v1079, 32
  %v1082 = vpop.permute.xlu0 %1081
  %v1084 = vadd.f32 %v1075, %v1082
  %1086 = vrot.lane.b32.xlu0 %v183, 32
  %v1087 = vpop.permute.xlu0 %1086
  %v1089 = vadd.f32 %v881, %v1087
  %v1090 = vlaneseq
  %v1091 = vshrl.u32 %v1090, 7
  %v1092 = vsub.s32 1, %v1091
  %v1093 = vrot.slane %v25, %v1092
  %1095 = vrot.lane.b32.xlu0 %v1093, 40
  %v1096 = vpop.permute.xlu0 %1095
  %v1098 = vadd.f32 %v1089, %v1096
  %v1099 = vmax.f32 %v1064, 0.0
  %v1100 = vmax.f32 %v1065, 0.0
  %v1101 = vld [vmem:[%s0 + $0xa0] sm:$0xff]
  %v1102 = vld [vmem:[%s0 + $0xa8] sm:$0xff]
  %v1103 = vlaneseq
  %v1104 = vshrl.u32 %v1103, 7
  %v1105 = vsub.s32 1, %v1104
  %v1106 = vrot.slane %v21, %v1105
  %v1108 = vsel %vm238, %v1099, 0
  %v1111 = vsel %vm238, %v1100, 0
  %1113 = vmatprep.subr.mxu0 0.0
  %1114 = vmatpush1.msra.mxu0 %v1101
  %1115 = vmatprep.subr.mxu0 0.0
  %1116 = vmatpush1.msra.mxu0 %v1102
  %1117 = vmatprep.subr.mxu0 0.0
  %1118 = vmatpush1.msra.mxu0 0.0
  %1119 = vmatprep.subr.mxu0 0.0
  %1120 = vmatpush1.msra.mxu0 0.0
  %1121 = vmatprep.subr.mxu0 0.0
  %1122 = vmatpush1.msra.mxu0 0.0
  %1123 = vmatprep.subr.mxu0 0.0
  %1124 = vmatpush1.msra.mxu0 0.0
  %1125 = vmatprep.subr.mxu0 0.0
  %1126 = vmatpush1.msra.mxu0 0.0
  %1127 = vmatprep.subr.mxu0 0.0
  %1128 = vmatpush1.msra.mxu0 0.0
  %1129 = vmatprep.subr.mxu0 0.0
  %1130 = vmatpush1.msra.mxu0 0.0
  %1131 = vmatprep.subr.mxu0 0.0
  %1132 = vmatpush1.msra.mxu0 0.0
  %1133 = vmatprep.subr.mxu0 0.0
  %1134 = vmatpush1.msra.mxu0 0.0
  %1135 = vmatprep.subr.mxu0 0.0
  %1136 = vmatpush1.msra.mxu0 0.0
  %1137 = vmatprep.subr.mxu0 0.0
  %1138 = vmatpush1.msra.mxu0 0.0
  %1139 = vmatprep.subr.mxu0 0.0
  %1140 = vmatpush1.msra.mxu0 0.0
  %1141 = vmatprep.subr.mxu0 0.0
  %1142 = vmatpush1.msra.mxu0 0.0
  %1143 = vmatprep.subr.mxu0 0.0
  %1144 = vmatpush1.msra.mxu0 0.0
  %1145 = vmatprep.subr.mxu0 0.0
  %1146 = vmatpush1.msra.mxu0 0.0
  %1147 = vmatprep.subr.mxu0 0.0
  %1148 = vmatpush1.msra.mxu0 0.0
  %1149 = vmatprep.subr.mxu0 0.0
  %1150 = vmatpush1.msra.mxu0 0.0
  %1151 = vmatprep.subr.mxu0 0.0
  %1152 = vmatpush1.msra.mxu0 0.0
  %1153 = vmatprep.subr.mxu0 0.0
  %1154 = vmatpush1.msra.mxu0 0.0
  %1155 = vmatprep.subr.mxu0 0.0
  %1156 = vmatpush1.msra.mxu0 0.0
  %1157 = vmatprep.subr.mxu0 0.0
  %1158 = vmatpush1.msra.mxu0 0.0
  %1159 = vmatprep.subr.mxu0 0.0
  %1160 = vmatpush1.msra.mxu0 0.0
  %1161 = vmatprep.subr.mxu0 0.0
  %1162 = vmatpush1.msra.mxu0 0.0
  %1163 = vmatprep.subr.mxu0 0.0
  %1164 = vmatpush1.msra.mxu0 0.0
  %1165 = vmatprep.subr.mxu0 0.0
  %1166 = vmatpush1.msra.mxu0 0.0
  %1167 = vmatprep.subr.mxu0 0.0
  %1168 = vmatpush1.msra.mxu0 0.0
  %1169 = vmatprep.subr.mxu0 0.0
  %1170 = vmatpush1.msra.mxu0 0.0
  %1171 = vmatprep.subr.mxu0 0.0
  %1172 = vmatpush1.msra.mxu0 0.0
  %1173 = vmatprep.subr.mxu0 0.0
  %1174 = vmatpush1.msra.mxu0 0.0
  %1175 = vmatprep.subr.mxu0 0.0
  %1176 = vmatpush1.msra.mxu0 0.0
  %1177 = vmatprep.mubr.f32.mxu0 0.0
  %1178 = vmatmul.mubr.f32.gmra.mrb[0].mxu0 %v1108
  %v1179 = vpop.f32.mrb[0].mxu0
  %v1180 = vadd.f32 %v1106, %v1179
  %v1181 = vpop.f32.mrb[0].mxu0
  %1182 = vmatprep.mubr.f32.mxu0 0.0
  %1183 = vmatmul.mubr.f32.gmra.mrb[0].mxu0 %v1111
  %v1184 = vpop.f32.mrb[0].mxu0
  %v1185 = vadd.f32 %v1106, %v1184
  %v1186 = vpop.f32.mrb[0].mxu0
  %1187 = vdwg.mxu0
  %1190 = vrot.lane.b32.xlu0 %v1180, 120
  %v1191 = vpop.permute.xlu0 %1190
  %1192 = vrot.lane.b32.xlu0 %v1185, 120
  %v1193 = vpop.permute.xlu0 %1192
  %1196 = vmatprep.subr.mxu0 0.0
  %1197 = vmatpush1.msra.mxu0 %v1191
  %1198 = vmatprep.subr.mxu0 0.0
  %1199 = vmatpush1.msra.mxu0 %v1193
  %1200 = vmatprep.subr.mxu0 0.0
  %1201 = vmatpush1.msra.mxu0 0.0
  %1202 = vmatprep.subr.mxu0 0.0
  %1203 = vmatpush1.msra.mxu0 0.0
  %1204 = vmatprep.subr.mxu0 0.0
  %1205 = vmatpush1.msra.mxu0 0.0
  %1206 = vmatprep.subr.mxu0 0.0
  %1207 = vmatpush1.msra.mxu0 0.0
  %1208 = vmatprep.subr.mxu0 0.0
  %1209 = vmatpush1.msra.mxu0 0.0
  %1210 = vmatprep.subr.mxu0 0.0
  %1211 = vmatpush1.msra.mxu0 0.0
  %1212 = vmatprep.subr.mxu0 0.0
  %1213 = vmatpush1.msra.mxu0 0.0
  %1214 = vmatprep.subr.mxu0 0.0
  %1215 = vmatpush1.msra.mxu0 0.0
  %1216 = vmatprep.subr.mxu0 0.0
  %1217 = vmatpush1.msra.mxu0 0.0
  %1218 = vmatprep.subr.mxu0 0.0
  %1219 = vmatpush1.msra.mxu0 0.0
  %1220 = vmatprep.subr.mxu0 0.0
  %1221 = vmatpush1.msra.mxu0 0.0
  %1222 = vmatprep.subr.mxu0 0.0
  %1223 = vmatpush1.msra.mxu0 0.0
  %1224 = vmatprep.subr.mxu0 0.0
  %1225 = vmatpush1.msra.mxu0 0.0
  %1226 = vmatprep.subr.mxu0 0.0
  %1227 = vmatpush1.msra.mxu0 0.0
  %1228 = vmatprep.subr.mxu0 0.0
  %1229 = vmatpush1.msra.mxu0 0.0
  %1230 = vmatprep.subr.mxu0 0.0
  %1231 = vmatpush1.msra.mxu0 0.0
  %1232 = vmatprep.subr.mxu0 0.0
  %1233 = vmatpush1.msra.mxu0 0.0
  %1234 = vmatprep.subr.mxu0 0.0
  %1235 = vmatpush1.msra.mxu0 0.0
  %1236 = vmatprep.subr.mxu0 0.0
  %1237 = vmatpush1.msra.mxu0 0.0
  %1238 = vmatprep.subr.mxu0 0.0
  %1239 = vmatpush1.msra.mxu0 0.0
  %1240 = vmatprep.subr.mxu0 0.0
  %1241 = vmatpush1.msra.mxu0 0.0
  %1242 = vmatprep.subr.mxu0 0.0
  %1243 = vmatpush1.msra.mxu0 0.0
  %1244 = vmatprep.subr.mxu0 0.0
  %1245 = vmatpush1.msra.mxu0 0.0
  %1246 = vmatprep.subr.mxu0 0.0
  %1247 = vmatpush1.msra.mxu0 0.0
  %1248 = vmatprep.subr.mxu0 0.0
  %1249 = vmatpush1.msra.mxu0 0.0
  %1250 = vmatprep.subr.mxu0 0.0
  %1251 = vmatpush1.msra.mxu0 0.0
  %1252 = vmatprep.subr.mxu0 0.0
  %1253 = vmatpush1.msra.mxu0 0.0
  %1254 = vmatprep.subr.mxu0 0.0
  %1255 = vmatpush1.msra.mxu0 0.0
  %1256 = vmatprep.subr.mxu0 0.0
  %1257 = vmatpush1.msra.mxu0 0.0
  %1258 = vmatprep.subr.mxu0 0.0
  %1259 = vmatpush1.msra.mxu0 0.0
  %1260 = vmatprep.mubr.f32.mxu0 0.0
  %1261 = vmatmul.mubr.f32.gmra.mrb[0].mxu0 %v329
  %v1262 = vpop.f32.mrb[0].mxu0
  %v1263 = vadd.f32 0.0, %v1262
  %v1264 = vpop.f32.mrb[0].mxu0
  %1265 = vdwg.mxu0
  %1266 = vmatprep.subr.mxu0 0.0
  %1267 = vmatpush1.msra.mxu0 %v1180
  %1268 = vmatprep.subr.mxu0 0.0
  %1269 = vmatpush1.msra.mxu0 %v1185
  %1270 = vmatprep.subr.mxu0 0.0
  %1271 = vmatpush1.msra.mxu0 0.0
  %1272 = vmatprep.subr.mxu0 0.0
  %1273 = vmatpush1.msra.mxu0 0.0
  %1274 = vmatprep.subr.mxu0 0.0
  %1275 = vmatpush1.msra.mxu0 0.0
  %1276 = vmatprep.subr.mxu0 0.0
  %1277 = vmatpush1.msra.mxu0 0.0
  %1278 = vmatprep.subr.mxu0 0.0
  %1279 = vmatpush1.msra.mxu0 0.0
  %1280 = vmatprep.subr.mxu0 0.0
  %1281 = vmatpush1.msra.mxu0 0.0
  %1282 = vmatprep.subr.mxu0 0.0
  %1283 = vmatpush1.msra.mxu0 0.0
  %1284 = vmatprep.subr.mxu0 0.0
  %1285 = vmatpush1.msra.mxu0 0.0
  %1286 = vmatprep.subr.mxu0 0.0
  %1287 = vmatpush1.msra.mxu0 0.0
  %1288 = vmatprep.subr.mxu0 0.0
  %1289 = vmatpush1.msra.mxu0 0.0
  %1290 = vmatprep.subr.mxu0 0.0
  %1291 = vmatpush1.msra.mxu0 0.0
  %1292 = vmatprep.subr.mxu0 0.0
  %1293 = vmatpush1.msra.mxu0 0.0
  %1294 = vmatprep.subr.mxu0 0.0
  %1295 = vmatpush1.msra.mxu0 0.0
  %1296 = vmatprep.subr.mxu0 0.0
  %1297 = vmatpush1.msra.mxu0 0.0
  %1298 = vmatprep.subr.mxu0 0.0
  %1299 = vmatpush1.msra.mxu0 0.0
  %1300 = vmatprep.subr.mxu0 0.0
  %1301 = vmatpush1.msra.mxu0 0.0
  %1302 = vmatprep.subr.mxu0 0.0
  %1303 = vmatpush1.msra.mxu0 0.0
  %1304 = vmatprep.subr.mxu0 0.0
  %1305 = vmatpush1.msra.mxu0 0.0
  %1306 = vmatprep.subr.mxu0 0.0
  %1307 = vmatpush1.msra.mxu0 0.0
  %1308 = vmatprep.subr.mxu0 0.0
  %1309 = vmatpush1.msra.mxu0 0.0
  %1310 = vmatprep.subr.mxu0 0.0
  %1311 = vmatpush1.msra.mxu0 0.0
  %1312 = vmatprep.subr.mxu0 0.0
  %1313 = vmatpush1.msra.mxu0 0.0
  %1314 = vmatprep.subr.mxu0 0.0
  %1315 = vmatpush1.msra.mxu0 0.0
  %1316 = vmatprep.subr.mxu0 0.0
  %1317 = vmatpush1.msra.mxu0 0.0
  %1318 = vmatprep.subr.mxu0 0.0
  %1319 = vmatpush1.msra.mxu0 0.0
  %1320 = vmatprep.subr.mxu0 0.0
  %1321 = vmatpush1.msra.mxu0 0.0
  %1322 = vmatprep.subr.mxu0 0.0
  %1323 = vmatpush1.msra.mxu0 0.0
  %1324 = vmatprep.subr.mxu0 0.0
  %1325 = vmatpush1.msra.mxu0 0.0
  %1326 = vmatprep.subr.mxu0 0.0
  %1327 = vmatpush1.msra.mxu0 0.0
  %1328 = vmatprep.subr.mxu0 0.0
  %1329 = vmatpush1.msra.mxu0 0.0
  %1330 = vmatprep.mubr.f32.mxu0 0.0
  %1331 = vmatmul.mubr.f32.gmra.mrb[0].mxu0 %v402
  %v1332 = vpop.f32.mrb[0].mxu0
  %v1333 = vadd.f32 %v1263, %v1332
  %v1334 = vpop.f32.mrb[0].mxu0
  %1335 = vdwg.mxu0
  %v1336 = vmax.f32 %v1084, 0.0
  %v1337 = vld [vmem:[%s0 + $0xe0] sm:$0xff]
  %v1338 = vlaneseq
  %v1339 = vshrl.u32 %v1338, 7
  %v1340 = vsub.s32 1, %v1339
  %v1341 = vrot.slane %v24, %v1340
  %1343 = vrot.lane.b32.xlu0 %v1336, 96
  %v1344 = vpop.permute.xlu0 %1343
  %v1345 = vsel %vm30, %v1344, 0
  %1347 = vmatprep.subr.mxu0 0.0
  %1348 = vmatpush1.msra.mxu0 %v1337
  %1349 = vmatprep.subr.mxu0 0.0
  %1350 = vmatpush1.msra.mxu0 0.0
  %1351 = vmatprep.subr.mxu0 0.0
  %1352 = vmatpush1.msra.mxu0 0.0
  %1353 = vmatprep.subr.mxu0 0.0
  %1354 = vmatpush1.msra.mxu0 0.0
  %1355 = vmatprep.subr.mxu0 0.0
  %1356 = vmatpush1.msra.mxu0 0.0
  %1357 = vmatprep.subr.mxu0 0.0
  %1358 = vmatpush1.msra.mxu0 0.0
  %1359 = vmatprep.subr.mxu0 0.0
  %1360 = vmatpush1.msra.mxu0 0.0
  %1361 = vmatprep.subr.mxu0 0.0
  %1362 = vmatpush1.msra.mxu0 0.0
  %1363 = vmatprep.subr.mxu0 0.0
  %1364 = vmatpush1.msra.mxu0 0.0
  %1365 = vmatprep.subr.mxu0 0.0
  %1366 = vmatpush1.msra.mxu0 0.0
  %1367 = vmatprep.subr.mxu0 0.0
  %1368 = vmatpush1.msra.mxu0 0.0
  %1369 = vmatprep.subr.mxu0 0.0
  %1370 = vmatpush1.msra.mxu0 0.0
  %1371 = vmatprep.subr.mxu0 0.0
  %1372 = vmatpush1.msra.mxu0 0.0
  %1373 = vmatprep.subr.mxu0 0.0
  %1374 = vmatpush1.msra.mxu0 0.0
  %1375 = vmatprep.subr.mxu0 0.0
  %1376 = vmatpush1.msra.mxu0 0.0
  %1377 = vmatprep.subr.mxu0 0.0
  %1378 = vmatpush1.msra.mxu0 0.0
  %1379 = vmatprep.subr.mxu0 0.0
  %1380 = vmatpush1.msra.mxu0 0.0
  %1381 = vmatprep.subr.mxu0 0.0
  %1382 = vmatpush1.msra.mxu0 0.0
  %1383 = vmatprep.subr.mxu0 0.0
  %1384 = vmatpush1.msra.mxu0 0.0
  %1385 = vmatprep.subr.mxu0 0.0
  %1386 = vmatpush1.msra.mxu0 0.0
  %1387 = vmatprep.subr.mxu0 0.0
  %1388 = vmatpush1.msra.mxu0 0.0
  %1389 = vmatprep.subr.mxu0 0.0
  %1390 = vmatpush1.msra.mxu0 0.0
  %1391 = vmatprep.subr.mxu0 0.0
  %1392 = vmatpush1.msra.mxu0 0.0
  %1393 = vmatprep.subr.mxu0 0.0
  %1394 = vmatpush1.msra.mxu0 0.0
  %1395 = vmatprep.subr.mxu0 0.0
  %1396 = vmatpush1.msra.mxu0 0.0
  %1397 = vmatprep.subr.mxu0 0.0
  %1398 = vmatpush1.msra.mxu0 0.0
  %1399 = vmatprep.subr.mxu0 0.0
  %1400 = vmatpush1.msra.mxu0 0.0
  %1401 = vmatprep.subr.mxu0 0.0
  %1402 = vmatpush1.msra.mxu0 0.0
  %1403 = vmatprep.subr.mxu0 0.0
  %1404 = vmatpush1.msra.mxu0 0.0
  %1405 = vmatprep.subr.mxu0 0.0
  %1406 = vmatpush1.msra.mxu0 0.0
  %1407 = vmatprep.subr.mxu0 0.0
  %1408 = vmatpush1.msra.mxu0 0.0
  %1409 = vmatprep.subr.mxu0 0.0
  %1410 = vmatpush1.msra.mxu0 0.0
  %1411 = vmatprep.mubr.f32.mxu0 0.0
  %1412 = vmatmul.mubr.f32.gmra.mrb[0].mxu0 %v1345
  %v1413 = vpop.f32.mrb[0].mxu0
  %v1414 = vadd.f32 %v1341, %v1413
  %v1415 = vpop.f32.mrb[0].mxu0
  %1416 = vdwg.mxu0
  %1418 = vrot.lane.b32.xlu0 %v1333, 40
  %v1419 = vpop.permute.xlu0 %1418
  %v1421 = vadd.f32 %v1098, %v1419
  %1423 = vrot.lane.b32.xlu0 %v1414, 40
  %v1424 = vpop.permute.xlu0 %1423
  %v1426 = vadd.f32 %v1421, %v1424
  %v1427 = vmax.f32 %v1426, 0.0
  %v1428 = vld [vmem:[%s0 + $0x108] sm:$0xff]
  %1430 = vrot.lane.b32.xlu0 %v1427, 88
  %v1431 = vpop.permute.xlu0 %1430
  %v1432 = vsel %vm30, %v1431, 0
  %1434 = vmatprep.subr.mxu0 0.0
  %1435 = vmatpush1.msra.mxu0 %v1428
  %1436 = vmatprep.subr.mxu0 0.0
  %1437 = vmatpush1.msra.mxu0 0.0
  %1438 = vmatprep.subr.mxu0 0.0
  %1439 = vmatpush1.msra.mxu0 0.0
  %1440 = vmatprep.subr.mxu0 0.0
  %1441 = vmatpush1.msra.mxu0 0.0
  %1442 = vmatprep.subr.mxu0 0.0
  %1443 = vmatpush1.msra.mxu0 0.0
  %1444 = vmatprep.subr.mxu0 0.0
  %1445 = vmatpush1.msra.mxu0 0.0
  %1446 = vmatprep.subr.mxu0 0.0
  %1447 = vmatpush1.msra.mxu0 0.0
  %1448 = vmatprep.subr.mxu0 0.0
  %1449 = vmatpush1.msra.mxu0 0.0
  %1450 = vmatprep.subr.mxu0 0.0
  %1451 = vmatpush1.msra.mxu0 0.0
  %1452 = vmatprep.subr.mxu0 0.0
  %1453 = vmatpush1.msra.mxu0 0.0
  %1454 = vmatprep.subr.mxu0 0.0
  %1455 = vmatpush1.msra.mxu0 0.0
  %1456 = vmatprep.subr.mxu0 0.0
  %1457 = vmatpush1.msra.mxu0 0.0
  %1458 = vmatprep.subr.mxu0 0.0
  %1459 = vmatpush1.msra.mxu0 0.0
  %1460 = vmatprep.subr.mxu0 0.0
  %1461 = vmatpush1.msra.mxu0 0.0
  %1462 = vmatprep.subr.mxu0 0.0
  %1463 = vmatpush1.msra.mxu0 0.0
  %1464 = vmatprep.subr.mxu0 0.0
  %1465 = vmatpush1.msra.mxu0 0.0
  %1466 = vmatprep.subr.mxu0 0.0
  %1467 = vmatpush1.msra.mxu0 0.0
  %1468 = vmatprep.subr.mxu0 0.0
  %1469 = vmatpush1.msra.mxu0 0.0
  %1470 = vmatprep.subr.mxu0 0.0
  %1471 = vmatpush1.msra.mxu0 0.0
  %1472 = vmatprep.subr.mxu0 0.0
  %1473 = vmatpush1.msra.mxu0 0.0
  %1474 = vmatprep.subr.mxu0 0.0
  %1475 = vmatpush1.msra.mxu0 0.0
  %1476 = vmatprep.subr.mxu0 0.0
  %1477 = vmatpush1.msra.mxu0 0.0
  %1478 = vmatprep.subr.mxu0 0.0
  %1479 = vmatpush1.msra.mxu0 0.0
  %1480 = vmatprep.subr.mxu0 0.0
  %1481 = vmatpush1.msra.mxu0 0.0
  %1482 = vmatprep.subr.mxu0 0.0
  %1483 = vmatpush1.msra.mxu0 0.0
  %1484 = vmatprep.subr.mxu0 0.0
  %1485 = vmatpush1.msra.mxu0 0.0
  %1486 = vmatprep.subr.mxu0 0.0
  %1487 = vmatpush1.msra.mxu0 0.0
  %1488 = vmatprep.subr.mxu0 0.0
  %1489 = vmatpush1.msra.mxu0 0.0
  %1490 = vmatprep.subr.mxu0 0.0
  %1491 = vmatpush1.msra.mxu0 0.0
  %1492 = vmatprep.subr.mxu0 0.0
  %1493 = vmatpush1.msra.mxu0 0.0
  %1494 = vmatprep.subr.mxu0 0.0
  %1495 = vmatpush1.msra.mxu0 0.0
  %1496 = vmatprep.subr.mxu0 0.0
  %1497 = vmatpush1.msra.mxu0 0.0
  %1498 = vmatprep.mubr.f32.mxu0 0.0
  %1499 = vmatmul.mubr.f32.gmra.mrb[0].mxu0 %v1432
  %v1500 = vpop.f32.mrb[0].mxu0
  %v1501 = vadd.f32 0.0, %v1500
  %v1502 = vpop.f32.mrb[0].mxu0
  %1503 = vdwg.mxu0
  %v1504 = vadd.f32 %v631, %v1501
  %v1505 = vlaneseq
  %v1506 = vshrl.u32 %v1505, 7
  %v1507 = vsub.s32 1, %v1506
  %v1508 = vrot.slane %v26, %v1507
  %v1509 = vadd.f32 %v1504, %v1508
  %v1510 = vld [vmem:[%s0 + $0x128] sm:$0xff]
  %v1511 = vlaneseq
  %v1512 = vshrl.u32 %v1511, 7
  %v1513 = vsub.s32 1, %v1512
  %v1514 = vrot.slane %v27, %v1513
  %v1516 = vsel %vm30, %v1509, 0
  %1518 = vmatprep.subr.mxu0 0.0
  %1519 = vmatpush1.msra.mxu0 %v1510
  %1520 = vmatprep.subr.mxu0 0.0
  %1521 = vmatpush1.msra.mxu0 0.0
  %1522 = vmatprep.subr.mxu0 0.0
  %1523 = vmatpush1.msra.mxu0 0.0
  %1524 = vmatprep.subr.mxu0 0.0
  %1525 = vmatpush1.msra.mxu0 0.0
  %1526 = vmatprep.subr.mxu0 0.0
  %1527 = vmatpush1.msra.mxu0 0.0
  %1528 = vmatprep.subr.mxu0 0.0
  %1529 = vmatpush1.msra.mxu0 0.0
  %1530 = vmatprep.subr.mxu0 0.0
  %1531 = vmatpush1.msra.mxu0 0.0
  %1532 = vmatprep.subr.mxu0 0.0
  %1533 = vmatpush1.msra.mxu0 0.0
  %1534 = vmatprep.subr.mxu0 0.0
  %1535 = vmatpush1.msra.mxu0 0.0
  %1536 = vmatprep.subr.mxu0 0.0
  %1537 = vmatpush1.msra.mxu0 0.0
  %1538 = vmatprep.subr.mxu0 0.0
  %1539 = vmatpush1.msra.mxu0 0.0
  %1540 = vmatprep.subr.mxu0 0.0
  %1541 = vmatpush1.msra.mxu0 0.0
  %1542 = vmatprep.subr.mxu0 0.0
  %1543 = vmatpush1.msra.mxu0 0.0
  %1544 = vmatprep.subr.mxu0 0.0
  %1545 = vmatpush1.msra.mxu0 0.0
  %1546 = vmatprep.subr.mxu0 0.0
  %1547 = vmatpush1.msra.mxu0 0.0
  %1548 = vmatprep.subr.mxu0 0.0
  %1549 = vmatpush1.msra.mxu0 0.0
  %1550 = vmatprep.subr.mxu0 0.0
  %1551 = vmatpush1.msra.mxu0 0.0
  %1552 = vmatprep.subr.mxu0 0.0
  %1553 = vmatpush1.msra.mxu0 0.0
  %1554 = vmatprep.subr.mxu0 0.0
  %1555 = vmatpush1.msra.mxu0 0.0
  %1556 = vmatprep.subr.mxu0 0.0
  %1557 = vmatpush1.msra.mxu0 0.0
  %1558 = vmatprep.subr.mxu0 0.0
  %1559 = vmatpush1.msra.mxu0 0.0
  %1560 = vmatprep.subr.mxu0 0.0
  %1561 = vmatpush1.msra.mxu0 0.0
  %1562 = vmatprep.subr.mxu0 0.0
  %1563 = vmatpush1.msra.mxu0 0.0
  %1564 = vmatprep.subr.mxu0 0.0
  %1565 = vmatpush1.msra.mxu0 0.0
  %1566 = vmatprep.subr.mxu0 0.0
  %1567 = vmatpush1.msra.mxu0 0.0
  %1568 = vmatprep.subr.mxu0 0.0
  %1569 = vmatpush1.msra.mxu0 0.0
  %1570 = vmatprep.subr.mxu0 0.0
  %1571 = vmatpush1.msra.mxu0 0.0
  %1572 = vmatprep.subr.mxu0 0.0
  %1573 = vmatpush1.msra.mxu0 0.0
  %1574 = vmatprep.subr.mxu0 0.0
  %1575 = vmatpush1.msra.mxu0 0.0
  %1576 = vmatprep.subr.mxu0 0.0
  %1577 = vmatpush1.msra.mxu0 0.0
  %1578 = vmatprep.subr.mxu0 0.0
  %1579 = vmatpush1.msra.mxu0 0.0
  %1580 = vmatprep.subr.mxu0 0.0
  %1581 = vmatpush1.msra.mxu0 0.0
  %1582 = vmatprep.mubr.f32.mxu0 0.0
  %1583 = vmatmul.mubr.f32.gmra.mrb[0].mxu0 %v1516
  %v1584 = vpop.f32.mrb[0].mxu0
  %v1585 = vadd.f32 %v1514, %v1584
  %v1586 = vpop.f32.mrb[0].mxu0
  %1587 = vdwg.mxu0
  %v1588 = vmax.f32 %v1585, 0.0
  %v1589 = vld [vmem:[%s0 + $0x148] sm:$0xff]
  %v1590 = vlaneseq
  %v1591 = vshrl.u32 %v1590, 7
  %v1592 = vsub.s32 1, %v1591
  %v1593 = vrot.slane %v28, %v1592
  %v1595 = vsel %vm30, %v1588, 0
  %1597 = vmatprep.subr.mxu0 0.0
  %1598 = vmatpush1.msra.mxu0 %v1589
  %1599 = vmatprep.subr.mxu0 0.0
  %1600 = vmatpush1.msra.mxu0 0.0
  %1601 = vmatprep.subr.mxu0 0.0
  %1602 = vmatpush1.msra.mxu0 0.0
  %1603 = vmatprep.subr.mxu0 0.0
  %1604 = vmatpush1.msra.mxu0 0.0
  %1605 = vmatprep.subr.mxu0 0.0
  %1606 = vmatpush1.msra.mxu0 0.0
  %1607 = vmatprep.subr.mxu0 0.0
  %1608 = vmatpush1.msra.mxu0 0.0
  %1609 = vmatprep.subr.mxu0 0.0
  %1610 = vmatpush1.msra.mxu0 0.0
  %1611 = vmatprep.subr.mxu0 0.0
  %1612 = vmatpush1.msra.mxu0 0.0
  %1613 = vmatprep.subr.mxu0 0.0
  %1614 = vmatpush1.msra.mxu0 0.0
  %1615 = vmatprep.subr.mxu0 0.0
  %1616 = vmatpush1.msra.mxu0 0.0
  %1617 = vmatprep.subr.mxu0 0.0
  %1618 = vmatpush1.msra.mxu0 0.0
  %1619 = vmatprep.subr.mxu0 0.0
  %1620 = vmatpush1.msra.mxu0 0.0
  %1621 = vmatprep.subr.mxu0 0.0
  %1622 = vmatpush1.msra.mxu0 0.0
  %1623 = vmatprep.subr.mxu0 0.0
  %1624 = vmatpush1.msra.mxu0 0.0
  %1625 = vmatprep.subr.mxu0 0.0
  %1626 = vmatpush1.msra.mxu0 0.0
  %1627 = vmatprep.subr.mxu0 0.0
  %1628 = vmatpush1.msra.mxu0 0.0
  %1629 = vmatprep.subr.mxu0 0.0
  %1630 = vmatpush1.msra.mxu0 0.0
  %1631 = vmatprep.subr.mxu0 0.0
  %1632 = vmatpush1.msra.mxu0 0.0
  %1633 = vmatprep.subr.mxu0 0.0
  %1634 = vmatpush1.msra.mxu0 0.0
  %1635 = vmatprep.subr.mxu0 0.0
  %1636 = vmatpush1.msra.mxu0 0.0
  %1637 = vmatprep.subr.mxu0 0.0
  %1638 = vmatpush1.msra.mxu0 0.0
  %1639 = vmatprep.subr.mxu0 0.0
  %1640 = vmatpush1.msra.mxu0 0.0
  %1641 = vmatprep.subr.mxu0 0.0
  %1642 = vmatpush1.msra.mxu0 0.0
  %1643 = vmatprep.subr.mxu0 0.0
  %1644 = vmatpush1.msra.mxu0 0.0
  %1645 = vmatprep.subr.mxu0 0.0
  %1646 = vmatpush1.msra.mxu0 0.0
  %1647 = vmatprep.subr.mxu0 0.0
  %1648 = vmatpush1.msra.mxu0 0.0
  %1649 = vmatprep.subr.mxu0 0.0
  %1650 = vmatpush1.msra.mxu0 0.0
  %1651 = vmatprep.subr.mxu0 0.0
  %1652 = vmatpush1.msra.mxu0 0.0
  %1653 = vmatprep.subr.mxu0 0.0
  %1654 = vmatpush1.msra.mxu0 0.0
  %1655 = vmatprep.subr.mxu0 0.0
  %1656 = vmatpush1.msra.mxu0 0.0
  %1657 = vmatprep.subr.mxu0 0.0
  %1658 = vmatpush1.msra.mxu0 0.0
  %1659 = vmatprep.subr.mxu0 0.0
  %1660 = vmatpush1.msra.mxu0 0.0
  %1661 = vmatprep.mubr.f32.mxu0 0.0
  %1662 = vmatmul.mubr.f32.gmra.mrb[0].mxu0 %v1595
  %v1663 = vpop.f32.mrb[0].mxu0
  %v1664 = vadd.f32 %v1593, %v1663
  %v1665 = vpop.f32.mrb[0].mxu0
  %1666 = vdwg.mxu0
  %v1667 = vadd.f32 %v791, %v1664
  %v1668 = vsub.f32 %v1664, %v792
  %v1669 = vmul.f32 %v1664, %v1668
  %v1670 = vsel %vm30, %v1669, 0.0
  %1671 = vadd.xlane.f32.xlu0 %v1670
  %v1672 = vpop.xlane.xlu0 %1671
  %v1673 = vrot.slane %v1672, 4
  %v1674 = vadd.f32 %v1672, %v1673
  %v1675 = vrot.slane %v1674, 2
  %v1676 = vadd.f32 %v1674, %v1675
  %v1677 = vrot.slane %v1676, 1
  %v1678 = vadd.f32 %v1676, %v1677
  %v1679 = vadd.f32 %v1678, %v196
  %v1680 = vmul.f32 %v1679, 0.0625
  %vm1681 = vcmp.eq.s32.totalorder %v203, 1
  %v1682 = vsel %vm1681, 1, 0
  %v1683 = vcvt.s32.f32 %v1682
  %v1684 = vmul.f32 %v1680, %v1683
  %v1685 = vadd.f32 %v810, %v1684
  %v1686 = vmul.f32 %v1680, 0.9
  %v1687 = vadd.f32 %v812, %v1686
  %v1688 = vld [vmem:[%s0 + $0x70] sm:$0xff]
  %1689 = vmatprep.subr.mxu0 0.0
  %1690 = vmatpush1.msra.mxu0 %v1688
  %1691 = vmatprep.subr.mxu0 0.0
  %1692 = vmatpush1.msra.mxu0 0.0
  %1693 = vmatprep.subr.mxu0 0.0
  %1694 = vmatpush1.msra.mxu0 0.0
  %1695 = vmatprep.subr.mxu0 0.0
  %1696 = vmatpush1.msra.mxu0 0.0
  %1697 = vmatprep.subr.mxu0 0.0
  %1698 = vmatpush1.msra.mxu0 0.0
  %1699 = vmatprep.subr.mxu0 0.0
  %1700 = vmatpush1.msra.mxu0 0.0
  %1701 = vmatprep.subr.mxu0 0.0
  %1702 = vmatpush1.msra.mxu0 0.0
  %1703 = vmatprep.subr.mxu0 0.0
  %1704 = vmatpush1.msra.mxu0 0.0
  %1705 = vmatprep.subr.mxu0 0.0
  %1706 = vmatpush1.msra.mxu0 0.0
  %1707 = vmatprep.subr.mxu0 0.0
  %1708 = vmatpush1.msra.mxu0 0.0
  %1709 = vmatprep.subr.mxu0 0.0
  %1710 = vmatpush1.msra.mxu0 0.0
  %1711 = vmatprep.subr.mxu0 0.0
  %1712 = vmatpush1.msra.mxu0 0.0
  %1713 = vmatprep.subr.mxu0 0.0
  %1714 = vmatpush1.msra.mxu0 0.0
  %1715 = vmatprep.subr.mxu0 0.0
  %1716 = vmatpush1.msra.mxu0 0.0
  %1717 = vmatprep.subr.mxu0 0.0
  %1718 = vmatpush1.msra.mxu0 0.0
  %1719 = vmatprep.subr.mxu0 0.0
  %1720 = vmatpush1.msra.mxu0 0.0
  %1721 = vmatprep.subr.mxu0 0.0
  %1722 = vmatpush1.msra.mxu0 0.0
  %1723 = vmatprep.subr.mxu0 0.0
  %1724 = vmatpush1.msra.mxu0 0.0
  %1725 = vmatprep.subr.mxu0 0.0
  %1726 = vmatpush1.msra.mxu0 0.0
  %1727 = vmatprep.subr.mxu0 0.0
  %1728 = vmatpush1.msra.mxu0 0.0
  %1729 = vmatprep.subr.mxu0 0.0
  %1730 = vmatpush1.msra.mxu0 0.0
  %1731 = vmatprep.subr.mxu0 0.0
  %1732 = vmatpush1.msra.mxu0 0.0
  %1733 = vmatprep.subr.mxu0 0.0
  %1734 = vmatpush1.msra.mxu0 0.0
  %1735 = vmatprep.subr.mxu0 0.0
  %1736 = vmatpush1.msra.mxu0 0.0
  %1737 = vmatprep.subr.mxu0 0.0
  %1738 = vmatpush1.msra.mxu0 0.0
  %1739 = vmatprep.subr.mxu0 0.0
  %1740 = vmatpush1.msra.mxu0 0.0
  %1741 = vmatprep.subr.mxu0 0.0
  %1742 = vmatpush1.msra.mxu0 0.0
  %1743 = vmatprep.subr.mxu0 0.0
  %1744 = vmatpush1.msra.mxu0 0.0
  %1745 = vmatprep.subr.mxu0 0.0
  %1746 = vmatpush1.msra.mxu0 0.0
  %1747 = vmatprep.subr.mxu0 0.0
  %1748 = vmatpush1.msra.mxu0 0.0
  %1749 = vmatprep.subr.mxu0 0.0
  %1750 = vmatpush1.msra.mxu0 0.0
  %1751 = vmatprep.subr.mxu0 0.0
  %1752 = vmatpush1.msra.mxu0 0.0
  %1753 = vmatprep.mubr.f32.mxu0 0.0
  %1754 = vmatmul.mubr.f32.gmra.mrb[0].mxu0 %v1516
  %v1755 = vpop.f32.mrb[0].mxu0
  %v1756 = vadd.f32 0.0, %v1755
  %v1757 = vpop.f32.mrb[0].mxu0
  %1758 = vdwg.mxu0
  %1760 = vrot.lane.b32.xlu0 %v1756, 112
  %v1761 = vpop.permute.xlu0 %1760
  %1763 = vmatprep.subr.mxu0 0.0
  %1764 = vmatpush1.msra.mxu0 %v1761
  %1765 = vmatprep.subr.mxu0 0.0
  %1766 = vmatpush1.msra.mxu0 0.0
  %1767 = vmatprep.subr.mxu0 0.0
  %1768 = vmatpush1.msra.mxu0 0.0
  %1769 = vmatprep.subr.mxu0 0.0
  %1770 = vmatpush1.msra.mxu0 0.0
  %1771 = vmatprep.subr.mxu0 0.0
  %1772 = vmatpush1.msra.mxu0 0.0
  %1773 = vmatprep.subr.mxu0 0.0
  %1774 = vmatpush1.msra.mxu0 0.0
  %1775 = vmatprep.subr.mxu0 0.0
  %1776 = vmatpush1.msra.mxu0 0.0
  %1777 = vmatprep.subr.mxu0 0.0
  %1778 = vmatpush1.msra.mxu0 0.0
  %1779 = vmatprep.subr.mxu0 0.0
  %1780 = vmatpush1.msra.mxu0 0.0
  %1781 = vmatprep.subr.mxu0 0.0
  %1782 = vmatpush1.msra.mxu0 0.0
  %1783 = vmatprep.subr.mxu0 0.0
  %1784 = vmatpush1.msra.mxu0 0.0
  %1785 = vmatprep.subr.mxu0 0.0
  %1786 = vmatpush1.msra.mxu0 0.0
  %1787 = vmatprep.subr.mxu0 0.0
  %1788 = vmatpush1.msra.mxu0 0.0
  %1789 = vmatprep.subr.mxu0 0.0
  %1790 = vmatpush1.msra.mxu0 0.0
  %1791 = vmatprep.subr.mxu0 0.0
  %1792 = vmatpush1.msra.mxu0 0.0
  %1793 = vmatprep.subr.mxu0 0.0
  %1794 = vmatpush1.msra.mxu0 0.0
  %1795 = vmatprep.subr.mxu0 0.0
  %1796 = vmatpush1.msra.mxu0 0.0
  %1797 = vmatprep.subr.mxu0 0.0
  %1798 = vmatpush1.msra.mxu0 0.0
  %1799 = vmatprep.subr.mxu0 0.0
  %1800 = vmatpush1.msra.mxu0 0.0
  %1801 = vmatprep.subr.mxu0 0.0
  %1802 = vmatpush1.msra.mxu0 0.0
  %1803 = vmatprep.subr.mxu0 0.0
  %1804 = vmatpush1.msra.mxu0 0.0
  %1805 = vmatprep.subr.mxu0 0.0
  %1806 = vmatpush1.msra.mxu0 0.0
  %1807 = vmatprep.subr.mxu0 0.0
  %1808 = vmatpush1.msra.mxu0 0.0
  %1809 = vmatprep.subr.mxu0 0.0
  %1810 = vmatpush1.msra.mxu0 0.0
  %1811 = vmatprep.subr.mxu0 0.0
  %1812 = vmatpush1.msra.mxu0 0.0
  %1813 = vmatprep.subr.mxu0 0.0
  %1814 = vmatpush1.msra.mxu0 0.0
  %1815 = vmatprep.subr.mxu0 0.0
  %1816 = vmatpush1.msra.mxu0 0.0
  %1817 = vmatprep.subr.mxu0 0.0
  %1818 = vmatpush1.msra.mxu0 0.0
  %1819 = vmatprep.subr.mxu0 0.0
  %1820 = vmatpush1.msra.mxu0 0.0
  %1821 = vmatprep.subr.mxu0 0.0
  %1822 = vmatpush1.msra.mxu0 0.0
  %1823 = vmatprep.subr.mxu0 0.0
  %1824 = vmatpush1.msra.mxu0 0.0
  %1825 = vmatprep.subr.mxu0 0.0
  %1826 = vmatpush1.msra.mxu0 0.0
  %1827 = vmatprep.mubr.f32.mxu0 0.0
  %1828 = vmatmul.mubr.f32.gmra.mrb[0].mxu0 %v889
  %v1829 = vpop.f32.mrb[0].mxu0
  %v1830 = vadd.f32 0.0, %v1829
  %v1831 = vpop.f32.mrb[0].mxu0
  %1832 = vmatprep.mubr.f32.mxu0 0.0
  %1833 = vmatmul.mubr.f32.gmra.mrb[0].mxu0 %v892
  %v1834 = vpop.f32.mrb[0].mxu0
  %v1835 = vadd.f32 0.0, %v1834
  %v1836 = vpop.f32.mrb[0].mxu0
  %1837 = vdwg.mxu0
  %1838 = vmatprep.subr.mxu0 0.0
  %1839 = vmatpush1.msra.mxu0 %v1756
  %1840 = vmatprep.subr.mxu0 0.0
  %1841 = vmatpush1.msra.mxu0 0.0
  %1842 = vmatprep.subr.mxu0 0.0
  %1843 = vmatpush1.msra.mxu0 0.0
  %1844 = vmatprep.subr.mxu0 0.0
  %1845 = vmatpush1.msra.mxu0 0.0
  %1846 = vmatprep.subr.mxu0 0.0
  %1847 = vmatpush1.msra.mxu0 0.0
  %1848 = vmatprep.subr.mxu0 0.0
  %1849 = vmatpush1.msra.mxu0 0.0
  %1850 = vmatprep.subr.mxu0 0.0
  %1851 = vmatpush1.msra.mxu0 0.0
  %1852 = vmatprep.subr.mxu0 0.0
  %1853 = vmatpush1.msra.mxu0 0.0
  %1854 = vmatprep.subr.mxu0 0.0
  %1855 = vmatpush1.msra.mxu0 0.0
  %1856 = vmatprep.subr.mxu0 0.0
  %1857 = vmatpush1.msra.mxu0 0.0
  %1858 = vmatprep.subr.mxu0 0.0
  %1859 = vmatpush1.msra.mxu0 0.0
  %1860 = vmatprep.subr.mxu0 0.0
  %1861 = vmatpush1.msra.mxu0 0.0
  %1862 = vmatprep.subr.mxu0 0.0
  %1863 = vmatpush1.msra.mxu0 0.0
  %1864 = vmatprep.subr.mxu0 0.0
  %1865 = vmatpush1.msra.mxu0 0.0
  %1866 = vmatprep.subr.mxu0 0.0
  %1867 = vmatpush1.msra.mxu0 0.0
  %1868 = vmatprep.subr.mxu0 0.0
  %1869 = vmatpush1.msra.mxu0 0.0
  %1870 = vmatprep.subr.mxu0 0.0
  %1871 = vmatpush1.msra.mxu0 0.0
  %1872 = vmatprep.subr.mxu0 0.0
  %1873 = vmatpush1.msra.mxu0 0.0
  %1874 = vmatprep.subr.mxu0 0.0
  %1875 = vmatpush1.msra.mxu0 0.0
  %1876 = vmatprep.subr.mxu0 0.0
  %1877 = vmatpush1.msra.mxu0 0.0
  %1878 = vmatprep.subr.mxu0 0.0
  %1879 = vmatpush1.msra.mxu0 0.0
  %1880 = vmatprep.subr.mxu0 0.0
  %1881 = vmatpush1.msra.mxu0 0.0
  %1882 = vmatprep.subr.mxu0 0.0
  %1883 = vmatpush1.msra.mxu0 0.0
  %1884 = vmatprep.subr.mxu0 0.0
  %1885 = vmatpush1.msra.mxu0 0.0
  %1886 = vmatprep.subr.mxu0 0.0
  %1887 = vmatpush1.msra.mxu0 0.0
  %1888 = vmatprep.subr.mxu0 0.0
  %1889 = vmatpush1.msra.mxu0 0.0
  %1890 = vmatprep.subr.mxu0 0.0
  %1891 = vmatpush1.msra.mxu0 0.0
  %1892 = vmatprep.subr.mxu0 0.0
  %1893 = vmatpush1.msra.mxu0 0.0
  %1894 = vmatprep.subr.mxu0 0.0
  %1895 = vmatpush1.msra.mxu0 0.0
  %1896 = vmatprep.subr.mxu0 0.0
  %1897 = vmatpush1.msra.mxu0 0.0
  %1898 = vmatprep.subr.mxu0 0.0
  %1899 = vmatpush1.msra.mxu0 0.0
  %1900 = vmatprep.subr.mxu0 0.0
  %1901 = vmatpush1.msra.mxu0 0.0
  %1902 = vmatprep.mubr.f32.mxu0 0.0
  %1903 = vmatmul.mubr.f32.gmra.mrb[0].mxu0 %v970
  %v1904 = vpop.f32.mrb[0].mxu0
  %v1905 = vadd.f32 %v1830, %v1904
  %v1906 = vpop.f32.mrb[0].mxu0
  %1907 = vmatprep.mubr.f32.mxu0 0.0
  %1908 = vmatmul.mubr.f32.gmra.mrb[0].mxu0 %v973
  %v1909 = vpop.f32.mrb[0].mxu0
  %v1910 = vadd.f32 %v1835, %v1909
  %v1911 = vpop.f32.mrb[0].mxu0
  %1912 = vdwg.mxu0
  %1913 = vrot.lane.b32.xlu0 %v104, 96
  %v1914 = vpop.permute.xlu0 %1913
  %1915 = vrot.lane.b32.xlu0 %v109, 96
  %v1916 = vpop.permute.xlu0 %1915
  %v1919 = vadd.f32 %v1905, %v1914
  %v1920 = vadd.f32 %v1910, %v1916
  %v1921 = vlaneseq
  %v1922 = vshrl.u32 %v1921, 7
  %v1923 = vsub.s32 2, %v1922
  %v1924 = vrot.slane %v20, %v1923
  %v1925 = vadd.f32 %v1919, %v1924
  %v1926 = vadd.f32 %v1920, %v1924
  %v1927 = vlaneseq
  %v1928 = vshrl.u32 %v1927, 7
  %v1929 = vsub.s32 2, %v1928
  %v1930 = vrot.slane %v22, %v1929
  %v1931 = vmul.f32 %v213, %v1930
  %1933 = vrot.lane.b32.xlu0 %v1931, 32
  %v1934 = vpop.permute.xlu0 %1933
  %v1936 = vadd.f32 %v1756, %v1934
  %v1937 = vlaneseq
  %v1938 = vshrl.u32 %v1937, 7
  %v1939 = vsub.s32 2, %v1938
  %v1940 = vrot.slane %v23, %v1939
  %1942 = vrot.lane.b32.xlu0 %v1940, 32
  %v1943 = vpop.permute.xlu0 %1942
  %v1945 = vadd.f32 %v1936, %v1943
  %1946 = vrot.lane.b32.xlu0 %v183, 24
  %v1947 = vpop.permute.xlu0 %1946
  %v1949 = vadd.f32 %v1756, %v1947
  %v1950 = vlaneseq
  %v1951 = vshrl.u32 %v1950, 7
  %v1952 = vsub.s32 2, %v1951
  %v1953 = vrot.slane %v25, %v1952
  %1955 = vrot.lane.b32.xlu0 %v1953, 40
  %v1956 = vpop.permute.xlu0 %1955
  %v1958 = vadd.f32 %v1949, %v1956
  %v1959 = vmax.f32 %v1925, 0.0
  %v1960 = vmax.f32 %v1926, 0.0
  %v1961 = vld [vmem:[%s0 + $0xb0] sm:$0xff]
  %v1962 = vld [vmem:[%s0 + $0xb8] sm:$0xff]
  %v1963 = vlaneseq
  %v1964 = vshrl.u32 %v1963, 7
  %v1965 = vsub.s32 2, %v1964
  %v1966 = vrot.slane %v21, %v1965
  %v1968 = vsel %vm238, %v1959, 0
  %v1971 = vsel %vm238, %v1960, 0
  %1973 = vmatprep.subr.mxu0 0.0
  %1974 = vmatpush1.msra.mxu0 %v1961
  %1975 = vmatprep.subr.mxu0 0.0
  %1976 = vmatpush1.msra.mxu0 %v1962
  %1977 = vmatprep.subr.mxu0 0.0
  %1978 = vmatpush1.msra.mxu0 0.0
  %1979 = vmatprep.subr.mxu0 0.0
  %1980 = vmatpush1.msra.mxu0 0.0
  %1981 = vmatprep.subr.mxu0 0.0
  %1982 = vmatpush1.msra.mxu0 0.0
  %1983 = vmatprep.subr.mxu0 0.0
  %1984 = vmatpush1.msra.mxu0 0.0
  %1985 = vmatprep.subr.mxu0 0.0
  %1986 = vmatpush1.msra.mxu0 0.0
  %1987 = vmatprep.subr.mxu0 0.0
  %1988 = vmatpush1.msra.mxu0 0.0
  %1989 = vmatprep.subr.mxu0 0.0
  %1990 = vmatpush1.msra.mxu0 0.0
  %1991 = vmatprep.subr.mxu0 0.0
  %1992 = vmatpush1.msra.mxu0 0.0
  %1993 = vmatprep.subr.mxu0 0.0
  %1994 = vmatpush1.msra.mxu0 0.0
  %1995 = vmatprep.subr.mxu0 0.0
  %1996 = vmatpush1.msra.mxu0 0.0
  %1997 = vmatprep.subr.mxu0 0.0
  %1998 = vmatpush1.msra.mxu0 0.0
  %1999 = vmatprep.subr.mxu0 0.0
  %2000 = vmatpush1.msra.mxu0 0.0
  %2001 = vmatprep.subr.mxu0 0.0
  %2002 = vmatpush1.msra.mxu0 0.0
  %2003 = vmatprep.subr.mxu0 0.0
  %2004 = vmatpush1.msra.mxu0 0.0
  %2005 = vmatprep.subr.mxu0 0.0
  %2006 = vmatpush1.msra.mxu0 0.0
  %2007 = vmatprep.subr.mxu0 0.0
  %2008 = vmatpush1.msra.mxu0 0.0
  %2009 = vmatprep.subr.mxu0 0.0
  %2010 = vmatpush1.msra.mxu0 0.0
  %2011 = vmatprep.subr.mxu0 0.0
  %2012 = vmatpush1.msra.mxu0 0.0
  %2013 = vmatprep.subr.mxu0 0.0
  %2014 = vmatpush1.msra.mxu0 0.0
  %2015 = vmatprep.subr.mxu0 0.0
  %2016 = vmatpush1.msra.mxu0 0.0
  %2017 = vmatprep.subr.mxu0 0.0
  %2018 = vmatpush1.msra.mxu0 0.0
  %2019 = vmatprep.subr.mxu0 0.0
  %2020 = vmatpush1.msra.mxu0 0.0
  %2021 = vmatprep.subr.mxu0 0.0
  %2022 = vmatpush1.msra.mxu0 0.0
  %2023 = vmatprep.subr.mxu0 0.0
  %2024 = vmatpush1.msra.mxu0 0.0
  %2025 = vmatprep.subr.mxu0 0.0
  %2026 = vmatpush1.msra.mxu0 0.0
  %2027 = vmatprep.subr.mxu0 0.0
  %2028 = vmatpush1.msra.mxu0 0.0
  %2029 = vmatprep.subr.mxu0 0.0
  %2030 = vmatpush1.msra.mxu0 0.0
  %2031 = vmatprep.subr.mxu0 0.0
  %2032 = vmatpush1.msra.mxu0 0.0
  %2033 = vmatprep.subr.mxu0 0.0
  %2034 = vmatpush1.msra.mxu0 0.0
  %2035 = vmatprep.subr.mxu0 0.0
  %2036 = vmatpush1.msra.mxu0 0.0
  %2037 = vmatprep.mubr.f32.mxu0 0.0
  %2038 = vmatmul.mubr.f32.gmra.mrb[0].mxu0 %v1968
  %v2039 = vpop.f32.mrb[0].mxu0
  %v2040 = vadd.f32 %v1966, %v2039
  %v2041 = vpop.f32.mrb[0].mxu0
  %2042 = vmatprep.mubr.f32.mxu0 0.0
  %2043 = vmatmul.mubr.f32.gmra.mrb[0].mxu0 %v1971
  %v2044 = vpop.f32.mrb[0].mxu0
  %v2045 = vadd.f32 %v1966, %v2044
  %v2046 = vpop.f32.mrb[0].mxu0
  %2047 = vdwg.mxu0
  %2050 = vrot.lane.b32.xlu0 %v2040, 120
  %v2051 = vpop.permute.xlu0 %2050
  %2052 = vrot.lane.b32.xlu0 %v2045, 120
  %v2053 = vpop.permute.xlu0 %2052
  %2056 = vmatprep.subr.mxu0 0.0
  %2057 = vmatpush1.msra.mxu0 %v2051
  %2058 = vmatprep.subr.mxu0 0.0
  %2059 = vmatpush1.msra.mxu0 %v2053
  %2060 = vmatprep.subr.mxu0 0.0
  %2061 = vmatpush1.msra.mxu0 0.0
  %2062 = vmatprep.subr.mxu0 0.0
  %2063 = vmatpush1.msra.mxu0 0.0
  %2064 = vmatprep.subr.mxu0 0.0
  %2065 = vmatpush1.msra.mxu0 0.0
  %2066 = vmatprep.subr.mxu0 0.0
  %2067 = vmatpush1.msra.mxu0 0.0
  %2068 = vmatprep.subr.mxu0 0.0
  %2069 = vmatpush1.msra.mxu0 0.0
  %2070 = vmatprep.subr.mxu0 0.0
  %2071 = vmatpush1.msra.mxu0 0.0
  %2072 = vmatprep.subr.mxu0 0.0
  %2073 = vmatpush1.msra.mxu0 0.0
  %2074 = vmatprep.subr.mxu0 0.0
  %2075 = vmatpush1.msra.mxu0 0.0
  %2076 = vmatprep.subr.mxu0 0.0
  %2077 = vmatpush1.msra.mxu0 0.0
  %2078 = vmatprep.subr.mxu0 0.0
  %2079 = vmatpush1.msra.mxu0 0.0
  %2080 = vmatprep.subr.mxu0 0.0
  %2081 = vmatpush1.msra.mxu0 0.0
  %2082 = vmatprep.subr.mxu0 0.0
  %2083 = vmatpush1.msra.mxu0 0.0
  %2084 = vmatprep.subr.mxu0 0.0
  %2085 = vmatpush1.msra.mxu0 0.0
  %2086 = vmatprep.subr.mxu0 0.0
  %2087 = vmatpush1.msra.mxu0 0.0
  %2088 = vmatprep.subr.mxu0 0.0
  %2089 = vmatpush1.msra.mxu0 0.0
  %2090 = vmatprep.subr.mxu0 0.0
  %2091 = vmatpush1.msra.mxu0 0.0
  %2092 = vmatprep.subr.mxu0 0.0
  %2093 = vmatpush1.msra.mxu0 0.0
  %2094 = vmatprep.subr.mxu0 0.0
  %2095 = vmatpush1.msra.mxu0 0.0
  %2096 = vmatprep.subr.mxu0 0.0
  %2097 = vmatpush1.msra.mxu0 0.0
  %2098 = vmatprep.subr.mxu0 0.0
  %2099 = vmatpush1.msra.mxu0 0.0
  %2100 = vmatprep.subr.mxu0 0.0
  %2101 = vmatpush1.msra.mxu0 0.0
  %2102 = vmatprep.subr.mxu0 0.0
  %2103 = vmatpush1.msra.mxu0 0.0
  %2104 = vmatprep.subr.mxu0 0.0
  %2105 = vmatpush1.msra.mxu0 0.0
  %2106 = vmatprep.subr.mxu0 0.0
  %2107 = vmatpush1.msra.mxu0 0.0
  %2108 = vmatprep.subr.mxu0 0.0
  %2109 = vmatpush1.msra.mxu0 0.0
  %2110 = vmatprep.subr.mxu0 0.0
  %2111 = vmatpush1.msra.mxu0 0.0
  %2112 = vmatprep.subr.mxu0 0.0
  %2113 = vmatpush1.msra.mxu0 0.0
  %2114 = vmatprep.subr.mxu0 0.0
  %2115 = vmatpush1.msra.mxu0 0.0
  %2116 = vmatprep.subr.mxu0 0.0
  %2117 = vmatpush1.msra.mxu0 0.0
  %2118 = vmatprep.subr.mxu0 0.0
  %2119 = vmatpush1.msra.mxu0 0.0
  %2120 = vmatprep.mubr.f32.mxu0 0.0
  %2121 = vmatmul.mubr.f32.gmra.mrb[0].mxu0 %v329
  %v2122 = vpop.f32.mrb[0].mxu0
  %v2123 = vadd.f32 0.0, %v2122
  %v2124 = vpop.f32.mrb[0].mxu0
  %2125 = vdwg.mxu0
  %2126 = vmatprep.subr.mxu0 0.0
  %2127 = vmatpush1.msra.mxu0 %v2040
  %2128 = vmatprep.subr.mxu0 0.0
  %2129 = vmatpush1.msra.mxu0 %v2045
  %2130 = vmatprep.subr.mxu0 0.0
  %2131 = vmatpush1.msra.mxu0 0.0
  %2132 = vmatprep.subr.mxu0 0.0
  %2133 = vmatpush1.msra.mxu0 0.0
  %2134 = vmatprep.subr.mxu0 0.0
  %2135 = vmatpush1.msra.mxu0 0.0
  %2136 = vmatprep.subr.mxu0 0.0
  %2137 = vmatpush1.msra.mxu0 0.0
  %2138 = vmatprep.subr.mxu0 0.0
  %2139 = vmatpush1.msra.mxu0 0.0
  %2140 = vmatprep.subr.mxu0 0.0
  %2141 = vmatpush1.msra.mxu0 0.0
  %2142 = vmatprep.subr.mxu0 0.0
  %2143 = vmatpush1.msra.mxu0 0.0
  %2144 = vmatprep.subr.mxu0 0.0
  %2145 = vmatpush1.msra.mxu0 0.0
  %2146 = vmatprep.subr.mxu0 0.0
  %2147 = vmatpush1.msra.mxu0 0.0
  %2148 = vmatprep.subr.mxu0 0.0
  %2149 = vmatpush1.msra.mxu0 0.0
  %2150 = vmatprep.subr.mxu0 0.0
  %2151 = vmatpush1.msra.mxu0 0.0
  %2152 = vmatprep.subr.mxu0 0.0
  %2153 = vmatpush1.msra.mxu0 0.0
  %2154 = vmatprep.subr.mxu0 0.0
  %2155 = vmatpush1.msra.mxu0 0.0
  %2156 = vmatprep.subr.mxu0 0.0
  %2157 = vmatpush1.msra.mxu0 0.0
  %2158 = vmatprep.subr.mxu0 0.0
  %2159 = vmatpush1.msra.mxu0 0.0
  %2160 = vmatprep.subr.mxu0 0.0
  %2161 = vmatpush1.msra.mxu0 0.0
  %2162 = vmatprep.subr.mxu0 0.0
  %2163 = vmatpush1.msra.mxu0 0.0
  %2164 = vmatprep.subr.mxu0 0.0
  %2165 = vmatpush1.msra.mxu0 0.0
  %2166 = vmatprep.subr.mxu0 0.0
  %2167 = vmatpush1.msra.mxu0 0.0
  %2168 = vmatprep.subr.mxu0 0.0
  %2169 = vmatpush1.msra.mxu0 0.0
  %2170 = vmatprep.subr.mxu0 0.0
  %2171 = vmatpush1.msra.mxu0 0.0
  %2172 = vmatprep.subr.mxu0 0.0
  %2173 = vmatpush1.msra.mxu0 0.0
  %2174 = vmatprep.subr.mxu0 0.0
  %2175 = vmatpush1.msra.mxu0 0.0
  %2176 = vmatprep.subr.mxu0 0.0
  %2177 = vmatpush1.msra.mxu0 0.0
  %2178 = vmatprep.subr.mxu0 0.0
  %2179 = vmatpush1.msra.mxu0 0.0
  %2180 = vmatprep.subr.mxu0 0.0
  %2181 = vmatpush1.msra.mxu0 0.0
  %2182 = vmatprep.subr.mxu0 0.0
  %2183 = vmatpush1.msra.mxu0 0.0
  %2184 = vmatprep.subr.mxu0 0.0
  %2185 = vmatpush1.msra.mxu0 0.0
  %2186 = vmatprep.subr.mxu0 0.0
  %2187 = vmatpush1.msra.mxu0 0.0
  %2188 = vmatprep.subr.mxu0 0.0
  %2189 = vmatpush1.msra.mxu0 0.0
  %2190 = vmatprep.mubr.f32.mxu0 0.0
  %2191 = vmatmul.mubr.f32.gmra.mrb[0].mxu0 %v402
  %v2192 = vpop.f32.mrb[0].mxu0
  %v2193 = vadd.f32 %v2123, %v2192
  %v2194 = vpop.f32.mrb[0].mxu0
  %2195 = vdwg.mxu0
  %v2196 = vmax.f32 %v1945, 0.0
  %v2197 = vld [vmem:[%s0 + $0xe8] sm:$0xff]
  %v2198 = vlaneseq
  %v2199 = vshrl.u32 %v2198, 7
  %v2200 = vsub.s32 2, %v2199
  %v2201 = vrot.slane %v24, %v2200
  %2203 = vrot.lane.b32.xlu0 %v2196, 96
  %v2204 = vpop.permute.xlu0 %2203
  %v2205 = vsel %vm30, %v2204, 0
  %2207 = vmatprep.subr.mxu0 0.0
  %2208 = vmatpush1.msra.mxu0 %v2197
  %2209 = vmatprep.subr.mxu0 0.0
  %2210 = vmatpush1.msra.mxu0 0.0
  %2211 = vmatprep.subr.mxu0 0.0
  %2212 = vmatpush1.msra.mxu0 0.0
  %2213 = vmatprep.subr.mxu0 0.0
  %2214 = vmatpush1.msra.mxu0 0.0
  %2215 = vmatprep.subr.mxu0 0.0
  %2216 = vmatpush1.msra.mxu0 0.0
  %2217 = vmatprep.subr.mxu0 0.0
  %2218 = vmatpush1.msra.mxu0 0.0
  %2219 = vmatprep.subr.mxu0 0.0
  %2220 = vmatpush1.msra.mxu0 0.0
  %2221 = vmatprep.subr.mxu0 0.0
  %2222 = vmatpush1.msra.mxu0 0.0
  %2223 = vmatprep.subr.mxu0 0.0
  %2224 = vmatpush1.msra.mxu0 0.0
  %2225 = vmatprep.subr.mxu0 0.0
  %2226 = vmatpush1.msra.mxu0 0.0
  %2227 = vmatprep.subr.mxu0 0.0
  %2228 = vmatpush1.msra.mxu0 0.0
  %2229 = vmatprep.subr.mxu0 0.0
  %2230 = vmatpush1.msra.mxu0 0.0
  %2231 = vmatprep.subr.mxu0 0.0
  %2232 = vmatpush1.msra.mxu0 0.0
  %2233 = vmatprep.subr.mxu0 0.0
  %2234 = vmatpush1.msra.mxu0 0.0
  %2235 = vmatprep.subr.mxu0 0.0
  %2236 = vmatpush1.msra.mxu0 0.0
  %2237 = vmatprep.subr.mxu0 0.0
  %2238 = vmatpush1.msra.mxu0 0.0
  %2239 = vmatprep.subr.mxu0 0.0
  %2240 = vmatpush1.msra.mxu0 0.0
  %2241 = vmatprep.subr.mxu0 0.0
  %2242 = vmatpush1.msra.mxu0 0.0
  %2243 = vmatprep.subr.mxu0 0.0
  %2244 = vmatpush1.msra.mxu0 0.0
  %2245 = vmatprep.subr.mxu0 0.0
  %2246 = vmatpush1.msra.mxu0 0.0
  %2247 = vmatprep.subr.mxu0 0.0
  %2248 = vmatpush1.msra.mxu0 0.0
  %2249 = vmatprep.subr.mxu0 0.0
  %2250 = vmatpush1.msra.mxu0 0.0
  %2251 = vmatprep.subr.mxu0 0.0
  %2252 = vmatpush1.msra.mxu0 0.0
  %2253 = vmatprep.subr.mxu0 0.0
  %2254 = vmatpush1.msra.mxu0 0.0
  %2255 = vmatprep.subr.mxu0 0.0
  %2256 = vmatpush1.msra.mxu0 0.0
  %2257 = vmatprep.subr.mxu0 0.0
  %2258 = vmatpush1.msra.mxu0 0.0
  %2259 = vmatprep.subr.mxu0 0.0
  %2260 = vmatpush1.msra.mxu0 0.0
  %2261 = vmatprep.subr.mxu0 0.0
  %2262 = vmatpush1.msra.mxu0 0.0
  %2263 = vmatprep.subr.mxu0 0.0
  %2264 = vmatpush1.msra.mxu0 0.0
  %2265 = vmatprep.subr.mxu0 0.0
  %2266 = vmatpush1.msra.mxu0 0.0
  %2267 = vmatprep.subr.mxu0 0.0
  %2268 = vmatpush1.msra.mxu0 0.0
  %2269 = vmatprep.subr.mxu0 0.0
  %2270 = vmatpush1.msra.mxu0 0.0
  %2271 = vmatprep.mubr.f32.mxu0 0.0
  %2272 = vmatmul.mubr.f32.gmra.mrb[0].mxu0 %v2205
  %v2273 = vpop.f32.mrb[0].mxu0
  %v2274 = vadd.f32 %v2201, %v2273
  %v2275 = vpop.f32.mrb[0].mxu0
  %2276 = vdwg.mxu0
  %2278 = vrot.lane.b32.xlu0 %v2193, 40
  %v2279 = vpop.permute.xlu0 %2278
  %v2281 = vadd.f32 %v1958, %v2279
  %2283 = vrot.lane.b32.xlu0 %v2274, 40
  %v2284 = vpop.permute.xlu0 %2283
  %v2286 = vadd.f32 %v2281, %v2284
  %v2287 = vmax.f32 %v2286, 0.0
  %v2288 = vld [vmem:[%s0 + $0x110] sm:$0xff]
  %2290 = vrot.lane.b32.xlu0 %v2287, 88
  %v2291 = vpop.permute.xlu0 %2290
  %v2292 = vsel %vm30, %v2291, 0
  %2294 = vmatprep.subr.mxu0 0.0
  %2295 = vmatpush1.msra.mxu0 %v2288
  %2296 = vmatprep.subr.mxu0 0.0
  %2297 = vmatpush1.msra.mxu0 0.0
  %2298 = vmatprep.subr.mxu0 0.0
  %2299 = vmatpush1.msra.mxu0 0.0
  %2300 = vmatprep.subr.mxu0 0.0
  %2301 = vmatpush1.msra.mxu0 0.0
  %2302 = vmatprep.subr.mxu0 0.0
  %2303 = vmatpush1.msra.mxu0 0.0
  %2304 = vmatprep.subr.mxu0 0.0
  %2305 = vmatpush1.msra.mxu0 0.0
  %2306 = vmatprep.subr.mxu0 0.0
  %2307 = vmatpush1.msra.mxu0 0.0
  %2308 = vmatprep.subr.mxu0 0.0
  %2309 = vmatpush1.msra.mxu0 0.0
  %2310 = vmatprep.subr.mxu0 0.0
  %2311 = vmatpush1.msra.mxu0 0.0
  %2312 = vmatprep.subr.mxu0 0.0
  %2313 = vmatpush1.msra.mxu0 0.0
  %2314 = vmatprep.subr.mxu0 0.0
  %2315 = vmatpush1.msra.mxu0 0.0
  %2316 = vmatprep.subr.mxu0 0.0
  %2317 = vmatpush1.msra.mxu0 0.0
  %2318 = vmatprep.subr.mxu0 0.0
  %2319 = vmatpush1.msra.mxu0 0.0
  %2320 = vmatprep.subr.mxu0 0.0
  %2321 = vmatpush1.msra.mxu0 0.0
  %2322 = vmatprep.subr.mxu0 0.0
  %2323 = vmatpush1.msra.mxu0 0.0
  %2324 = vmatprep.subr.mxu0 0.0
  %2325 = vmatpush1.msra.mxu0 0.0
  %2326 = vmatprep.subr.mxu0 0.0
  %2327 = vmatpush1.msra.mxu0 0.0
  %2328 = vmatprep.subr.mxu0 0.0
  %2329 = vmatpush1.msra.mxu0 0.0
  %2330 = vmatprep.subr.mxu0 0.0
  %2331 = vmatpush1.msra.mxu0 0.0
  %2332 = vmatprep.subr.mxu0 0.0
  %2333 = vmatpush1.msra.mxu0 0.0
  %2334 = vmatprep.subr.mxu0 0.0
  %2335 = vmatpush1.msra.mxu0 0.0
  %2336 = vmatprep.subr.mxu0 0.0
  %2337 = vmatpush1.msra.mxu0 0.0
  %2338 = vmatprep.subr.mxu0 0.0
  %2339 = vmatpush1.msra.mxu0 0.0
  %2340 = vmatprep.subr.mxu0 0.0
  %2341 = vmatpush1.msra.mxu0 0.0
  %2342 = vmatprep.subr.mxu0 0.0
  %2343 = vmatpush1.msra.mxu0 0.0
  %2344 = vmatprep.subr.mxu0 0.0
  %2345 = vmatpush1.msra.mxu0 0.0
  %2346 = vmatprep.subr.mxu0 0.0
  %2347 = vmatpush1.msra.mxu0 0.0
  %2348 = vmatprep.subr.mxu0 0.0
  %2349 = vmatpush1.msra.mxu0 0.0
  %2350 = vmatprep.subr.mxu0 0.0
  %2351 = vmatpush1.msra.mxu0 0.0
  %2352 = vmatprep.subr.mxu0 0.0
  %2353 = vmatpush1.msra.mxu0 0.0
  %2354 = vmatprep.subr.mxu0 0.0
  %2355 = vmatpush1.msra.mxu0 0.0
  %2356 = vmatprep.subr.mxu0 0.0
  %2357 = vmatpush1.msra.mxu0 0.0
  %2358 = vmatprep.mubr.f32.mxu0 0.0
  %2359 = vmatmul.mubr.f32.gmra.mrb[0].mxu0 %v2292
  %v2360 = vpop.f32.mrb[0].mxu0
  %v2361 = vadd.f32 0.0, %v2360
  %v2362 = vpop.f32.mrb[0].mxu0
  %2363 = vdwg.mxu0
  %v2364 = vadd.f32 %v1509, %v2361
  %v2365 = vlaneseq
  %v2366 = vshrl.u32 %v2365, 7
  %v2367 = vsub.s32 2, %v2366
  %v2368 = vrot.slane %v26, %v2367
  %v2369 = vadd.f32 %v2364, %v2368
  %v2370 = vld [vmem:[%s0 + $0x130] sm:$0xff]
  %v2371 = vlaneseq
  %v2372 = vshrl.u32 %v2371, 7
  %v2373 = vsub.s32 2, %v2372
  %v2374 = vrot.slane %v27, %v2373
  %v2376 = vsel %vm30, %v2369, 0
  %2378 = vmatprep.subr.mxu0 0.0
  %2379 = vmatpush1.msra.mxu0 %v2370
  %2380 = vmatprep.subr.mxu0 0.0
  %2381 = vmatpush1.msra.mxu0 0.0
  %2382 = vmatprep.subr.mxu0 0.0
  %2383 = vmatpush1.msra.mxu0 0.0
  %2384 = vmatprep.subr.mxu0 0.0
  %2385 = vmatpush1.msra.mxu0 0.0
  %2386 = vmatprep.subr.mxu0 0.0
  %2387 = vmatpush1.msra.mxu0 0.0
  %2388 = vmatprep.subr.mxu0 0.0
  %2389 = vmatpush1.msra.mxu0 0.0
  %2390 = vmatprep.subr.mxu0 0.0
  %2391 = vmatpush1.msra.mxu0 0.0
  %2392 = vmatprep.subr.mxu0 0.0
  %2393 = vmatpush1.msra.mxu0 0.0
  %2394 = vmatprep.subr.mxu0 0.0
  %2395 = vmatpush1.msra.mxu0 0.0
  %2396 = vmatprep.subr.mxu0 0.0
  %2397 = vmatpush1.msra.mxu0 0.0
  %2398 = vmatprep.subr.mxu0 0.0
  %2399 = vmatpush1.msra.mxu0 0.0
  %2400 = vmatprep.subr.mxu0 0.0
  %2401 = vmatpush1.msra.mxu0 0.0
  %2402 = vmatprep.subr.mxu0 0.0
  %2403 = vmatpush1.msra.mxu0 0.0
  %2404 = vmatprep.subr.mxu0 0.0
  %2405 = vmatpush1.msra.mxu0 0.0
  %2406 = vmatprep.subr.mxu0 0.0
  %2407 = vmatpush1.msra.mxu0 0.0
  %2408 = vmatprep.subr.mxu0 0.0
  %2409 = vmatpush1.msra.mxu0 0.0
  %2410 = vmatprep.subr.mxu0 0.0
  %2411 = vmatpush1.msra.mxu0 0.0
  %2412 = vmatprep.subr.mxu0 0.0
  %2413 = vmatpush1.msra.mxu0 0.0
  %2414 = vmatprep.subr.mxu0 0.0
  %2415 = vmatpush1.msra.mxu0 0.0
  %2416 = vmatprep.subr.mxu0 0.0
  %2417 = vmatpush1.msra.mxu0 0.0
  %2418 = vmatprep.subr.mxu0 0.0
  %2419 = vmatpush1.msra.mxu0 0.0
  %2420 = vmatprep.subr.mxu0 0.0
  %2421 = vmatpush1.msra.mxu0 0.0
  %2422 = vmatprep.subr.mxu0 0.0
  %2423 = vmatpush1.msra.mxu0 0.0
  %2424 = vmatprep.subr.mxu0 0.0
  %2425 = vmatpush1.msra.mxu0 0.0
  %2426 = vmatprep.subr.mxu0 0.0
  %2427 = vmatpush1.msra.mxu0 0.0
  %2428 = vmatprep.subr.mxu0 0.0
  %2429 = vmatpush1.msra.mxu0 0.0
  %2430 = vmatprep.subr.mxu0 0.0
  %2431 = vmatpush1.msra.mxu0 0.0
  %2432 = vmatprep.subr.mxu0 0.0
  %2433 = vmatpush1.msra.mxu0 0.0
  %2434 = vmatprep.subr.mxu0 0.0
  %2435 = vmatpush1.msra.mxu0 0.0
  %2436 = vmatprep.subr.mxu0 0.0
  %2437 = vmatpush1.msra.mxu0 0.0
  %2438 = vmatprep.subr.mxu0 0.0
  %2439 = vmatpush1.msra.mxu0 0.0
  %2440 = vmatprep.subr.mxu0 0.0
  %2441 = vmatpush1.msra.mxu0 0.0
  %2442 = vmatprep.mubr.f32.mxu0 0.0
  %2443 = vmatmul.mubr.f32.gmra.mrb[0].mxu0 %v2376
  %v2444 = vpop.f32.mrb[0].mxu0
  %v2445 = vadd.f32 %v2374, %v2444
  %v2446 = vpop.f32.mrb[0].mxu0
  %2447 = vdwg.mxu0
  %v2448 = vmax.f32 %v2445, 0.0
  %v2449 = vld [vmem:[%s0 + $0x150] sm:$0xff]
  %v2450 = vlaneseq
  %v2451 = vshrl.u32 %v2450, 7
  %v2452 = vsub.s32 2, %v2451
  %v2453 = vrot.slane %v28, %v2452
  %v2455 = vsel %vm30, %v2448, 0
  %2457 = vmatprep.subr.mxu0 0.0
  %2458 = vmatpush1.msra.mxu0 %v2449
  %2459 = vmatprep.subr.mxu0 0.0
  %2460 = vmatpush1.msra.mxu0 0.0
  %2461 = vmatprep.subr.mxu0 0.0
  %2462 = vmatpush1.msra.mxu0 0.0
  %2463 = vmatprep.subr.mxu0 0.0
  %2464 = vmatpush1.msra.mxu0 0.0
  %2465 = vmatprep.subr.mxu0 0.0
  %2466 = vmatpush1.msra.mxu0 0.0
  %2467 = vmatprep.subr.mxu0 0.0
  %2468 = vmatpush1.msra.mxu0 0.0
  %2469 = vmatprep.subr.mxu0 0.0
  %2470 = vmatpush1.msra.mxu0 0.0
  %2471 = vmatprep.subr.mxu0 0.0
  %2472 = vmatpush1.msra.mxu0 0.0
  %2473 = vmatprep.subr.mxu0 0.0
  %2474 = vmatpush1.msra.mxu0 0.0
  %2475 = vmatprep.subr.mxu0 0.0
  %2476 = vmatpush1.msra.mxu0 0.0
  %2477 = vmatprep.subr.mxu0 0.0
  %2478 = vmatpush1.msra.mxu0 0.0
  %2479 = vmatprep.subr.mxu0 0.0
  %2480 = vmatpush1.msra.mxu0 0.0
  %2481 = vmatprep.subr.mxu0 0.0
  %2482 = vmatpush1.msra.mxu0 0.0
  %2483 = vmatprep.subr.mxu0 0.0
  %2484 = vmatpush1.msra.mxu0 0.0
  %2485 = vmatprep.subr.mxu0 0.0
  %2486 = vmatpush1.msra.mxu0 0.0
  %2487 = vmatprep.subr.mxu0 0.0
  %2488 = vmatpush1.msra.mxu0 0.0
  %2489 = vmatprep.subr.mxu0 0.0
  %2490 = vmatpush1.msra.mxu0 0.0
  %2491 = vmatprep.subr.mxu0 0.0
  %2492 = vmatpush1.msra.mxu0 0.0
  %2493 = vmatprep.subr.mxu0 0.0
  %2494 = vmatpush1.msra.mxu0 0.0
  %2495 = vmatprep.subr.mxu0 0.0
  %2496 = vmatpush1.msra.mxu0 0.0
  %2497 = vmatprep.subr.mxu0 0.0
  %2498 = vmatpush1.msra.mxu0 0.0
  %2499 = vmatprep.subr.mxu0 0.0
  %2500 = vmatpush1.msra.mxu0 0.0
  %2501 = vmatprep.subr.mxu0 0.0
  %2502 = vmatpush1.msra.mxu0 0.0
  %2503 = vmatprep.subr.mxu0 0.0
  %2504 = vmatpush1.msra.mxu0 0.0
  %2505 = vmatprep.subr.mxu0 0.0
  %2506 = vmatpush1.msra.mxu0 0.0
  %2507 = vmatprep.subr.mxu0 0.0
  %2508 = vmatpush1.msra.mxu0 0.0
  %2509 = vmatprep.subr.mxu0 0.0
  %2510 = vmatpush1.msra.mxu0 0.0
  %2511 = vmatprep.subr.mxu0 0.0
  %2512 = vmatpush1.msra.mxu0 0.0
  %2513 = vmatprep.subr.mxu0 0.0
  %2514 = vmatpush1.msra.mxu0 0.0
  %2515 = vmatprep.subr.mxu0 0.0
  %2516 = vmatpush1.msra.mxu0 0.0
  %2517 = vmatprep.subr.mxu0 0.0
  %2518 = vmatpush1.msra.mxu0 0.0
  %2519 = vmatprep.subr.mxu0 0.0
  %2520 = vmatpush1.msra.mxu0 0.0
  %2521 = vmatprep.mubr.f32.mxu0 0.0
  %2522 = vmatmul.mubr.f32.gmra.mrb[0].mxu0 %v2455
  %v2523 = vpop.f32.mrb[0].mxu0
  %v2524 = vadd.f32 %v2453, %v2523
  %v2525 = vpop.f32.mrb[0].mxu0
  %2526 = vdwg.mxu0
  %v2527 = vadd.f32 %v1667, %v2524
  %v2528 = vsub.f32 %v2524, %v792
  %v2529 = vmul.f32 %v2524, %v2528
  %v2530 = vsel %vm30, %v2529, 0.0
  %2531 = vadd.xlane.f32.xlu0 %v2530
  %v2532 = vpop.xlane.xlu0 %2531
  %v2533 = vrot.slane %v2532, 4
  %v2534 = vadd.f32 %v2532, %v2533
  %v2535 = vrot.slane %v2534, 2
  %v2536 = vadd.f32 %v2534, %v2535
  %v2537 = vrot.slane %v2536, 1
  %v2538 = vadd.f32 %v2536, %v2537
  %v2539 = vadd.f32 %v2538, %v196
  %v2540 = vmul.f32 %v2539, 0.0625
  %vm2541 = vcmp.eq.s32.totalorder %v203, 2
  %v2542 = vsel %vm2541, 1, 0
  %v2543 = vcvt.s32.f32 %v2542
  %v2544 = vmul.f32 %v2540, %v2543
  %v2545 = vadd.f32 %v1685, %v2544
  %v2546 = vadd.f32 %v1687, %v2540
  %vm2547 = vcmp.eq.s32.totalorder %v203, 3
  %v2548 = vsel %vm2547, 1, 0
  %v2549 = vcvt.s32.f32 %v2548
  %v2550 = vmul.f32 %v2546, %v2549
  %v2551 = vadd.f32 %v2545, %v2550
  %2552 = vst.msk [vmem:[%s1] sm:$0xff] %vm30, %v2527
  %vm2553 = vcmask 57344
  %2554 = vst.msk [vmem:[%s1 + $0x8] sm:$0x1] %vm2553, %v2551
  // Predicated region
  $region6: #{dss_forward.1} parent=0 // pred_check
    _
  $region7: #{dss_forward.1} parent=0 // pred_check_branch
    %2556 = sbr.rel (0) target = $region9
  $region8: #{dss_forward.1} parent=0 // pred_region
    _
  $region9: #{dss_forward.1} parent=0 // pred_fallthru
    _
  // Predicated region
  $region10: #{dss_forward.1} parent=0 // pred_check
    _
  $region11: #{dss_forward.1} parent=0 // pred_check_branch
    %2558 = sbr.rel (0) target = $region13
  $region12: #{dss_forward.1} parent=0 // pred_region
    _
  $region13: #{dss_forward.1} parent=0 // pred_fallthru
    _

</llo_original>
